<compile_context>
chip_gen: v5e
topology: v5e:2x2
jax: 0.10.0
libtpu: 0.0.40
codegen_flags: <defaults>
</compile_context>

<pallas_src>
import functools

import jax
import jax.numpy as jnp
from jax import lax
from jax.experimental import pallas as pl
from jax.experimental.pallas import tpu as pltpu


# --------------------------------------------------------------------------- #
# Per-generation VMEM budget (leave headroom: ~48 MiB on v7x, ~96 MiB on v5e/v6e)
# --------------------------------------------------------------------------- #
@functools.lru_cache(maxsize=None)
def _vmem_limit():
    cap = 128 * 1024 * 1024
    try:
        info = pltpu.get_tpu_info()
        cap = int(getattr(info, "vmem_capacity_bytes", cap) or cap)
    except Exception:
        pass
    return int(min(cap * 3 // 4, 100 * 1024 * 1024))


def _pick_tile(dim, target, quantum):
    """Largest divisor of `dim` that is <= target and a multiple of `quantum`;
    falls back to the full dim (always a legal block shape)."""
    d = (min(dim, target) // quantum) * quantum
    while d >= quantum:
        if dim % d == 0:
            return d
        d -= quantum
    return dim


def _largest_divisor_leq(n, target):
    for d in range(max(1, min(n, target)), 0, -1):
        if n % d == 0:
            return d
    return 1


# --------------------------------------------------------------------------- #
# Pallas kernel 1: fused squared-distance + per-radius ball-query masking
#   srcA = [-2*src, ||src||^2, 1, 0...]        (B, S, Cp)
#   dstA = [ dst  ,     1, ||dst||^2, 0...]^T  (B, Cp, N)   (channel-first)
#   srcA @ dstA = ||src||^2 + ||dst||^2 - 2 src.dst
# Outputs, per radius r: where(d2 > r^2, N, column_index)  as int32 (B, S, N).
# --------------------------------------------------------------------------- #
def _make_ball_query_kernel(radii_sq, N, tN):
    def kernel(srcA_ref, dstA_ref, *out_refs):
        d2 = jnp.dot(srcA_ref[0], dstA_ref[0],
                     preferred_element_type=jnp.float32)
        col = (lax.broadcasted_iota(jnp.int32, d2.shape, 1)
               + pl.program_id(2) * tN)
        for o_ref, r2 in zip(out_refs, radii_sq):
            o_ref[0] = jnp.where(d2 > r2, jnp.int32(N), col)
    return kernel


def ball_query_masked(radii, xyz_t, new_xyz_t):
    """xyz_t: (B, N, 3); new_xyz_t: (B, S, 3) -> tuple of (B, S, N) int32 per radius."""
    B, S, C = new_xyz_t.shape
    N = xyz_t.shape[1]
    Caug = C + 2
    Cp = Caug + (-Caug % 8)

    src_sq = jnp.sum(new_xyz_t * new_xyz_t, axis=-1, keepdims=True)   # (B, S, 1)
    dst_sq = jnp.sum(xyz_t * xyz_t, axis=-1, keepdims=True)           # (B, N, 1)
    srcA = jnp.concatenate(
        [-2.0 * new_xyz_t, src_sq, jnp.ones((B, S, 1), new_xyz_t.dtype),
         jnp.zeros((B, S, Cp - Caug), new_xyz_t.dtype)], axis=-1)     # (B, S, Cp)
    dstA = jnp.concatenate(
        [jnp.transpose(xyz_t, (0, 2, 1)),
         jnp.ones((B, 1, N), xyz_t.dtype),
         jnp.transpose(dst_sq, (0, 2, 1)),
         jnp.zeros((B, Cp - Caug, N), xyz_t.dtype)], axis=1)          # (B, Cp, N)

    tS = _pick_tile(S, 512, 8)
    tN = _pick_tile(N, 1024, 128)
    radii_sq = [float(r) * float(r) for r in radii]

    return pl.pallas_call(
        _make_ball_query_kernel(radii_sq, N, tN),
        out_shape=tuple(jax.ShapeDtypeStruct((B, S, N), jnp.int32) for _ in radii),
        grid=(B, S // tS, N // tN),
        in_specs=[pl.BlockSpec((1, tS, Cp), lambda b, i, j: (b, i, 0)),
                  pl.BlockSpec((1, Cp, tN), lambda b, i, j: (b, 0, j))],
        out_specs=tuple(pl.BlockSpec((1, tS, tN), lambda b, i, j: (b, i, j))
                        for _ in radii),
        compiler_params=pltpu.CompilerParams(
            dimension_semantics=("parallel", "parallel", "parallel"),
            vmem_limit_bytes=_vmem_limit()),
    )(srcA, dstA)


# --------------------------------------------------------------------------- #
# Pallas kernel 2: MLP (folded Conv1x1+BN, ReLU) + max over neighbours,
# channels-in-sublane / points-in-lane, K-tiled with VMEM-resident running max.
# --------------------------------------------------------------------------- #
def _make_mlp_kernel(num_layers, tK, S, compute_dtype):
    def kernel(x_ref, *refs):
        out_ref = refs[-1]
        h = x_ref[0]                                          # (Cin_p, tK*S)
        for l in range(num_layers):
            w = refs[2 * l][...]                              # (Cout, Cprev)
            b = refs[2 * l + 1][...]                          # (Cout, 1)
            acc = jnp.dot(w, h, preferred_element_type=jnp.float32)
            # bias + ReLU in compute_dtype (bf16 VALU on v6e/v7x; f32 on v5e)
            h = jnp.maximum(acc.astype(compute_dtype) + b, 0)
        # Max over the tK neighbours of this K-tile: k-major flatten means neighbour
        # kk of every centroid is the contiguous lane slice [kk*S, (kk+1)*S).
        tile_max = h[:, 0:S]
        for kk in range(1, tK):
            tile_max = jnp.maximum(tile_max, h[:, kk * S:(kk + 1) * S])

        k = pl.program_id(1)

        @pl.when(k == 0)
        def _():
            out_ref[0] = tile_max.astype(out_ref.dtype)

        @pl.when(k > 0)
        def _():
            out_ref[0] = jnp.maximum(out_ref[0], tile_max.astype(out_ref.dtype))
    return kernel


def msg_mlp_maxpool(grouped_cf, layer_params, K, S, compute_dtype):
    """grouped_cf: (B, Cin, K*S) channel-first, k-major points -> (B, C_last, S)."""
    B, Cin, P = grouped_cf.shape
    assert P == K * S
    pad_mult = 8 * (4 // jnp.dtype(compute_dtype).itemsize)   # 16 for bf16, 8 for f32
    Cin_p = Cin + (-Cin % pad_mult)
    x = jnp.pad(grouped_cf, ((0, 0), (0, Cin_p - Cin), (0, 0))).astype(compute_dtype)

    # K-tiling: keep tK*S lanes around ~8K so f32 activations stay a few MiB.
    tK = _largest_divisor_leq(K, max(1, 8192 // S))
    nK = K // tK

    args = [x]
    in_specs = [pl.BlockSpec((1, Cin_p, tK * S), lambda b, k: (b, 0, k))]
    for l, (W, bias, gamma, beta, mean, var) in enumerate(layer_params):
        # fold inference BatchNorm into the 1x1 conv
        scale = gamma / jnp.sqrt(var + 1e-5)
        Wf = W * scale[:, None]                               # (Cout, Cprev)
        bf = scale * (bias - mean) + beta                     # (Cout,)
        if l == 0:
            Wf = jnp.pad(Wf, ((0, 0), (0, Cin_p - Wf.shape[1])))
        Wf = Wf.astype(compute_dtype)
        bf = bf[:, None].astype(compute_dtype)                # (Cout, 1)
        args += [Wf, bf]
        in_specs += [pl.BlockSpec(Wf.shape, lambda b, k: (0, 0)),   # weights resident
                     pl.BlockSpec(bf.shape, lambda b, k: (0, 0))]

    C_last = layer_params[-1][0].shape[0]
    # TODO(synk): fuse the neighbour gather + centroid subtract into this kernel via
    # scalar-prefetched indices + in-kernel DMA gather from feats in pl.ANY, removing
    # the grouped tensor's HBM round trip.
    # TODO(synk): when B == 1 on v7x (2 TensorCores), add an S-parallel grid axis so
    # the second core is not idle.
    return pl.pallas_call(
        _make_mlp_kernel(len(layer_params), tK, S, compute_dtype),
        out_shape=jax.ShapeDtypeStruct((B, C_last, S), jnp.float32),
        grid=(B, nK),
        in_specs=in_specs,
        out_specs=pl.BlockSpec((1, C_last, S), lambda b, k: (b, 0, 0)),
        compiler_params=pltpu.CompilerParams(
            dimension_semantics=("parallel", "arbitrary"),
            vmem_limit_bytes=_vmem_limit()),
    )(*args)


# --------------------------------------------------------------------------- #
# Pallas kernel 3: farthest point sampling (whole loop in-kernel, per batch)
# --------------------------------------------------------------------------- #
def _make_fps_kernel(npoint, N):
    def kernel(xyz_ref, out_ref):
        pts = xyz_ref[0]                                             # (3, N) f32
        ch_iota = lax.broadcasted_iota(jnp.int32, pts.shape, 1)      # (3, N)
        col_iota = lax.broadcasted_iota(jnp.int32, (1, N), 1)        # (1, N)
        sel_iota = lax.broadcasted_iota(jnp.int32, (1, npoint), 1)   # (1, npoint)

        def body(i, carry):
            far, sel, dist = carry            # (1,1) i32, (1,npoint) i32, (1,N) f32
            sel = jnp.where(sel_iota == i, far, sel)       # centroids[:, i] = farthest
            cent = jnp.sum(jnp.where(ch_iota == far, pts, 0.0),
                           axis=1, keepdims=True)          # one-hot gather -> (3, 1)
            diff = pts - cent
            d = jnp.sum(diff * diff, axis=0, keepdims=True)          # (1, N)
            dist = jnp.minimum(dist, d)
            maxv = jnp.max(dist, axis=1, keepdims=True)              # (1, 1)
            # first index attaining the max (matches torch tie-break)
            far = jnp.min(jnp.where(dist == maxv, col_iota, jnp.int32(N)),
                          axis=1, keepdims=True)
            return far, sel, dist

        carry0 = (jnp.zeros((1, 1), jnp.int32),      # deterministic start (torch: randint)
                  jnp.zeros((1, npoint), jnp.int32),
                  jnp.full((1, N), 1e10, jnp.float32))
        _, sel, _ = lax.fori_loop(0, npoint, body, carry0)
        out_ref[0] = sel
    return kernel


def farthest_point_sample(xyz_cf, npoint):
    """xyz_cf: (B, 3, N) float32 -> (B, npoint) int32 FPS indices."""
    B, C, N = xyz_cf.shape
    out = pl.pallas_call(
        _make_fps_kernel(npoint, N),
        out_shape=jax.ShapeDtypeStruct((B, 1, npoint), jnp.int32),
        grid=(B,),
        in_specs=[pl.BlockSpec((1, C, N), lambda b: (b, 0, 0))],
        out_specs=pl.BlockSpec((1, 1, npoint), lambda b: (b, 0, 0)),
        compiler_params=pltpu.CompilerParams(
            dimension_semantics=("parallel",),
            vmem_limit_bytes=_vmem_limit()),
    )(xyz_cf)
    return out[:, 0, :]


# --------------------------------------------------------------------------- #
# Plain-JAX glue
# --------------------------------------------------------------------------- #
def index_points(points, idx):
    """points: (B, N, C); idx: (B, S) -> (B, S, C)."""
    return jnp.take_along_axis(points, idx[..., None], axis=1)


# --------------------------------------------------------------------------- #
# Module forward
# --------------------------------------------------------------------------- #
def pointnet_sa_msg_forward(xyz, points, params, npoint, radii, nsamples,
                            compute_dtype=jnp.bfloat16):
    """
    xyz:    (B, 3, N) float32
    points: (B, D, N) float32
    returns new_xyz (B, 3, npoint), new_points (B, sum(C_last), npoint)
    Note: pass compute_dtype=jnp.float32 on v5e (no bf16 VALU there).
    """
    B, _, N = xyz.shape
    D = points.shape[1]
    S = npoint
    xyz_t = jnp.transpose(xyz, (0, 2, 1))                    # (B, N, 3)

    fps_idx = farthest_point_sample(xyz, S)                  # Pallas kernel, (B, S)
    new_xyz_t = index_points(xyz_t, fps_idx)                 # (B, S, 3)
    new_xyz = jnp.transpose(new_xyz_t, (0, 2, 1))            # (B, 3, S)

    # One fused kernel launch produces the masked candidate indices for EVERY radius
    # (sqdist matmul is shared; no f32 sqdist HBM round trip).
    masked_per_scale = ball_query_masked(radii, xyz_t, new_xyz_t)

    # channel-first feature bank [xyz ; points]; only the xyz channels are centered.
    feats_cf = jnp.concatenate([xyz, points], axis=1)        # (B, 3+D, N)
    center_cf = jnp.concatenate(
        [new_xyz, jnp.zeros((B, D, S), xyz.dtype)], axis=1)  # (B, 3+D, S)

    S_pad = S + (-S % 128)      # lane-dense output stores in the MLP kernel

    outs = []
    for scale, (K, masked) in enumerate(zip(nsamples, masked_per_scale)):
        # smallest `K` masked indices, ascending == sort(masked)[..., :K]
        group_idx = -lax.top_k(-masked, K)[0]                # (B, S, K)
        group_first = group_idx[:, :, :1]
        group_idx = jnp.where(group_idx == N, group_first, group_idx)

        # k-major flatten: neighbour k of every centroid -> contiguous width-S slice.
        idx_km = jnp.transpose(group_idx, (0, 2, 1)).reshape(B, 1, K * S)
        # TODO(synk): fuse this gather into the MLP kernel (scalar-prefetched idx +
        # in-kernel DMA gather) to avoid the grouped tensor's HBM round trip.
        grouped = jnp.take_along_axis(
            feats_cf, jnp.broadcast_to(idx_km, (B, 3 + D, K * S)), axis=2)
        grouped = grouped.reshape(B, 3 + D, K, S) - center_cf[:, :, None, :]
        if S_pad != S:
            grouped = jnp.pad(grouped, ((0, 0), (0, 0), (0, 0), (0, S_pad - S)))
        grouped = grouped.reshape(B, 3 + D, K * S_pad)

        out = msg_mlp_maxpool(grouped, params[scale], K, S_pad, compute_dtype)
        outs.append(out[:, :, :S])

    new_points = jnp.concatenate(outs, axis=1)               # (B, sum(C_last), S)
    return new_xyz, new_points


# --------------------------------------------------------------------------- #
# Deterministic parameter construction (Conv2d 1x1 + BatchNorm2d per layer)
# --------------------------------------------------------------------------- #
def init_params(key, mlps):
    params = []
    for branch in mlps:
        layers = []
        last_c = branch[0]
        for out_c in branch[1:]:
            key, k1, k2, k3, k4, k5, k6 = jax.random.split(key, 7)
            W = 0.1 * jax.random.normal(k1, (out_c, last_c), jnp.float32)
            b = 0.05 * jax.random.normal(k2, (out_c,), jnp.float32)
            gamma = jax.random.uniform(k3, (out_c,), jnp.float32, 0.5, 1.5)
            beta = 0.1 * jax.random.normal(k4, (out_c,), jnp.float32)
            mean = 0.1 * jax.random.normal(k5, (out_c,), jnp.float32)
            var = jax.random.uniform(k6, (out_c,), jnp.float32, 0.5, 1.5)
            layers.append((W, b, gamma, beta, mean, var))
            last_c = out_c
        params.append(layers)
    return params


if __name__ == "__main__":
    key = jax.random.PRNGKey(0)

    # Small, module-consistent shapes
    B, N, D = 2, 32, 4
    npoint = 8
    radii = [0.4, 0.8]
    nsamples = [8, 16]
    mlps = [[3 + D, 16, 32], [3 + D, 32, 64]]   # first entry must equal 3 + D

    key, kx, kp, kw = jax.random.split(key, 4)
    xyz = jax.random.uniform(kx, (B, 3, N), jnp.float32, -1.0, 1.0)
    points = jax.random.normal(kp, (B, D, N), jnp.float32)
    params = init_params(kw, mlps)

    fwd = jax.jit(functools.partial(
        pointnet_sa_msg_forward, npoint=npoint, radii=tuple(radii),
        nsamples=tuple(nsamples), compute_dtype=jnp.bfloat16))
    new_xyz, new_points = fwd(xyz, points, params)
    jax.block_until_ready((new_xyz, new_points))

    assert new_xyz.shape == (B, 3, npoint)
    assert new_points.shape == (B, 32 + 64, npoint)
    assert bool(jnp.all(jnp.isfinite(new_xyz))) and bool(jnp.all(jnp.isfinite(new_points)))
    print("KERNEL_OK")
</pallas_src>

<mosaic_0001>
module attributes {stable_mosaic.version = 11 : i64} {
  func.func @kernel(%arg0: i32, %arg1: memref<1x3x32xf32, #tpu.memory_space<vmem>>, %arg2: memref<1x1x8xi32, #tpu.memory_space<vmem>>) attributes {dimension_semantics = [#tpu.dimension_semantics<parallel>], iteration_bounds = array<i64: 2>, scalar_prefetch = 0 : i64, scratch_operands = 0 : i64, tpu.core_type = #tpu.core_type<tc>, window_params = [{transform_indices = @transform_0, window_bounds = array<i64: 1, 3, 32>}, {transform_indices = @transform_1, window_bounds = array<i64: 1, 1, 8>}]} {
    %c0 = arith.constant 0 : index
    %c0_0 = arith.constant 0 : index
    %c0_1 = arith.constant 0 : index
    %0 = vector.load %arg1[%c0, %c0_0, %c0_1] : memref<1x3x32xf32, #tpu.memory_space<vmem>>, vector<1x3x32xf32>
    %1 = vector.shape_cast %0 : vector<1x3x32xf32> to vector<3x32xf32>
    %2 = tpu.iota {dimensions = array<i32: 1>} : vector<3x32xi32>
    %3 = tpu.iota {dimensions = array<i32: 1>} : vector<1x32xi32>
    %4 = tpu.iota {dimensions = array<i32: 1>} : vector<1x8xi32>
    %c0_i32 = arith.constant 0 : i32
    %5 = vector.broadcast %c0_i32 : i32 to vector<1x1xi32>
    %c0_i32_2 = arith.constant 0 : i32
    %6 = vector.broadcast %c0_i32_2 : i32 to vector<1x8xi32>
    %cst = arith.constant 1.000000e+10 : f32
    %7 = vector.broadcast %cst : f32 to vector<1x32xf32>
    %c0_i32_3 = arith.constant 0 : i32
    %c8_i32 = arith.constant 8 : i32
    %8 = arith.addi %c0_i32_3, %c8_i32 : i32
    %c1_i32 = arith.constant 1 : i32
    %9:3 = scf.for %arg3 = %c0_i32_3 to %8 step %c1_i32 iter_args(%arg4 = %5, %arg5 = %6, %arg6 = %7) -> (vector<1x1xi32>, vector<1x8xi32>, vector<1x32xf32>)  : i32 {
      %13 = vector.broadcast %arg3 : i32 to vector<1x8xi32>
      %14 = arith.cmpi eq, %4, %13 : vector<1x8xi32>
      %15 = vector.shape_cast %arg4 : vector<1x1xi32> to vector<1x1xi32>
      %16 = vector.broadcast %15 : vector<1x1xi32> to vector<1x8xi32>
      %17 = arith.select %14, %16, %arg5 : vector<1x8xi1>, vector<1x8xi32>
      %18 = vector.broadcast %arg4 : vector<1x1xi32> to vector<3x32xi32>
      %19 = arith.cmpi eq, %2, %18 : vector<3x32xi32>
      %cst_8 = arith.constant 0.000000e+00 : f32
      %20 = vector.broadcast %cst_8 : f32 to vector<3x32xf32>
      %21 = arith.select %19, %1, %20 : vector<3x32xi1>, vector<3x32xf32>
      %cst_9 = arith.constant dense<0.000000e+00> : vector<3xf32>
      %22 = vector.multi_reduction <add>, %21, %cst_9 [1] : vector<3x32xf32> to vector<3xf32>
      %23 = vector.shape_cast %22 : vector<3xf32> to vector<3x1xf32>
      %24 = vector.broadcast %23 : vector<3x1xf32> to vector<3x32xf32>
      %25 = arith.subf %1, %24 : vector<3x32xf32>
      %26 = arith.mulf %25, %25 : vector<3x32xf32>
      %cst_10 = arith.constant dense<0.000000e+00> : vector<32xf32>
      %27 = vector.multi_reduction <add>, %26, %cst_10 [0] : vector<3x32xf32> to vector<32xf32>
      %28 = vector.shape_cast %27 : vector<32xf32> to vector<1x32xf32>
      %29 = arith.minimumf %arg6, %28 : vector<1x32xf32>
      %cst_11 = arith.constant dense<0xFF800000> : vector<1xf32>
      %30 = vector.multi_reduction <maximumf>, %29, %cst_11 [1] : vector<1x32xf32> to vector<1xf32>
      %31 = vector.shape_cast %30 : vector<1xf32> to vector<1x1xf32>
      %32 = vector.broadcast %31 : vector<1x1xf32> to vector<1x32xf32>
      %33 = arith.cmpf oeq, %29, %32 : vector<1x32xf32>
      %c32_i32 = arith.constant 32 : i32
      %34 = vector.broadcast %c32_i32 : i32 to vector<1x32xi32>
      %35 = arith.select %33, %3, %34 : vector<1x32xi1>, vector<1x32xi32>
      %cst_12 = arith.constant dense<2147483647> : vector<1xi32>
      %36 = vector.multi_reduction <minsi>, %35, %cst_12 [1] : vector<1x32xi32> to vector<1xi32>
      %37 = vector.shape_cast %36 : vector<1xi32> to vector<1x1xi32>
      scf.yield %37, %17, %29 : vector<1x1xi32>, vector<1x8xi32>, vector<1x32xf32>
    }
    %c8_i32_4 = arith.constant 8 : i32
    %c0_5 = arith.constant 0 : index
    %c0_6 = arith.constant 0 : index
    %c0_7 = arith.constant 0 : index
    %10 = vector.load %arg2[%c0_5, %c0_6, %c0_7] : memref<1x1x8xi32, #tpu.memory_space<vmem>>, vector<1x1x8xi32>
    %11 = vector.shape_cast %10 : vector<1x1x8xi32> to vector<1x8xi32>
    %12 = vector.shape_cast %9#1 : vector<1x8xi32> to vector<1x1x8xi32>
    tpu.vector_store %arg2[%c0_5, %c0_6, %c0_7], %12 {strides = array<i32>} : memref<1x1x8xi32, #tpu.memory_space<vmem>>, vector<1x1x8xi32>,
    return
  }
  func.func @transform_0(%arg0: i32) -> (i32, i32, i32) {
    %c0_i32 = arith.constant 0 : i32
    %c0_i32_0 = arith.constant 0 : i32
    %c0_i32_1 = arith.constant 0 : i32
    return %arg0, %c0_i32, %c0_i32_0 : i32, i32, i32
  }
  func.func @transform_1(%arg0: i32) -> (i32, i32, i32) {
    %c0_i32 = arith.constant 0 : i32
    %c0_i32_0 = arith.constant 0 : i32
    %c0_i32_1 = arith.constant 0 : i32
    return %arg0, %c0_i32, %c0_i32_0 : i32, i32, i32
  }
}

module attributes {stable_mosaic.version = 11 : i64} {
  func.func @kernel(%arg0: i32, %arg1: i32, %arg2: i32, %arg3: memref<1x8x8xf32, #tpu.memory_space<vmem>>, %arg4: memref<1x8x32xf32, #tpu.memory_space<vmem>>, %arg5: memref<1x8x32xi32, #tpu.memory_space<vmem>>, %arg6: memref<1x8x32xi32, #tpu.memory_space<vmem>>) attributes {dimension_semantics = [#tpu.dimension_semantics<parallel>, #tpu.dimension_semantics<parallel>, #tpu.dimension_semantics<parallel>], iteration_bounds = array<i64: 2, 1, 1>, scalar_prefetch = 0 : i64, scratch_operands = 0 : i64, tpu.core_type = #tpu.core_type<tc>, window_params = [{transform_indices = @transform_0, window_bounds = array<i64: 1, 8, 8>}, {transform_indices = @transform_1, window_bounds = array<i64: 1, 8, 32>}, {transform_indices = @transform_2, window_bounds = array<i64: 1, 8, 32>}, {transform_indices = @transform_3, window_bounds = array<i64: 1, 8, 32>}]} {
    %c0 = arith.constant 0 : index
    %c0_0 = arith.constant 0 : index
    %c0_1 = arith.constant 0 : index
    %0 = vector.load %arg3[%c0, %c0_0, %c0_1] : memref<1x8x8xf32, #tpu.memory_space<vmem>>, vector<1x8x8xf32>
    %1 = vector.shape_cast %0 : vector<1x8x8xf32> to vector<8x8xf32>
    %c0_2 = arith.constant 0 : index
    %c0_3 = arith.constant 0 : index
    %c0_4 = arith.constant 0 : index
    %2 = vector.load %arg4[%c0_2, %c0_3, %c0_4] : memref<1x8x32xf32, #tpu.memory_space<vmem>>, vector<1x8x32xf32>
    %3 = vector.shape_cast %2 : vector<1x8x32xf32> to vector<8x32xf32>
    %cst = arith.constant dense<0.000000e+00> : vector<8x32xf32>
    %4 = tpu.matmul %1, %3, %cst {dimension_numbers = #tpu.dot_dimension_numbers<[1], [0], [0], [1], [0, 0, 1, 1], [], []>} : vector<8x8xf32>, vector<8x32xf32>, vector<8x32xf32> -> vector<8x32xf32>
    %5 = tpu.iota {dimensions = array<i32: 1>} : vector<8x32xi32>
    %c32_i32 = arith.constant 32 : i32
    %6 = arith.muli %arg2, %c32_i32 : i32
    %7 = vector.broadcast %6 : i32 to vector<8x32xi32>
    %8 = arith.addi %5, %7 : vector<8x32xi32>
    %cst_5 = arith.constant 1.600000e-01 : f32
    %9 = vector.broadcast %cst_5 : f32 to vector<8x32xf32>
    %10 = arith.cmpf ogt, %4, %9 : vector<8x32xf32>
    %c32_i32_6 = arith.constant 32 : i32
    %11 = vector.broadcast %c32_i32_6 : i32 to vector<8x32xi32>
    %12 = arith.select %10, %11, %8 : vector<8x32xi1>, vector<8x32xi32>
    %c0_7 = arith.constant 0 : index
    %c0_8 = arith.constant 0 : index
    %c0_9 = arith.constant 0 : index
    %13 = vector.load %arg5[%c0_7, %c0_8, %c0_9] : memref<1x8x32xi32, #tpu.memory_space<vmem>>, vector<1x8x32xi32>
    %14 = vector.shape_cast %13 : vector<1x8x32xi32> to vector<8x32xi32>
    %15 = vector.shape_cast %12 : vector<8x32xi32> to vector<1x8x32xi32>
    tpu.vector_store %arg5[%c0_7, %c0_8, %c0_9], %15 {strides = array<i32>} : memref<1x8x32xi32, #tpu.memory_space<vmem>>, vector<1x8x32xi32>,
    %cst_10 = arith.constant 6.400000e-01 : f32
    %16 = vector.broadcast %cst_10 : f32 to vector<8x32xf32>
    %17 = arith.cmpf ogt, %4, %16 : vector<8x32xf32>
    %c32_i32_11 = arith.constant 32 : i32
    %18 = vector.broadcast %c32_i32_11 : i32 to vector<8x32xi32>
    %19 = arith.select %17, %18, %8 : vector<8x32xi1>, vector<8x32xi32>
    %c0_12 = arith.constant 0 : index
    %c0_13 = arith.constant 0 : index
    %c0_14 = arith.constant 0 : index
    %20 = vector.load %arg6[%c0_12, %c0_13, %c0_14] : memref<1x8x32xi32, #tpu.memory_space<vmem>>, vector<1x8x32xi32>
    %21 = vector.shape_cast %20 : vector<1x8x32xi32> to vector<8x32xi32>
    %22 = vector.shape_cast %19 : vector<8x32xi32> to vector<1x8x32xi32>
    tpu.vector_store %arg6[%c0_12, %c0_13, %c0_14], %22 {strides = array<i32>} : memref<1x8x32xi32, #tpu.memory_space<vmem>>, vector<1x8x32xi32>,
    return
  }
  func.func @transform_0(%arg0: i32, %arg1: i32, %arg2: i32) -> (i32, i32, i32) {
    %c0_i32 = arith.constant 0 : i32
    %c0_i32_0 = arith.constant 0 : i32
    return %arg0, %arg1, %c0_i32 : i32, i32, i32
  }
  func.func @transform_1(%arg0: i32, %arg1: i32, %arg2: i32) -> (i32, i32, i32) {
    %c0_i32 = arith.constant 0 : i32
    %c0_i32_0 = arith.constant 0 : i32
    return %arg0, %c0_i32, %arg2 : i32, i32, i32
  }
  func.func @transform_2(%arg0: i32, %arg1: i32, %arg2: i32) -> (i32, i32, i32) {
    %c0_i32 = arith.constant 0 : i32
    return %arg0, %arg1, %arg2 : i32, i32, i32
  }
  func.func @transform_3(%arg0: i32, %arg1: i32, %arg2: i32) -> (i32, i32, i32) {
    %c0_i32 = arith.constant 0 : i32
    return %arg0, %arg1, %arg2 : i32, i32, i32
  }
}

module attributes {stable_mosaic.version = 11 : i64} {
  func.func @kernel(%arg0: i32, %arg1: i32, %arg2: memref<1x16x1024xbf16, #tpu.memory_space<vmem>>, %arg3: memref<16x16xbf16, #tpu.memory_space<vmem>>, %arg4: memref<16x1xbf16, #tpu.memory_space<vmem>>, %arg5: memref<32x16xbf16, #tpu.memory_space<vmem>>, %arg6: memref<32x1xbf16, #tpu.memory_space<vmem>>, %arg7: memref<1x32x128xf32, #tpu.memory_space<vmem>>) attributes {dimension_semantics = [#tpu.dimension_semantics<parallel>, #tpu.dimension_semantics<arbitrary>], iteration_bounds = array<i64: 2, 1>, scalar_prefetch = 0 : i64, scratch_operands = 0 : i64, tpu.core_type = #tpu.core_type<tc>, window_params = [{transform_indices = @transform_0, window_bounds = array<i64: 1, 16, 1024>}, {pipeline_mode = #tpu.pipeline_mode<synchronous>, transform_indices = @transform_1, window_bounds = array<i64: 16, 16>}, {pipeline_mode = #tpu.pipeline_mode<synchronous>, transform_indices = @transform_2, window_bounds = array<i64: 16, 1>}, {pipeline_mode = #tpu.pipeline_mode<synchronous>, transform_indices = @transform_3, window_bounds = array<i64: 32, 16>}, {pipeline_mode = #tpu.pipeline_mode<synchronous>, transform_indices = @transform_4, window_bounds = array<i64: 32, 1>}, {transform_indices = @transform_5, window_bounds = array<i64: 1, 32, 128>}]} {
    %c0 = arith.constant 0 : index
    %c0_0 = arith.constant 0 : index
    %c0_1 = arith.constant 0 : index
    %0 = vector.load %arg2[%c0, %c0_0, %c0_1] : memref<1x16x1024xbf16, #tpu.memory_space<vmem>>, vector<1x16x1024xbf16>
    %1 = vector.shape_cast %0 : vector<1x16x1024xbf16> to vector<16x1024xbf16>
    %c0_2 = arith.constant 0 : index
    %c0_3 = arith.constant 0 : index
    %2 = vector.load %arg3[%c0_2, %c0_3] : memref<16x16xbf16, #tpu.memory_space<vmem>>, vector<16x16xbf16>
    %c0_4 = arith.constant 0 : index
    %c0_5 = arith.constant 0 : index
    %3 = vector.load %arg4[%c0_4, %c0_5] : memref<16x1xbf16, #tpu.memory_space<vmem>>, vector<16x1xbf16>
    %cst = arith.constant dense<0.000000e+00> : vector<16x1024xf32>
    %4 = tpu.matmul %2, %1, %cst {dimension_numbers = #tpu.dot_dimension_numbers<[1], [0], [0], [1], [0, 0, 1, 1], [], []>} : vector<16x16xbf16>, vector<16x1024xbf16>, vector<16x1024xf32> -> vector<16x1024xf32>
    %5 = arith.truncf %4 : vector<16x1024xf32> to vector<16x1024xbf16>
    %6 = vector.broadcast %3 : vector<16x1xbf16> to vector<16x1024xbf16>
    %7 = arith.addf %5, %6 : vector<16x1024xbf16>
    %cst_6 = arith.constant 0.000000e+00 : bf16
    %8 = vector.broadcast %cst_6 : bf16 to vector<16x1024xbf16>
    %9 = arith.maximumf %7, %8 : vector<16x1024xbf16>
    %c0_7 = arith.constant 0 : index
    %c0_8 = arith.constant 0 : index
    %10 = vector.load %arg5[%c0_7, %c0_8] : memref<32x16xbf16, #tpu.memory_space<vmem>>, vector<32x16xbf16>
    %c0_9 = arith.constant 0 : index
    %c0_10 = arith.constant 0 : index
    %11 = vector.load %arg6[%c0_9, %c0_10] : memref<32x1xbf16, #tpu.memory_space<vmem>>, vector<32x1xbf16>
    %cst_11 = arith.constant dense<0.000000e+00> : vector<32x1024xf32>
    %12 = tpu.matmul %10, %9, %cst_11 {dimension_numbers = #tpu.dot_dimension_numbers<[1], [0], [0], [1], [0, 0, 1, 1], [], []>} : vector<32x16xbf16>, vector<16x1024xbf16>, vector<32x1024xf32> -> vector<32x1024xf32>
    %13 = arith.truncf %12 : vector<32x1024xf32> to vector<32x1024xbf16>
    %14 = vector.broadcast %11 : vector<32x1xbf16> to vector<32x1024xbf16>
    %15 = arith.addf %13, %14 : vector<32x1024xbf16>
    %cst_12 = arith.constant 0.000000e+00 : bf16
    %16 = vector.broadcast %cst_12 : bf16 to vector<32x1024xbf16>
    %17 = arith.maximumf %15, %16 : vector<32x1024xbf16>
    %18 = vector.extract_strided_slice %17 {offsets = [0, 0], sizes = [32, 128], strides = [1, 1]} : vector<32x1024xbf16> to vector<32x128xbf16>
    %19 = vector.extract_strided_slice %17 {offsets = [0, 128], sizes = [32, 128], strides = [1, 1]} : vector<32x1024xbf16> to vector<32x128xbf16>
    %20 = arith.maximumf %18, %19 : vector<32x128xbf16>
    %21 = vector.extract_strided_slice %17 {offsets = [0, 256], sizes = [32, 128], strides = [1, 1]} : vector<32x1024xbf16> to vector<32x128xbf16>
    %22 = arith.maximumf %20, %21 : vector<32x128xbf16>
    %23 = vector.extract_strided_slice %17 {offsets = [0, 384], sizes = [32, 128], strides = [1, 1]} : vector<32x1024xbf16> to vector<32x128xbf16>
    %24 = arith.maximumf %22, %23 : vector<32x128xbf16>
    %25 = vector.extract_strided_slice %17 {offsets = [0, 512], sizes = [32, 128], strides = [1, 1]} : vector<32x1024xbf16> to vector<32x128xbf16>
    %26 = arith.maximumf %24, %25 : vector<32x128xbf16>
    %27 = vector.extract_strided_slice %17 {offsets = [0, 640], sizes = [32, 128], strides = [1, 1]} : vector<32x1024xbf16> to vector<32x128xbf16>
    %28 = arith.maximumf %26, %27 : vector<32x128xbf16>
    %29 = vector.extract_strided_slice %17 {offsets = [0, 768], sizes = [32, 128], strides = [1, 1]} : vector<32x1024xbf16> to vector<32x128xbf16>
    %30 = arith.maximumf %28, %29 : vector<32x128xbf16>
    %31 = vector.extract_strided_slice %17 {offsets = [0, 896], sizes = [32, 128], strides = [1, 1]} : vector<32x1024xbf16> to vector<32x128xbf16>
    %32 = arith.maximumf %30, %31 : vector<32x128xbf16>
    %c0_i32 = arith.constant 0 : i32
    %33 = arith.cmpi eq, %arg1, %c0_i32 : i32
    %34 = arith.extui %33 : i1 to i32
    %c0_i32_13 = arith.constant 0 : i32
    %35 = arith.cmpi ne, %34, %c0_i32_13 : i32
    scf.if %35 {
      %39 = arith.extf %32 : vector<32x128xbf16> to vector<32x128xf32>
      %c0_16 = arith.constant 0 : index
      %c0_17 = arith.constant 0 : index
      %c0_18 = arith.constant 0 : index
      %40 = vector.load %arg7[%c0_16, %c0_17, %c0_18] : memref<1x32x128xf32, #tpu.memory_space<vmem>>, vector<1x32x128xf32>
      %41 = vector.shape_cast %40 : vector<1x32x128xf32> to vector<32x128xf32>
      %42 = vector.shape_cast %39 : vector<32x128xf32> to vector<1x32x128xf32>
      tpu.vector_store %arg7[%c0_16, %c0_17, %c0_18], %42 {strides = array<i32>} : memref<1x32x128xf32, #tpu.memory_space<vmem>>, vector<1x32x128xf32>,
    } else {
    }
    %c0_i32_14 = arith.constant 0 : i32
    %36 = arith.cmpi sgt, %arg1, %c0_i32_14 : i32
    %37 = arith.extui %36 : i1 to i32
    %c0_i32_15 = arith.constant 0 : i32
    %38 = arith.cmpi ne, %37, %c0_i32_15 : i32
    scf.if %38 {
      %c0_16 = arith.constant 0 : index
      %c0_17 = arith.constant 0 : index
      %c0_18 = arith.constant 0 : index
      %39 = vector.load %arg7[%c0_16, %c0_17, %c0_18] : memref<1x32x128xf32, #tpu.memory_space<vmem>>, vector<1x32x128xf32>
      %40 = vector.shape_cast %39 : vector<1x32x128xf32> to vector<32x128xf32>
      %41 = arith.extf %32 : vector<32x128xbf16> to vector<32x128xf32>
      %42 = arith.maximumf %40, %41 : vector<32x128xf32>
      %c0_19 = arith.constant 0 : index
      %c0_20 = arith.constant 0 : index
      %c0_21 = arith.constant 0 : index
      %43 = vector.load %arg7[%c0_19, %c0_20, %c0_21] : memref<1x32x128xf32, #tpu.memory_space<vmem>>, vector<1x32x128xf32>
      %44 = vector.shape_cast %43 : vector<1x32x128xf32> to vector<32x128xf32>
      %45 = vector.shape_cast %42 : vector<32x128xf32> to vector<1x32x128xf32>
      tpu.vector_store %arg7[%c0_19, %c0_20, %c0_21], %45 {strides = array<i32>} : memref<1x32x128xf32, #tpu.memory_space<vmem>>, vector<1x32x128xf32>,
    } else {
    }
    return
  }
  func.func @transform_0(%arg0: i32, %arg1: i32) -> (i32, i32, i32) {
    %c0_i32 = arith.constant 0 : i32
    %c0_i32_0 = arith.constant 0 : i32
    return %arg0, %c0_i32, %arg1 : i32, i32, i32
  }
  func.func @transform_1(%arg0: i32, %arg1: i32) -> (i32, i32) {
    %c0_i32 = arith.constant 0 : i32
    %c0_i32_0 = arith.constant 0 : i32
    %c0_i32_1 = arith.constant 0 : i32
    return %c0_i32, %c0_i32_0 : i32, i32
  }
  func.func @transform_2(%arg0: i32, %arg1: i32) -> (i32, i32) {
    %c0_i32 = arith.constant 0 : i32
    %c0_i32_0 = arith.constant 0 : i32
    %c0_i32_1 = arith.constant 0 : i32
    return %c0_i32, %c0_i32_0 : i32, i32
  }
  func.func @transform_3(%arg0: i32, %arg1: i32) -> (i32, i32) {
    %c0_i32 = arith.constant 0 : i32
    %c0_i32_0 = arith.constant 0 : i32
    %c0_i32_1 = arith.constant 0 : i32
    return %c0_i32, %c0_i32_0 : i32, i32
  }
  func.func @transform_4(%arg0: i32, %arg1: i32) -> (i32, i32) {
    %c0_i32 = arith.constant 0 : i32
    %c0_i32_0 = arith.constant 0 : i32
    %c0_i32_1 = arith.constant 0 : i32
    return %c0_i32, %c0_i32_0 : i32, i32
  }
  func.func @transform_5(%arg0: i32, %arg1: i32) -> (i32, i32, i32) {
    %c0_i32 = arith.constant 0 : i32
    %c0_i32_0 = arith.constant 0 : i32
    %c0_i32_1 = arith.constant 0 : i32
    return %arg0, %c0_i32, %c0_i32_0 : i32, i32, i32
  }
}

module attributes {stable_mosaic.version = 11 : i64} {
  func.func @kernel(%arg0: i32, %arg1: i32, %arg2: memref<1x16x2048xbf16, #tpu.memory_space<vmem>>, %arg3: memref<32x16xbf16, #tpu.memory_space<vmem>>, %arg4: memref<32x1xbf16, #tpu.memory_space<vmem>>, %arg5: memref<64x32xbf16, #tpu.memory_space<vmem>>, %arg6: memref<64x1xbf16, #tpu.memory_space<vmem>>, %arg7: memref<1x64x128xf32, #tpu.memory_space<vmem>>) attributes {dimension_semantics = [#tpu.dimension_semantics<parallel>, #tpu.dimension_semantics<arbitrary>], iteration_bounds = array<i64: 2, 1>, scalar_prefetch = 0 : i64, scratch_operands = 0 : i64, tpu.core_type = #tpu.core_type<tc>, window_params = [{transform_indices = @transform_0, window_bounds = array<i64: 1, 16, 2048>}, {pipeline_mode = #tpu.pipeline_mode<synchronous>, transform_indices = @transform_1, window_bounds = array<i64: 32, 16>}, {pipeline_mode = #tpu.pipeline_mode<synchronous>, transform_indices = @transform_2, window_bounds = array<i64: 32, 1>}, {pipeline_mode = #tpu.pipeline_mode<synchronous>, transform_indices = @transform_3, window_bounds = array<i64: 64, 32>}, {pipeline_mode = #tpu.pipeline_mode<synchronous>, transform_indices = @transform_4, window_bounds = array<i64: 64, 1>}, {transform_indices = @transform_5, window_bounds = array<i64: 1, 64, 128>}]} {
    %c0 = arith.constant 0 : index
    %c0_0 = arith.constant 0 : index
    %c0_1 = arith.constant 0 : index
    %0 = vector.load %arg2[%c0, %c0_0, %c0_1] : memref<1x16x2048xbf16, #tpu.memory_space<vmem>>, vector<1x16x2048xbf16>
    %1 = vector.shape_cast %0 : vector<1x16x2048xbf16> to vector<16x2048xbf16>
    %c0_2 = arith.constant 0 : index
    %c0_3 = arith.constant 0 : index
    %2 = vector.load %arg3[%c0_2, %c0_3] : memref<32x16xbf16, #tpu.memory_space<vmem>>, vector<32x16xbf16>
    %c0_4 = arith.constant 0 : index
    %c0_5 = arith.constant 0 : index
    %3 = vector.load %arg4[%c0_4, %c0_5] : memref<32x1xbf16, #tpu.memory_space<vmem>>, vector<32x1xbf16>
    %cst = arith.constant dense<0.000000e+00> : vector<32x2048xf32>
    %4 = tpu.matmul %2, %1, %cst {dimension_numbers = #tpu.dot_dimension_numbers<[1], [0], [0], [1], [0, 0, 1, 1], [], []>} : vector<32x16xbf16>, vector<16x2048xbf16>, vector<32x2048xf32> -> vector<32x2048xf32>
    %5 = arith.truncf %4 : vector<32x2048xf32> to vector<32x2048xbf16>
    %6 = vector.broadcast %3 : vector<32x1xbf16> to vector<32x2048xbf16>
    %7 = arith.addf %5, %6 : vector<32x2048xbf16>
    %cst_6 = arith.constant 0.000000e+00 : bf16
    %8 = vector.broadcast %cst_6 : bf16 to vector<32x2048xbf16>
    %9 = arith.maximumf %7, %8 : vector<32x2048xbf16>
    %c0_7 = arith.constant 0 : index
    %c0_8 = arith.constant 0 : index
    %10 = vector.load %arg5[%c0_7, %c0_8] : memref<64x32xbf16, #tpu.memory_space<vmem>>, vector<64x32xbf16>
    %c0_9 = arith.constant 0 : index
    %c0_10 = arith.constant 0 : index
    %11 = vector.load %arg6[%c0_9, %c0_10] : memref<64x1xbf16, #tpu.memory_space<vmem>>, vector<64x1xbf16>
    %cst_11 = arith.constant dense<0.000000e+00> : vector<64x2048xf32>
    %12 = tpu.matmul %10, %9, %cst_11 {dimension_numbers = #tpu.dot_dimension_numbers<[1], [0], [0], [1], [0, 0, 1, 1], [], []>} : vector<64x32xbf16>, vector<32x2048xbf16>, vector<64x2048xf32> -> vector<64x2048xf32>
    %13 = arith.truncf %12 : vector<64x2048xf32> to vector<64x2048xbf16>
    %14 = vector.broadcast %11 : vector<64x1xbf16> to vector<64x2048xbf16>
    %15 = arith.addf %13, %14 : vector<64x2048xbf16>
    %cst_12 = arith.constant 0.000000e+00 : bf16
    %16 = vector.broadcast %cst_12 : bf16 to vector<64x2048xbf16>
    %17 = arith.maximumf %15, %16 : vector<64x2048xbf16>
    %18 = vector.extract_strided_slice %17 {offsets = [0, 0], sizes = [64, 128], strides = [1, 1]} : vector<64x2048xbf16> to vector<64x128xbf16>
    %19 = vector.extract_strided_slice %17 {offsets = [0, 128], sizes = [64, 128], strides = [1, 1]} : vector<64x2048xbf16> to vector<64x128xbf16>
    %20 = arith.maximumf %18, %19 : vector<64x128xbf16>
    %21 = vector.extract_strided_slice %17 {offsets = [0, 256], sizes = [64, 128], strides = [1, 1]} : vector<64x2048xbf16> to vector<64x128xbf16>
    %22 = arith.maximumf %20, %21 : vector<64x128xbf16>
    %23 = vector.extract_strided_slice %17 {offsets = [0, 384], sizes = [64, 128], strides = [1, 1]} : vector<64x2048xbf16> to vector<64x128xbf16>
    %24 = arith.maximumf %22, %23 : vector<64x128xbf16>
    %25 = vector.extract_strided_slice %17 {offsets = [0, 512], sizes = [64, 128], strides = [1, 1]} : vector<64x2048xbf16> to vector<64x128xbf16>
    %26 = arith.maximumf %24, %25 : vector<64x128xbf16>
    %27 = vector.extract_strided_slice %17 {offsets = [0, 640], sizes = [64, 128], strides = [1, 1]} : vector<64x2048xbf16> to vector<64x128xbf16>
    %28 = arith.maximumf %26, %27 : vector<64x128xbf16>
    %29 = vector.extract_strided_slice %17 {offsets = [0, 768], sizes = [64, 128], strides = [1, 1]} : vector<64x2048xbf16> to vector<64x128xbf16>
    %30 = arith.maximumf %28, %29 : vector<64x128xbf16>
    %31 = vector.extract_strided_slice %17 {offsets = [0, 896], sizes = [64, 128], strides = [1, 1]} : vector<64x2048xbf16> to vector<64x128xbf16>
    %32 = arith.maximumf %30, %31 : vector<64x128xbf16>
    %33 = vector.extract_strided_slice %17 {offsets = [0, 1024], sizes = [64, 128], strides = [1, 1]} : vector<64x2048xbf16> to vector<64x128xbf16>
    %34 = arith.maximumf %32, %33 : vector<64x128xbf16>
    %35 = vector.extract_strided_slice %17 {offsets = [0, 1152], sizes = [64, 128], strides = [1, 1]} : vector<64x2048xbf16> to vector<64x128xbf16>
    %36 = arith.maximumf %34, %35 : vector<64x128xbf16>
    %37 = vector.extract_strided_slice %17 {offsets = [0, 1280], sizes = [64, 128], strides = [1, 1]} : vector<64x2048xbf16> to vector<64x128xbf16>
    %38 = arith.maximumf %36, %37 : vector<64x128xbf16>
    %39 = vector.extract_strided_slice %17 {offsets = [0, 1408], sizes = [64, 128], strides = [1, 1]} : vector<64x2048xbf16> to vector<64x128xbf16>
    %40 = arith.maximumf %38, %39 : vector<64x128xbf16>
    %41 = vector.extract_strided_slice %17 {offsets = [0, 1536], sizes = [64, 128], strides = [1, 1]} : vector<64x2048xbf16> to vector<64x128xbf16>
    %42 = arith.maximumf %40, %41 : vector<64x128xbf16>
    %43 = vector.extract_strided_slice %17 {offsets = [0, 1664], sizes = [64, 128], strides = [1, 1]} : vector<64x2048xbf16> to vector<64x128xbf16>
    %44 = arith.maximumf %42, %43 : vector<64x128xbf16>
    %45 = vector.extract_strided_slice %17 {offsets = [0, 1792], sizes = [64, 128], strides = [1, 1]} : vector<64x2048xbf16> to vector<64x128xbf16>
    %46 = arith.maximumf %44, %45 : vector<64x128xbf16>
    %47 = vector.extract_strided_slice %17 {offsets = [0, 1920], sizes = [64, 128], strides = [1, 1]} : vector<64x2048xbf16> to vector<64x128xbf16>
    %48 = arith.maximumf %46, %47 : vector<64x128xbf16>
    %c0_i32 = arith.constant 0 : i32
    %49 = arith.cmpi eq, %arg1, %c0_i32 : i32
    %50 = arith.extui %49 : i1 to i32
    %c0_i32_13 = arith.constant 0 : i32
    %51 = arith.cmpi ne, %50, %c0_i32_13 : i32
    scf.if %51 {
      %55 = arith.extf %48 : vector<64x128xbf16> to vector<64x128xf32>
      %c0_16 = arith.constant 0 : index
      %c0_17 = arith.constant 0 : index
      %c0_18 = arith.constant 0 : index
      %56 = vector.load %arg7[%c0_16, %c0_17, %c0_18] : memref<1x64x128xf32, #tpu.memory_space<vmem>>, vector<1x64x128xf32>
      %57 = vector.shape_cast %56 : vector<1x64x128xf32> to vector<64x128xf32>
      %58 = vector.shape_cast %55 : vector<64x128xf32> to vector<1x64x128xf32>
      tpu.vector_store %arg7[%c0_16, %c0_17, %c0_18], %58 {strides = array<i32>} : memref<1x64x128xf32, #tpu.memory_space<vmem>>, vector<1x64x128xf32>,
    } else {
    }
    %c0_i32_14 = arith.constant 0 : i32
    %52 = arith.cmpi sgt, %arg1, %c0_i32_14 : i32
    %53 = arith.extui %52 : i1 to i32
    %c0_i32_15 = arith.constant 0 : i32
    %54 = arith.cmpi ne, %53, %c0_i32_15 : i32
    scf.if %54 {
      %c0_16 = arith.constant 0 : index
      %c0_17 = arith.constant 0 : index
      %c0_18 = arith.constant 0 : index
      %55 = vector.load %arg7[%c0_16, %c0_17, %c0_18] : memref<1x64x128xf32, #tpu.memory_space<vmem>>, vector<1x64x128xf32>
      %56 = vector.shape_cast %55 : vector<1x64x128xf32> to vector<64x128xf32>
      %57 = arith.extf %48 : vector<64x128xbf16> to vector<64x128xf32>
      %58 = arith.maximumf %56, %57 : vector<64x128xf32>
      %c0_19 = arith.constant 0 : index
      %c0_20 = arith.constant 0 : index
      %c0_21 = arith.constant 0 : index
      %59 = vector.load %arg7[%c0_19, %c0_20, %c0_21] : memref<1x64x128xf32, #tpu.memory_space<vmem>>, vector<1x64x128xf32>
      %60 = vector.shape_cast %59 : vector<1x64x128xf32> to vector<64x128xf32>
      %61 = vector.shape_cast %58 : vector<64x128xf32> to vector<1x64x128xf32>
      tpu.vector_store %arg7[%c0_19, %c0_20, %c0_21], %61 {strides = array<i32>} : memref<1x64x128xf32, #tpu.memory_space<vmem>>, vector<1x64x128xf32>,
    } else {
    }
    return
  }
  func.func @transform_0(%arg0: i32, %arg1: i32) -> (i32, i32, i32) {
    %c0_i32 = arith.constant 0 : i32
    %c0_i32_0 = arith.constant 0 : i32
    return %arg0, %c0_i32, %arg1 : i32, i32, i32
  }
  func.func @transform_1(%arg0: i32, %arg1: i32) -> (i32, i32) {
    %c0_i32 = arith.constant 0 : i32
    %c0_i32_0 = arith.constant 0 : i32
    %c0_i32_1 = arith.constant 0 : i32
    return %c0_i32, %c0_i32_0 : i32, i32
  }
  func.func @transform_2(%arg0: i32, %arg1: i32) -> (i32, i32) {
    %c0_i32 = arith.constant 0 : i32
    %c0_i32_0 = arith.constant 0 : i32
    %c0_i32_1 = arith.constant 0 : i32
    return %c0_i32, %c0_i32_0 : i32, i32
  }
  func.func @transform_3(%arg0: i32, %arg1: i32) -> (i32, i32) {
    %c0_i32 = arith.constant 0 : i32
    %c0_i32_0 = arith.constant 0 : i32
    %c0_i32_1 = arith.constant 0 : i32
    return %c0_i32, %c0_i32_0 : i32, i32
  }
  func.func @transform_4(%arg0: i32, %arg1: i32) -> (i32, i32) {
    %c0_i32 = arith.constant 0 : i32
    %c0_i32_0 = arith.constant 0 : i32
    %c0_i32_1 = arith.constant 0 : i32
    return %c0_i32, %c0_i32_0 : i32, i32
  }
  func.func @transform_5(%arg0: i32, %arg1: i32) -> (i32, i32, i32) {
    %c0_i32 = arith.constant 0 : i32
    %c0_i32_0 = arith.constant 0 : i32
    %c0_i32_1 = arith.constant 0 : i32
    return %arg0, %c0_i32, %c0_i32_0 : i32, i32, i32
  }
}

</mosaic_0001>

<llo_original>
// kernel: neg.4
$region0: #{neg.4}
  #allocation0 [shape = 's32[1]{0}', space=sflag, size = 0x4, scoped, tag = 'scoped memory for neg.4']
  %s0 = inlined_call_operand.vmem [shape: s32[2,8,32], index: 0, kind: input, shape index: {}]
  %s1 = inlined_call_operand.vmem [shape: s32[2,8,32], index: 1, kind: output, shape index: {}]
  %v2 = vld [vmem:[%s0] sm:$0xff]
  %3 = xla_tuple %v2
  %4 = xla_tuple %3
  %v5 = vsub.s32 0, %v2
  %6 = xla_tuple %v5
  %7 = vst [vmem:[%s1] sm:$0xff] %v5
  %s8 = scalar_lea.vmem %s0, 8
  %v9 = vld [vmem:[%s8] sm:$0xff]
  %10 = xla_tuple %v9
  %11 = xla_tuple %10
  %v12 = vsub.s32 0, %v9
  %13 = xla_tuple %v12
  %s14 = scalar_lea.vmem %s1, 8
  %15 = vst [vmem:[%s14] sm:$0xff] %v12

// kernel: pointnet_sa_msg_forward.4
$region0: #{pointnet_sa_msg_forward.4}
  #allocation0 [shape = 'u32[]', space=smem, size = 0x4, offset = 0x4, fixed_abs, tag = 'smem constant byte address 0x4 - core index']
  #allocation1 [shape = 'u32[72,128]{1,0:T(1,128)}', space=vmem, size = 0x9000, scoped, tag = 'internal scratch']
  %s0 = inlined_call_operand.vmem [shape: f32[2,3,32], index: 0, kind: input, shape index: {}]
  %s1 = inlined_call_operand.vmem [shape: s32[2,1,8], index: 1, kind: output, shape index: {}]
  %s2 = sld [smem:[#allocation0]]
  $region44: #{pointnet_sa_msg_forward.4} parent=0
    _
  %s4 = ssub.s32 1, %s2
  %s5 = scalar_select 0, %s4, %s2
  loop: start=0, step=1, limit=4
  $region2: #{pointnet_sa_msg_forward.4} parent=0 // loop_pre_header
    _
  $region3: #{pointnet_sa_msg_forward.4} parent=0 // loop_header
    %s7 = sphi 0, %s11
    %p8 = scmp.ge.s32.totalorder %s7, 4
    %s17 = sphi 0, %s19
    %s20 = sphi 0, %s17
    %s21 = sphi 0, %s20
    %s37 = sphi 0, %s21
    %s43 = sphi 0, %s45
    %s46 = sphi 0, %s43
    %s47 = sphi 0, %s46
    %s63 = sphi 0, %s47
  $region4: #{pointnet_sa_msg_forward.4} parent=0 // loop_header_branch
    %10 = sbr.rel (%p8) target = $region8
  $region5: #{pointnet_sa_msg_forward.4} parent=0 // loop_body
    %s12 = ssub.s32 %s7, 1
    %s13 = ssub.s32 %s7, 2
    %s14 = sadd.s32 %s7, 1
    %s15 = ssub.s32 %s7, %s14
    %p16 = scmp.eq.s32.totalorder %s15, 0
    %s18 = sadd.s32 %s17, 1
    %s19 = scalar_select %p16, %s17, %s18
    %p22 = pneg %p16
    %p23 = scmp.eq.s32.totalorder %s7, 1
    %p24 = por %p22, %p23
    %p25 = scmp.ne.s32.totalorder %s17, %s20
    %p26 = scmp.eq.s32.totalorder %s7, 0
    %p27 = por %p25, %p26
    %p28 = scmp.ne.s32.totalorder %s17, %s20
    %p29 = scmp.eq.s32.totalorder %s12, 1
    %p30 = por %p28, %p29
    %p31 = scmp.ne.s32.totalorder %s20, %s21
    %p32 = scmp.eq.s32.totalorder %s12, 0
    %p33 = por %p31, %p32
    %p34 = scmp.ne.s32.totalorder %s20, %s21
    %p35 = scmp.eq.s32.totalorder %s13, 1
    %p36 = por %p34, %p35
    %p38 = scmp.ne.s32.totalorder %s21, %s37
    %p39 = scmp.eq.s32.totalorder %s13, 0
    %p40 = por %p38, %p39
    %s41 = ssub.s32 %s7, %s14
    %p42 = scmp.eq.s32.totalorder %s41, 0
    %s44 = sadd.s32 %s43, 1
    %s45 = scalar_select %p42, %s43, %s44
    %p48 = pneg %p42
    %p49 = scmp.eq.s32.totalorder %s7, 1
    %p50 = por %p48, %p49
    %p51 = scmp.ne.s32.totalorder %s43, %s46
    %p52 = scmp.eq.s32.totalorder %s7, 0
    %p53 = por %p51, %p52
    %p54 = scmp.ne.s32.totalorder %s43, %s46
    %p55 = scmp.eq.s32.totalorder %s12, 1
    %p56 = por %p54, %p55
    %p57 = scmp.ne.s32.totalorder %s46, %s47
    %p58 = scmp.eq.s32.totalorder %s12, 0
    %p59 = por %p57, %p58
    %p60 = scmp.ne.s32.totalorder %s46, %s47
    %p61 = scmp.eq.s32.totalorder %s13, 1
    %p62 = por %p60, %p61
    %p64 = scmp.ne.s32.totalorder %s47, %s63
    %p65 = scmp.eq.s32.totalorder %s13, 0
    %p66 = por %p64, %p65
    %p67 = scmp.le.s32.totalorder 1, %s7
    %p68 = scmp.lt.s32.totalorder %s7, 3
    %p69 = pnand %p67, %p68
    %p70 = pneg %p69
    // Predicated region
    $region9: #{pointnet_sa_msg_forward.4} parent=5 // pred_check
      _
    $region10: #{pointnet_sa_msg_forward.4} parent=5 // pred_check_branch
      %72 = sbr.rel (%p69) target = $region12
    $region11: #{pointnet_sa_msg_forward.4} parent=5 // pred_region
      %s73 = ssub.s32 %s7, 1
    $region12: #{pointnet_sa_msg_forward.4} parent=5 // pred_fallthru
      _
    %p74 = scmp.lt.s32.totalorder %s7, 2
    // Predicated region
    $region13: #{pointnet_sa_msg_forward.4} parent=5 // pred_check
      %p75 = pneg %p74
    $region14: #{pointnet_sa_msg_forward.4} parent=5 // pred_check_branch
      %77 = sbr.rel (%p75) target = $region16
    $region15: #{pointnet_sa_msg_forward.4} parent=5 // pred_region
      // Predicated region
      $region17: #{pointnet_sa_msg_forward.4} parent=15 // pred_check
        %p78 = pneg %p27
      $region18: #{pointnet_sa_msg_forward.4} parent=15 // pred_check_branch
        %80 = sbr.rel (%p78) target = $region20
      $region19: #{pointnet_sa_msg_forward.4} parent=15 // pred_region
        %p81 = scmp.lt.s32.totalorder %s7, 1
        %s82 = scalar_select %p81, %s7, 1
        %s83 = smul.addr %s82, 4
        %s84 = scalar_lea.vmem %s0, %s83
      $region20: #{pointnet_sa_msg_forward.4} parent=15 // pred_fallthru
        _
    $region16: #{pointnet_sa_msg_forward.4} parent=5 // pred_fallthru
      _
    %p85 = scmp.le.s32.totalorder 1, %s7
    %p86 = scmp.lt.s32.totalorder %s7, 3
    %p87 = pnand %p85, %p86
    %p88 = pneg %p87
    // Predicated region
    $region21: #{pointnet_sa_msg_forward.4} parent=5 // pred_check
      _
    $region22: #{pointnet_sa_msg_forward.4} parent=5 // pred_check_branch
      %90 = sbr.rel (%p87) target = $region24
    $region23: #{pointnet_sa_msg_forward.4} parent=5 // pred_region
      %s91 = ssub.s32 %s7, 1
      %p92 = scmp.lt.s32.totalorder %s12, 1
      %s93 = scalar_select %p92, %s12, 1
      %s94 = smul.addr %s93, 4
      %s95 = scalar_lea.vmem %s0, %s94
      %p96 = pneg %p33
      %p97 = pneg %p30
      %p98 = pneg %p59
      %p99 = pneg %p56
      %p100 = scmp.lt.s32.totalorder %s12, 1
      %s101 = scalar_select %p100, %s12, 1
      %s102 = scalar_lea.vmem %s1, %s101
      %p103 = scmp.lt.s32.totalorder %s12, 1
      %s104 = scalar_select %p103, %s12, 1
      %s105 = smul.addr %s104, 4
      %s106 = scalar_lea.vmem %s0, %s105
      %p107 = scmp.lt.s32.totalorder %s12, 1
      %s108 = scalar_select %p107, %s12, 1
      %s109 = scalar_lea.vmem %s1, %s108
      %v110 = vld [vmem:[%s106] sm:$0x7]
      %v111 = vlaneseq
      %v112 = vand.u32 %v111, 127
      loop: start=0, step=1, limit=8
      $region25: #{pointnet_sa_msg_forward.4} parent=23 // loop_pre_header
        _
      $region26: #{pointnet_sa_msg_forward.4} parent=23 // loop_header
        %s114 = sphi 0, %s118
        %p115 = scmp.ge.s32.totalorder %s114, 8
        %v119 = vphi 0, %v161
        %v120 = vphi 0, %v124
        %v121 = vphi 1e+10, %v140
      $region27: #{pointnet_sa_msg_forward.4} parent=23 // loop_header_branch
        %117 = sbr.rel (%p115) target = $region31
      $region28: #{pointnet_sa_msg_forward.4} parent=23 // loop_body
        %v122 = vstv %s114
        %vm123 = vcmp.eq.s32.totalorder %v112, %v122
        %v124 = vsel %vm123, %v119, %v120
        %vm125 = vcmp.eq.s32.totalorder %v112, %v119
        %v126 = vsel %vm125, %v110, 0.0
        %vm127 = vcmask 256000
        %v128 = vsel %vm127, %v126, 0.0
        %129 = vadd.xlane.f32.xlu0 %v128
        %v130 = vpop.xlane.xlu0 %129
        %v131 = vsub.f32 %v110, %v130
        %v132 = vmul.f32 %v131, %v131
        %v133 = vsel %vm127, %v132, 0.0
        %v134 = vrot.slane %v133, 4
        %v135 = vadd.f32 %v133, %v134
        %v136 = vrot.slane %v135, 2
        %v137 = vadd.f32 %v135, %v136
        %v138 = vrot.slane %v137, 1
        %v139 = vadd.f32 %v137, %v138
        %v140 = vmin.f32 %v121, %v139
        %vm141 = vcmask 261120
        %v142 = vsel %vm141, %v140, -inf
        %143 = vmax.xlane.f32.xlu0 %v142
        %v144 = vpop.xlane.xlu0 %143
        %vm145 = vcmp.eq.f32.partialorder %v140, %v144
        %v146 = vsel %vm145, %v112, 32
        %v147 = vsel %vm141, %v146, 2147483647
        %v148 = vand.u32 %v147, 65535
        %v149 = vshra.s32 %v147, 16
        %v150 = vcvt.s32.f32 %v148
        %v151 = vcvt.s32.f32 %v149
        %152 = vmin.xlane.f32.xlu0 %v151
        %v153 = vpop.xlane.xlu0 %152
        %vm154 = vcmp.eq.f32.partialorder %v151, %v153
        %v155 = vsel %vm154, %v150, inf
        %156 = vmin.xlane.f32.xlu0 %v155
        %v157 = vpop.xlane.xlu0 %156
        %v158 = vcvt.f32.s32 %v157
        %v159 = vcvt.f32.s32 %v153
        %v160 = vshll.u32 %v159, 16
        %v161 = vadd.s32 %v160, %v158
      $region29: #{pointnet_sa_msg_forward.4} parent=23 // loop_footer
        %s118 = sadd.s32 1, %s114
      $region30: #{pointnet_sa_msg_forward.4} parent=23 // loop_footer_branch
        %113 = sbr.rel target = $region26
      $region31: #{pointnet_sa_msg_forward.4} parent=23 // loop_exit
        _
      %vm162 = vcmask 57344
      %163 = vst.msk [vmem:[%s109] sm:$0x1] %vm162, %v120
      %p164 = scmp.lt.s32.totalorder %s12, 1
      %s165 = scalar_select %p164, %s12, 1
      %s166 = scalar_lea.vmem %s1, %s165
      // Predicated region
      $region32: #{pointnet_sa_msg_forward.4} parent=23 // pred_check
        %p167 = pneg %p56
      $region33: #{pointnet_sa_msg_forward.4} parent=23 // pred_check_branch
        %169 = sbr.rel (%p167) target = $region35
      $region34: #{pointnet_sa_msg_forward.4} parent=23 // pred_region
        _
      $region35: #{pointnet_sa_msg_forward.4} parent=23 // pred_fallthru
        _
    $region24: #{pointnet_sa_msg_forward.4} parent=5 // pred_fallthru
      _
    %p170 = scmp.le.s32.totalorder 2, %s7
    // Predicated region
    $region36: #{pointnet_sa_msg_forward.4} parent=5 // pred_check
      %p171 = pneg %p170
    $region37: #{pointnet_sa_msg_forward.4} parent=5 // pred_check_branch
      %173 = sbr.rel (%p171) target = $region39
    $region38: #{pointnet_sa_msg_forward.4} parent=5 // pred_region
      %s174 = ssub.s32 %s7, 2
      // Predicated region
      $region40: #{pointnet_sa_msg_forward.4} parent=38 // pred_check
        %p175 = pneg %p62
      $region41: #{pointnet_sa_msg_forward.4} parent=38 // pred_check_branch
        %177 = sbr.rel (%p175) target = $region43
      $region42: #{pointnet_sa_msg_forward.4} parent=38 // pred_region
        %p178 = scmp.lt.s32.totalorder %s13, 1
        %s179 = scalar_select %p178, %s13, 1
        %s180 = scalar_lea.vmem %s1, %s179
      $region43: #{pointnet_sa_msg_forward.4} parent=38 // pred_fallthru
        _
    $region39: #{pointnet_sa_msg_forward.4} parent=5 // pred_fallthru
      _
  $region6: #{pointnet_sa_msg_forward.4} parent=0 // loop_footer
    %s11 = sadd.s32 1, %s7
  $region7: #{pointnet_sa_msg_forward.4} parent=0 // loop_footer_branch
    %6 = sbr.rel target = $region3
  $region8: #{pointnet_sa_msg_forward.4} parent=0 // loop_exit
    _

// kernel: pointnet_sa_msg_forward.5
$region0: #{pointnet_sa_msg_forward.5}
  #allocation0 [shape = 'u32[]', space=smem, size = 0x4, offset = 0x4, fixed_abs, tag = 'smem constant byte address 0x4 - core index']
  #allocation1 [shape = 'u32[72,128]{1,0:T(1,128)}', space=vmem, size = 0x9000, scoped, tag = 'internal scratch']
  %s0 = inlined_call_operand.vmem [shape: f32[2,8,8], index: 0, kind: input, shape index: {}]
  %s1 = inlined_call_operand.vmem [shape: f32[2,8,32], index: 1, kind: input, shape index: {}]
  %s2 = inlined_call_operand.vmem [shape: s32[2,8,32], index: 2, kind: output, shape index: {0}]
  %s3 = inlined_call_operand.vmem [shape: s32[2,8,32], index: 3, kind: output, shape index: {1}]
  %4 = xla_tuple %s2, %s3
  %s5 = sld [smem:[#allocation0]]
  $region49: #{pointnet_sa_msg_forward.5} parent=0
    _
  %s7 = ssub.s32 1, %s5
  %s8 = scalar_select 0, %s7, %s5
  loop: start=0, step=1, limit=4
  $region2: #{pointnet_sa_msg_forward.5} parent=0 // loop_pre_header
    _
  $region3: #{pointnet_sa_msg_forward.5} parent=0 // loop_header
    %s10 = sphi 0, %s14
    %p11 = scmp.ge.s32.totalorder %s10, 4
    %s17 = sphi 0, %s36
    %s18 = sphi 0, %s32
    %s19 = sphi 0, %s28
    %s20 = sphi 0, %s17
    %s21 = sphi 0, %s18
    %s22 = sphi 0, %s19
    %s23 = sphi 0, %s20
    %s24 = sphi 0, %s21
    %s25 = sphi 0, %s22
    %s41 = sphi 0, %s43
    %s44 = sphi 0, %s41
    %s45 = sphi 0, %s44
    %s61 = sphi 0, %s45
    %s69 = sphi 0, %s71
    %s72 = sphi 0, %s69
    %s73 = sphi 0, %s72
    %s89 = sphi 0, %s73
    %s99 = sphi 0, %s101
    %s102 = sphi 0, %s99
    %s103 = sphi 0, %s102
    %s119 = sphi 0, %s103
    %s129 = sphi 0, %s131
    %s132 = sphi 0, %s129
    %s133 = sphi 0, %s132
    %s149 = sphi 0, %s133
  $region4: #{pointnet_sa_msg_forward.5} parent=0 // loop_header_branch
    %13 = sbr.rel (%p11) target = $region8
  $region5: #{pointnet_sa_msg_forward.5} parent=0 // loop_body
    %s15 = ssub.s32 %s10, 1
    %s16 = ssub.s32 %s10, 2
    %s26 = sadd.s32 1, %s19
    %p27 = scmp.ge.s32.totalorder %s26, 1
    %s28 = scalar_select %p27, 0, %s26
    %s29 = sadd.s32 1, %s18
    %s30 = scalar_select %p27, %s29, %s18
    %p31 = scmp.ge.s32.totalorder %s30, 1
    %s32 = scalar_select %p31, 0, %s30
    %s33 = sadd.s32 1, %s17
    %s34 = scalar_select %p31, %s33, %s17
    %p35 = scmp.ge.s32.totalorder %s34, 2
    %s36 = scalar_select %p35, 0, %s34
    %s37 = ssub.s32 %s17, %s36
    %s38 = ssub.s32 %s18, %s32
    %s39 = sor.u32 %s37, %s38
    %p40 = scmp.eq.s32.totalorder %s39, 0
    %s42 = sadd.s32 %s41, 1
    %s43 = scalar_select %p40, %s41, %s42
    %p46 = pneg %p40
    %p47 = scmp.eq.s32.totalorder %s10, 1
    %p48 = por %p46, %p47
    %p49 = scmp.ne.s32.totalorder %s41, %s44
    %p50 = scmp.eq.s32.totalorder %s10, 0
    %p51 = por %p49, %p50
    %p52 = scmp.ne.s32.totalorder %s41, %s44
    %p53 = scmp.eq.s32.totalorder %s15, 1
    %p54 = por %p52, %p53
    %p55 = scmp.ne.s32.totalorder %s44, %s45
    %p56 = scmp.eq.s32.totalorder %s15, 0
    %p57 = por %p55, %p56
    %p58 = scmp.ne.s32.totalorder %s44, %s45
    %p59 = scmp.eq.s32.totalorder %s16, 1
    %p60 = por %p58, %p59
    %p62 = scmp.ne.s32.totalorder %s45, %s61
    %p63 = scmp.eq.s32.totalorder %s16, 0
    %p64 = por %p62, %p63
    %s65 = ssub.s32 %s17, %s36
    %s66 = ssub.s32 %s19, %s28
    %s67 = sor.u32 %s65, %s66
    %p68 = scmp.eq.s32.totalorder %s67, 0
    %s70 = sadd.s32 %s69, 1
    %s71 = scalar_select %p68, %s69, %s70
    %p74 = pneg %p68
    %p75 = scmp.eq.s32.totalorder %s10, 1
    %p76 = por %p74, %p75
    %p77 = scmp.ne.s32.totalorder %s69, %s72
    %p78 = scmp.eq.s32.totalorder %s10, 0
    %p79 = por %p77, %p78
    %p80 = scmp.ne.s32.totalorder %s69, %s72
    %p81 = scmp.eq.s32.totalorder %s15, 1
    %p82 = por %p80, %p81
    %p83 = scmp.ne.s32.totalorder %s72, %s73
    %p84 = scmp.eq.s32.totalorder %s15, 0
    %p85 = por %p83, %p84
    %p86 = scmp.ne.s32.totalorder %s72, %s73
    %p87 = scmp.eq.s32.totalorder %s16, 1
    %p88 = por %p86, %p87
    %p90 = scmp.ne.s32.totalorder %s73, %s89
    %p91 = scmp.eq.s32.totalorder %s16, 0
    %p92 = por %p90, %p91
    %s93 = ssub.s32 %s17, %s36
    %s94 = ssub.s32 %s18, %s32
    %s95 = sor.u32 %s93, %s94
    %s96 = ssub.s32 %s19, %s28
    %s97 = sor.u32 %s95, %s96
    %p98 = scmp.eq.s32.totalorder %s97, 0
    %s100 = sadd.s32 %s99, 1
    %s101 = scalar_select %p98, %s99, %s100
    %p104 = pneg %p98
    %p105 = scmp.eq.s32.totalorder %s10, 1
    %p106 = por %p104, %p105
    %p107 = scmp.ne.s32.totalorder %s99, %s102
    %p108 = scmp.eq.s32.totalorder %s10, 0
    %p109 = por %p107, %p108
    %p110 = scmp.ne.s32.totalorder %s99, %s102
    %p111 = scmp.eq.s32.totalorder %s15, 1
    %p112 = por %p110, %p111
    %p113 = scmp.ne.s32.totalorder %s102, %s103
    %p114 = scmp.eq.s32.totalorder %s15, 0
    %p115 = por %p113, %p114
    %p116 = scmp.ne.s32.totalorder %s102, %s103
    %p117 = scmp.eq.s32.totalorder %s16, 1
    %p118 = por %p116, %p117
    %p120 = scmp.ne.s32.totalorder %s103, %s119
    %p121 = scmp.eq.s32.totalorder %s16, 0
    %p122 = por %p120, %p121
    %s123 = ssub.s32 %s17, %s36
    %s124 = ssub.s32 %s18, %s32
    %s125 = sor.u32 %s123, %s124
    %s126 = ssub.s32 %s19, %s28
    %s127 = sor.u32 %s125, %s126
    %p128 = scmp.eq.s32.totalorder %s127, 0
    %s130 = sadd.s32 %s129, 1
    %s131 = scalar_select %p128, %s129, %s130
    %p134 = pneg %p128
    %p135 = scmp.eq.s32.totalorder %s10, 1
    %p136 = por %p134, %p135
    %p137 = scmp.ne.s32.totalorder %s129, %s132
    %p138 = scmp.eq.s32.totalorder %s10, 0
    %p139 = por %p137, %p138
    %p140 = scmp.ne.s32.totalorder %s129, %s132
    %p141 = scmp.eq.s32.totalorder %s15, 1
    %p142 = por %p140, %p141
    %p143 = scmp.ne.s32.totalorder %s132, %s133
    %p144 = scmp.eq.s32.totalorder %s15, 0
    %p145 = por %p143, %p144
    %p146 = scmp.ne.s32.totalorder %s132, %s133
    %p147 = scmp.eq.s32.totalorder %s16, 1
    %p148 = por %p146, %p147
    %p150 = scmp.ne.s32.totalorder %s133, %s149
    %p151 = scmp.eq.s32.totalorder %s16, 0
    %p152 = por %p150, %p151
    %p153 = scmp.le.s32.totalorder 1, %s10
    %p154 = scmp.lt.s32.totalorder %s10, 3
    %p155 = pnand %p153, %p154
    %p156 = pneg %p155
    // Predicated region
    $region9: #{pointnet_sa_msg_forward.5} parent=5 // pred_check
      _
    $region10: #{pointnet_sa_msg_forward.5} parent=5 // pred_check_branch
      %158 = sbr.rel (%p155) target = $region12
    $region11: #{pointnet_sa_msg_forward.5} parent=5 // pred_region
      %s159 = ssub.s32 %s10, 1
    $region12: #{pointnet_sa_msg_forward.5} parent=5 // pred_fallthru
      _
    %p160 = scmp.lt.s32.totalorder %s10, 2
    // Predicated region
    $region13: #{pointnet_sa_msg_forward.5} parent=5 // pred_check
      %p161 = pneg %p160
    $region14: #{pointnet_sa_msg_forward.5} parent=5 // pred_check_branch
      %163 = sbr.rel (%p161) target = $region16
    $region15: #{pointnet_sa_msg_forward.5} parent=5 // pred_region
      // Predicated region
      $region17: #{pointnet_sa_msg_forward.5} parent=15 // pred_check
        %p164 = pneg %p51
      $region18: #{pointnet_sa_msg_forward.5} parent=15 // pred_check_branch
        %166 = sbr.rel (%p164) target = $region20
      $region19: #{pointnet_sa_msg_forward.5} parent=15 // pred_region
        %p167 = scmp.lt.s32.totalorder %s17, 1
        %s168 = scalar_select %p167, %s17, 1
        %p169 = scmp.lt.s32.totalorder %s18, 0
        %s170 = scalar_select %p169, %s18, 0
        %s171 = sadd.s32 %s170, %s168
        %s172 = smul.addr %s171, 8
        %s173 = scalar_lea.vmem %s0, %s172
      $region20: #{pointnet_sa_msg_forward.5} parent=15 // pred_fallthru
        _
      // Predicated region
      $region21: #{pointnet_sa_msg_forward.5} parent=15 // pred_check
        %p174 = pneg %p79
      $region22: #{pointnet_sa_msg_forward.5} parent=15 // pred_check_branch
        %176 = sbr.rel (%p174) target = $region24
      $region23: #{pointnet_sa_msg_forward.5} parent=15 // pred_region
        %p177 = scmp.lt.s32.totalorder %s17, 1
        %s178 = scalar_select %p177, %s17, 1
        %p179 = scmp.lt.s32.totalorder %s19, 0
        %s180 = scalar_select %p179, %s19, 0
        %s181 = sadd.s32 %s180, %s178
        %s182 = smul.addr %s181, 8
        %s183 = scalar_lea.vmem %s1, %s182
      $region24: #{pointnet_sa_msg_forward.5} parent=15 // pred_fallthru
        _
    $region16: #{pointnet_sa_msg_forward.5} parent=5 // pred_fallthru
      _
    %p184 = scmp.le.s32.totalorder 1, %s10
    %p185 = scmp.lt.s32.totalorder %s10, 3
    %p186 = pnand %p184, %p185
    %p187 = pneg %p186
    // Predicated region
    $region25: #{pointnet_sa_msg_forward.5} parent=5 // pred_check
      _
    $region26: #{pointnet_sa_msg_forward.5} parent=5 // pred_check_branch
      %189 = sbr.rel (%p186) target = $region28
    $region27: #{pointnet_sa_msg_forward.5} parent=5 // pred_region
      %s190 = ssub.s32 %s10, 1
      %p191 = scmp.lt.s32.totalorder %s20, 1
      %s192 = scalar_select %p191, %s20, 1
      %p193 = scmp.lt.s32.totalorder %s21, 0
      %s194 = scalar_select %p193, %s21, 0
      %s195 = sadd.s32 %s194, %s192
      %s196 = smul.addr %s195, 8
      %s197 = scalar_lea.vmem %s0, %s196
      %p198 = pneg %p57
      %p199 = pneg %p54
      %p200 = scmp.lt.s32.totalorder %s20, 1
      %s201 = scalar_select %p200, %s20, 1
      %p202 = scmp.lt.s32.totalorder %s22, 0
      %s203 = scalar_select %p202, %s22, 0
      %s204 = sadd.s32 %s203, %s201
      %s205 = smul.addr %s204, 8
      %s206 = scalar_lea.vmem %s1, %s205
      %p207 = pneg %p85
      %p208 = pneg %p82
      %p209 = pneg %p115
      %p210 = pneg %p112
      %p211 = scmp.lt.s32.totalorder %s20, 1
      %s212 = scalar_select %p211, %s20, 1
      %p213 = scmp.lt.s32.totalorder %s21, 0
      %s214 = scalar_select %p213, %s21, 0
      %p215 = scmp.lt.s32.totalorder %s22, 0
      %s216 = scalar_select %p215, %s22, 0
      %s217 = sadd.s32 %s216, %s214
      %s218 = sadd.s32 %s217, %s212
      %s219 = smul.addr %s218, 8
      %s220 = scalar_lea.vmem %s2, %s219
      %p221 = pneg %p145
      %p222 = pneg %p142
      %p223 = scmp.lt.s32.totalorder %s20, 1
      %s224 = scalar_select %p223, %s20, 1
      %p225 = scmp.lt.s32.totalorder %s21, 0
      %s226 = scalar_select %p225, %s21, 0
      %p227 = scmp.lt.s32.totalorder %s22, 0
      %s228 = scalar_select %p227, %s22, 0
      %s229 = sadd.s32 %s228, %s226
      %s230 = sadd.s32 %s229, %s224
      %s231 = smul.addr %s230, 8
      %s232 = scalar_lea.vmem %s3, %s231
      %p233 = scmp.lt.s32.totalorder %s20, 1
      %s234 = scalar_select %p233, %s20, 1
      %p235 = scmp.lt.s32.totalorder %s21, 0
      %s236 = scalar_select %p235, %s21, 0
      %s237 = sadd.s32 %s236, %s234
      %s238 = smul.addr %s237, 8
      %s239 = scalar_lea.vmem %s0, %s238
      %p240 = scmp.lt.s32.totalorder %s20, 1
      %s241 = scalar_select %p240, %s20, 1
      %p242 = scmp.lt.s32.totalorder %s22, 0
      %s243 = scalar_select %p242, %s22, 0
      %s244 = sadd.s32 %s243, %s241
      %s245 = smul.addr %s244, 8
      %s246 = scalar_lea.vmem %s1, %s245
      %p247 = scmp.lt.s32.totalorder %s20, 1
      %s248 = scalar_select %p247, %s20, 1
      %p249 = scmp.lt.s32.totalorder %s21, 0
      %s250 = scalar_select %p249, %s21, 0
      %p251 = scmp.lt.s32.totalorder %s22, 0
      %s252 = scalar_select %p251, %s22, 0
      %s253 = sadd.s32 %s252, %s250
      %s254 = sadd.s32 %s253, %s248
      %s255 = smul.addr %s254, 8
      %s256 = scalar_lea.vmem %s2, %s255
      %p257 = scmp.lt.s32.totalorder %s20, 1
      %s258 = scalar_select %p257, %s20, 1
      %p259 = scmp.lt.s32.totalorder %s21, 0
      %s260 = scalar_select %p259, %s21, 0
      %p261 = scmp.lt.s32.totalorder %s22, 0
      %s262 = scalar_select %p261, %s22, 0
      %s263 = sadd.s32 %s262, %s260
      %s264 = sadd.s32 %s263, %s258
      %s265 = smul.addr %s264, 8
      %s266 = scalar_lea.vmem %s3, %s265
      %v267 = vld [vmem:[%s239] sm:$0xff]
      %v268 = vld [vmem:[%s246] sm:$0xff]
      %vm269 = vcmask 64512
      %v271 = vsel %vm269, %v267, 0
      %273 = vmatpush.msra.mxu0 0.0
      %274 = vmatpush.msra.mxu0 0.0
      %275 = vmatpush.msra.mxu0 0.0
      %276 = vmatpush.msra.mxu0 0.0
      %277 = vmatpush.msra.mxu0 0.0
      %278 = vmatpush.msra.mxu0 0.0
      %279 = vmatpush.msra.mxu0 0.0
      %280 = vmatpush.msra.mxu0 0.0
      %281 = vmatpush.msra.mxu0 0.0
      %282 = vmatpush.msra.mxu0 0.0
      %283 = vmatpush.msra.mxu0 0.0
      %284 = vmatpush.msra.mxu0 0.0
      %285 = vmatpush.msra.mxu0 0.0
      %286 = vmatpush.msra.mxu0 0.0
      %287 = vmatpush.msra.mxu0 0.0
      %288 = vmatpush.msra.mxu0 %v268
      %289 = vmatmul.f32.gmra.mxu0 %v271
      %v290 = vpop.f32.mrf.mxu0
      %v291 = vadd.f32 0.0, %v290
      %292 = vdwg.mxu0
      %v293 = vlaneseq
      %v294 = vand.u32 %v293, 127
      %s295 = smul.u32 %s22, 32
      %v296 = vstv %s295
      %v297 = vadd.s32 %v294, %v296
      %vm298 = vcmp.gt.f32.partialorder %v291, 0.16
      %v299 = vsel %vm298, 32, %v297
      %vm300 = vcmask 261120
      %301 = vst.msk [vmem:[%s256] sm:$0xff] %vm300, %v299
      %vm302 = vcmp.gt.f32.partialorder %v291, 0.64
      %v303 = vsel %vm302, 32, %v297
      %304 = vst.msk [vmem:[%s266] sm:$0xff] %vm300, %v303
      %p305 = scmp.lt.s32.totalorder %s20, 1
      %s306 = scalar_select %p305, %s20, 1
      %p307 = scmp.lt.s32.totalorder %s21, 0
      %s308 = scalar_select %p307, %s21, 0
      %p309 = scmp.lt.s32.totalorder %s22, 0
      %s310 = scalar_select %p309, %s22, 0
      %s311 = sadd.s32 %s310, %s308
      %s312 = sadd.s32 %s311, %s306
      %s313 = smul.addr %s312, 8
      %s314 = scalar_lea.vmem %s2, %s313
      %p315 = scmp.lt.s32.totalorder %s20, 1
      %s316 = scalar_select %p315, %s20, 1
      %p317 = scmp.lt.s32.totalorder %s21, 0
      %s318 = scalar_select %p317, %s21, 0
      %p319 = scmp.lt.s32.totalorder %s22, 0
      %s320 = scalar_select %p319, %s22, 0
      %s321 = sadd.s32 %s320, %s318
      %s322 = sadd.s32 %s321, %s316
      %s323 = smul.addr %s322, 8
      %s324 = scalar_lea.vmem %s3, %s323
      // Predicated region
      $region29: #{pointnet_sa_msg_forward.5} parent=27 // pred_check
        %p325 = pneg %p112
      $region30: #{pointnet_sa_msg_forward.5} parent=27 // pred_check_branch
        %327 = sbr.rel (%p325) target = $region32
      $region31: #{pointnet_sa_msg_forward.5} parent=27 // pred_region
        _
      $region32: #{pointnet_sa_msg_forward.5} parent=27 // pred_fallthru
        _
      // Predicated region
      $region33: #{pointnet_sa_msg_forward.5} parent=27 // pred_check
        %p328 = pneg %p142
      $region34: #{pointnet_sa_msg_forward.5} parent=27 // pred_check_branch
        %330 = sbr.rel (%p328) target = $region36
      $region35: #{pointnet_sa_msg_forward.5} parent=27 // pred_region
        _
      $region36: #{pointnet_sa_msg_forward.5} parent=27 // pred_fallthru
        _
    $region28: #{pointnet_sa_msg_forward.5} parent=5 // pred_fallthru
      _
    %p331 = scmp.le.s32.totalorder 2, %s10
    // Predicated region
    $region37: #{pointnet_sa_msg_forward.5} parent=5 // pred_check
      %p332 = pneg %p331
    $region38: #{pointnet_sa_msg_forward.5} parent=5 // pred_check_branch
      %334 = sbr.rel (%p332) target = $region40
    $region39: #{pointnet_sa_msg_forward.5} parent=5 // pred_region
      %s335 = ssub.s32 %s10, 2
      // Predicated region
      $region41: #{pointnet_sa_msg_forward.5} parent=39 // pred_check
        %p336 = pneg %p118
      $region42: #{pointnet_sa_msg_forward.5} parent=39 // pred_check_branch
        %338 = sbr.rel (%p336) target = $region44
      $region43: #{pointnet_sa_msg_forward.5} parent=39 // pred_region
        %p339 = scmp.lt.s32.totalorder %s23, 1
        %s340 = scalar_select %p339, %s23, 1
        %p341 = scmp.lt.s32.totalorder %s24, 0
        %s342 = scalar_select %p341, %s24, 0
        %p343 = scmp.lt.s32.totalorder %s25, 0
        %s344 = scalar_select %p343, %s25, 0
        %s345 = sadd.s32 %s344, %s342
        %s346 = sadd.s32 %s345, %s340
        %s347 = smul.addr %s346, 8
        %s348 = scalar_lea.vmem %s2, %s347
      $region44: #{pointnet_sa_msg_forward.5} parent=39 // pred_fallthru
        _
      // Predicated region
      $region45: #{pointnet_sa_msg_forward.5} parent=39 // pred_check
        %p349 = pneg %p148
      $region46: #{pointnet_sa_msg_forward.5} parent=39 // pred_check_branch
        %351 = sbr.rel (%p349) target = $region48
      $region47: #{pointnet_sa_msg_forward.5} parent=39 // pred_region
        %p352 = scmp.lt.s32.totalorder %s23, 1
        %s353 = scalar_select %p352, %s23, 1
        %p354 = scmp.lt.s32.totalorder %s24, 0
        %s355 = scalar_select %p354, %s24, 0
        %p356 = scmp.lt.s32.totalorder %s25, 0
        %s357 = scalar_select %p356, %s25, 0
        %s358 = sadd.s32 %s357, %s355
        %s359 = sadd.s32 %s358, %s353
        %s360 = smul.addr %s359, 8
        %s361 = scalar_lea.vmem %s3, %s360
      $region48: #{pointnet_sa_msg_forward.5} parent=39 // pred_fallthru
        _
    $region40: #{pointnet_sa_msg_forward.5} parent=5 // pred_fallthru
      _
  $region6: #{pointnet_sa_msg_forward.5} parent=0 // loop_footer
    %s14 = sadd.s32 1, %s10
  $region7: #{pointnet_sa_msg_forward.5} parent=0 // loop_footer_branch
    %9 = sbr.rel target = $region3
  $region8: #{pointnet_sa_msg_forward.5} parent=0 // loop_exit
    _

// kernel: pointnet_sa_msg_forward.6
$region0: #{pointnet_sa_msg_forward.6}
  #allocation0 [shape = 'u32[]', space=smem, size = 0x4, offset = 0x4, fixed_abs, tag = 'smem constant byte address 0x4 - core index']
  #allocation1 [shape = 'u32[72,128]{1,0:T(1,128)}', space=vmem, size = 0x9000, scoped, tag = 'internal scratch']
  %s0 = inlined_call_operand.vmem [shape: bf16[2,16,1024], index: 0, kind: input, shape index: {}]
  %s1 = inlined_call_operand.vmem [shape: bf16[16,16], index: 1, kind: input, shape index: {}]
  %s2 = inlined_call_operand.vmem [shape: bf16[16,1], index: 2, kind: input, shape index: {}]
  %s3 = inlined_call_operand.vmem [shape: bf16[32,16], index: 3, kind: input, shape index: {}]
  %s4 = inlined_call_operand.vmem [shape: bf16[32,1], index: 4, kind: input, shape index: {}]
  %s5 = inlined_call_operand.vmem [shape: f32[2,32,128], index: 5, kind: output, shape index: {}]
  %s6 = sld [smem:[#allocation0]]
  $region61: #{pointnet_sa_msg_forward.6} parent=0
    _
  %s8 = ssub.s32 1, %s6
  %s9 = scalar_select 0, %s8, %s6
  loop: start=0, step=1, limit=4
  $region2: #{pointnet_sa_msg_forward.6} parent=0 // loop_pre_header
    _
  $region3: #{pointnet_sa_msg_forward.6} parent=0 // loop_header
    %s11 = sphi 0, %s15
    %p12 = scmp.ge.s32.totalorder %s11, 4
    %s18 = sphi 0, %s30
    %s19 = sphi 0, %s26
    %s20 = sphi 0, %s18
    %s21 = sphi 0, %s19
    %s22 = sphi 0, %s20
    %s23 = sphi 0, %s21
    %s35 = sphi 0, %s37
    %s38 = sphi 0, %s35
    %s39 = sphi 0, %s38
    %s55 = sphi 0, %s39
    %s59 = sphi 0, %s59
    %s61 = sphi 0, %s59
    %s62 = sphi 0, %s61
    %s76 = sphi 0, %s62
    %s80 = sphi 0, %s80
    %s82 = sphi 0, %s80
    %s83 = sphi 0, %s82
    %s97 = sphi 0, %s83
    %s101 = sphi 0, %s101
    %s103 = sphi 0, %s101
    %s104 = sphi 0, %s103
    %s118 = sphi 0, %s104
    %s122 = sphi 0, %s122
    %s124 = sphi 0, %s122
    %s125 = sphi 0, %s124
    %s139 = sphi 0, %s125
    %s145 = sphi 0, %s147
    %s148 = sphi 0, %s145
    %s149 = sphi 0, %s148
    %s165 = sphi 0, %s149
  $region4: #{pointnet_sa_msg_forward.6} parent=0 // loop_header_branch
    %14 = sbr.rel (%p12) target = $region8
  $region5: #{pointnet_sa_msg_forward.6} parent=0 // loop_body
    %s16 = ssub.s32 %s11, 1
    %s17 = ssub.s32 %s11, 2
    %s24 = sadd.s32 1, %s19
    %p25 = scmp.ge.s32.totalorder %s24, 1
    %s26 = scalar_select %p25, 0, %s24
    %s27 = sadd.s32 1, %s18
    %s28 = scalar_select %p25, %s27, %s18
    %p29 = scmp.ge.s32.totalorder %s28, 2
    %s30 = scalar_select %p29, 0, %s28
    %s31 = ssub.s32 %s18, %s30
    %s32 = ssub.s32 %s19, %s26
    %s33 = sor.u32 %s31, %s32
    %p34 = scmp.eq.s32.totalorder %s33, 0
    %s36 = sadd.s32 %s35, 1
    %s37 = scalar_select %p34, %s35, %s36
    %p40 = pneg %p34
    %p41 = scmp.eq.s32.totalorder %s11, 1
    %p42 = por %p40, %p41
    %p43 = scmp.ne.s32.totalorder %s35, %s38
    %p44 = scmp.eq.s32.totalorder %s11, 0
    %p45 = por %p43, %p44
    %p46 = scmp.ne.s32.totalorder %s35, %s38
    %p47 = scmp.eq.s32.totalorder %s16, 1
    %p48 = por %p46, %p47
    %p49 = scmp.ne.s32.totalorder %s38, %s39
    %p50 = scmp.eq.s32.totalorder %s16, 0
    %p51 = por %p49, %p50
    %p52 = scmp.ne.s32.totalorder %s38, %s39
    %p53 = scmp.eq.s32.totalorder %s17, 1
    %p54 = por %p52, %p53
    %p56 = scmp.ne.s32.totalorder %s39, %s55
    %p57 = scmp.eq.s32.totalorder %s17, 0
    %p58 = por %p56, %p57
    %s60 = sadd.s32 %s59, 1
    %p63 = scmp.eq.s32.totalorder %s11, 1
    %p64 = scmp.ne.s32.totalorder %s59, %s61
    %p65 = scmp.eq.s32.totalorder %s11, 0
    %p66 = por %p64, %p65
    %p67 = scmp.ne.s32.totalorder %s59, %s61
    %p68 = scmp.eq.s32.totalorder %s16, 1
    %p69 = por %p67, %p68
    %p70 = scmp.ne.s32.totalorder %s61, %s62
    %p71 = scmp.eq.s32.totalorder %s16, 0
    %p72 = por %p70, %p71
    %p73 = scmp.ne.s32.totalorder %s61, %s62
    %p74 = scmp.eq.s32.totalorder %s17, 1
    %p75 = por %p73, %p74
    %p77 = scmp.ne.s32.totalorder %s62, %s76
    %p78 = scmp.eq.s32.totalorder %s17, 0
    %p79 = por %p77, %p78
    %s81 = sadd.s32 %s80, 1
    %p84 = scmp.eq.s32.totalorder %s11, 1
    %p85 = scmp.ne.s32.totalorder %s80, %s82
    %p86 = scmp.eq.s32.totalorder %s11, 0
    %p87 = por %p85, %p86
    %p88 = scmp.ne.s32.totalorder %s80, %s82
    %p89 = scmp.eq.s32.totalorder %s16, 1
    %p90 = por %p88, %p89
    %p91 = scmp.ne.s32.totalorder %s82, %s83
    %p92 = scmp.eq.s32.totalorder %s16, 0
    %p93 = por %p91, %p92
    %p94 = scmp.ne.s32.totalorder %s82, %s83
    %p95 = scmp.eq.s32.totalorder %s17, 1
    %p96 = por %p94, %p95
    %p98 = scmp.ne.s32.totalorder %s83, %s97
    %p99 = scmp.eq.s32.totalorder %s17, 0
    %p100 = por %p98, %p99
    %s102 = sadd.s32 %s101, 1
    %p105 = scmp.eq.s32.totalorder %s11, 1
    %p106 = scmp.ne.s32.totalorder %s101, %s103
    %p107 = scmp.eq.s32.totalorder %s11, 0
    %p108 = por %p106, %p107
    %p109 = scmp.ne.s32.totalorder %s101, %s103
    %p110 = scmp.eq.s32.totalorder %s16, 1
    %p111 = por %p109, %p110
    %p112 = scmp.ne.s32.totalorder %s103, %s104
    %p113 = scmp.eq.s32.totalorder %s16, 0
    %p114 = por %p112, %p113
    %p115 = scmp.ne.s32.totalorder %s103, %s104
    %p116 = scmp.eq.s32.totalorder %s17, 1
    %p117 = por %p115, %p116
    %p119 = scmp.ne.s32.totalorder %s104, %s118
    %p120 = scmp.eq.s32.totalorder %s17, 0
    %p121 = por %p119, %p120
    %s123 = sadd.s32 %s122, 1
    %p126 = scmp.eq.s32.totalorder %s11, 1
    %p127 = scmp.ne.s32.totalorder %s122, %s124
    %p128 = scmp.eq.s32.totalorder %s11, 0
    %p129 = por %p127, %p128
    %p130 = scmp.ne.s32.totalorder %s122, %s124
    %p131 = scmp.eq.s32.totalorder %s16, 1
    %p132 = por %p130, %p131
    %p133 = scmp.ne.s32.totalorder %s124, %s125
    %p134 = scmp.eq.s32.totalorder %s16, 0
    %p135 = por %p133, %p134
    %p136 = scmp.ne.s32.totalorder %s124, %s125
    %p137 = scmp.eq.s32.totalorder %s17, 1
    %p138 = por %p136, %p137
    %p140 = scmp.ne.s32.totalorder %s125, %s139
    %p141 = scmp.eq.s32.totalorder %s17, 0
    %p142 = por %p140, %p141
    %s143 = ssub.s32 %s18, %s30
    %p144 = scmp.eq.s32.totalorder %s143, 0
    %s146 = sadd.s32 %s145, 1
    %s147 = scalar_select %p144, %s145, %s146
    %p150 = pneg %p144
    %p151 = scmp.eq.s32.totalorder %s11, 1
    %p152 = por %p150, %p151
    %p153 = scmp.ne.s32.totalorder %s145, %s148
    %p154 = scmp.eq.s32.totalorder %s11, 0
    %p155 = por %p153, %p154
    %p156 = scmp.ne.s32.totalorder %s145, %s148
    %p157 = scmp.eq.s32.totalorder %s16, 1
    %p158 = por %p156, %p157
    %p159 = scmp.ne.s32.totalorder %s148, %s149
    %p160 = scmp.eq.s32.totalorder %s16, 0
    %p161 = por %p159, %p160
    %p162 = scmp.ne.s32.totalorder %s148, %s149
    %p163 = scmp.eq.s32.totalorder %s17, 1
    %p164 = por %p162, %p163
    %p166 = scmp.ne.s32.totalorder %s149, %s165
    %p167 = scmp.eq.s32.totalorder %s17, 0
    %p168 = por %p166, %p167
    %p169 = scmp.le.s32.totalorder 1, %s11
    %p170 = scmp.lt.s32.totalorder %s11, 3
    %p171 = pnand %p169, %p170
    %p172 = pneg %p171
    // Predicated region
    $region9: #{pointnet_sa_msg_forward.6} parent=5 // pred_check
      _
    $region10: #{pointnet_sa_msg_forward.6} parent=5 // pred_check_branch
      %174 = sbr.rel (%p171) target = $region12
    $region11: #{pointnet_sa_msg_forward.6} parent=5 // pred_region
      %s175 = ssub.s32 %s11, 1
      // Predicated region
      $region13: #{pointnet_sa_msg_forward.6} parent=11 // pred_check
        %p176 = pneg %p72
      $region14: #{pointnet_sa_msg_forward.6} parent=11 // pred_check_branch
        %178 = sbr.rel (%p176) target = $region16
      $region15: #{pointnet_sa_msg_forward.6} parent=11 // pred_region
        _
      $region16: #{pointnet_sa_msg_forward.6} parent=11 // pred_fallthru
        _
      // Predicated region
      $region17: #{pointnet_sa_msg_forward.6} parent=11 // pred_check
        %p179 = pneg %p93
      $region18: #{pointnet_sa_msg_forward.6} parent=11 // pred_check_branch
        %181 = sbr.rel (%p179) target = $region20
      $region19: #{pointnet_sa_msg_forward.6} parent=11 // pred_region
        _
      $region20: #{pointnet_sa_msg_forward.6} parent=11 // pred_fallthru
        _
      // Predicated region
      $region21: #{pointnet_sa_msg_forward.6} parent=11 // pred_check
        %p182 = pneg %p114
      $region22: #{pointnet_sa_msg_forward.6} parent=11 // pred_check_branch
        %184 = sbr.rel (%p182) target = $region24
      $region23: #{pointnet_sa_msg_forward.6} parent=11 // pred_region
        _
      $region24: #{pointnet_sa_msg_forward.6} parent=11 // pred_fallthru
        _
      // Predicated region
      $region25: #{pointnet_sa_msg_forward.6} parent=11 // pred_check
        %p185 = pneg %p135
      $region26: #{pointnet_sa_msg_forward.6} parent=11 // pred_check_branch
        %187 = sbr.rel (%p185) target = $region28
      $region27: #{pointnet_sa_msg_forward.6} parent=11 // pred_region
        _
      $region28: #{pointnet_sa_msg_forward.6} parent=11 // pred_fallthru
        _
    $region12: #{pointnet_sa_msg_forward.6} parent=5 // pred_fallthru
      _
    %p188 = scmp.lt.s32.totalorder %s11, 2
    // Predicated region
    $region29: #{pointnet_sa_msg_forward.6} parent=5 // pred_check
      %p189 = pneg %p188
    $region30: #{pointnet_sa_msg_forward.6} parent=5 // pred_check_branch
      %191 = sbr.rel (%p189) target = $region32
    $region31: #{pointnet_sa_msg_forward.6} parent=5 // pred_region
      // Predicated region
      $region33: #{pointnet_sa_msg_forward.6} parent=31 // pred_check
        %p192 = pneg %p45
      $region34: #{pointnet_sa_msg_forward.6} parent=31 // pred_check_branch
        %194 = sbr.rel (%p192) target = $region36
      $region35: #{pointnet_sa_msg_forward.6} parent=31 // pred_region
        %s195 = smul.u32 8, %s19
        %p196 = scmp.lt.s32.totalorder %s18, 1
        %s197 = scalar_select %p196, %s18, 1
        %p198 = scmp.lt.s32.totalorder %s195, 7
        %s199 = scalar_select %p198, %s195, 7
        %s200 = smul.addr %s197, 16
        %s201 = sadd.s32 %s199, %s200
        %s202 = smul.addr %s201, 4
        %s203 = scalar_lea.vmem %s0, %s202
        %s204 = smul.u32 8, %s19
      $region36: #{pointnet_sa_msg_forward.6} parent=31 // pred_fallthru
        _
    $region32: #{pointnet_sa_msg_forward.6} parent=5 // pred_fallthru
      _
    %p205 = scmp.le.s32.totalorder 1, %s11
    %p206 = scmp.lt.s32.totalorder %s11, 3
    %p207 = pnand %p205, %p206
    %p208 = pneg %p207
    // Predicated region
    $region37: #{pointnet_sa_msg_forward.6} parent=5 // pred_check
      _
    $region38: #{pointnet_sa_msg_forward.6} parent=5 // pred_check_branch
      %210 = sbr.rel (%p207) target = $region40
    $region39: #{pointnet_sa_msg_forward.6} parent=5 // pred_region
      %s211 = ssub.s32 %s11, 1
      %s212 = smul.u32 8, %s21
      %p213 = scmp.lt.s32.totalorder %s20, 1
      %s214 = scalar_select %p213, %s20, 1
      %p215 = scmp.lt.s32.totalorder %s212, 7
      %s216 = scalar_select %p215, %s212, 7
      %s217 = smul.addr %s214, 16
      %s218 = sadd.s32 %s216, %s217
      %s219 = smul.addr %s218, 4
      %s220 = scalar_lea.vmem %s0, %s219
      %p221 = pneg %p51
      %p222 = pneg %p48
      %p223 = pneg %p72
      %p224 = pneg %p69
      %p225 = pneg %p93
      %p226 = pneg %p90
      %p227 = pneg %p114
      %p228 = pneg %p111
      %p229 = pneg %p135
      %p230 = pneg %p132
      %p231 = pneg %p161
      %p232 = pneg %p158
      %p233 = scmp.lt.s32.totalorder %s20, 1
      %s234 = scalar_select %p233, %s20, 1
      %s235 = smul.addr %s234, 4
      %s236 = smul.addr %s235, 8
      %s237 = scalar_lea.vmem %s5, %s236
      %s238 = smul.u32 8, %s21
      %p239 = scmp.lt.s32.totalorder %s20, 1
      %s240 = scalar_select %p239, %s20, 1
      %p241 = scmp.lt.s32.totalorder %s238, 7
      %s242 = scalar_select %p241, %s238, 7
      %s243 = smul.addr %s240, 16
      %s244 = sadd.s32 %s242, %s243
      %s245 = smul.addr %s244, 4
      %s246 = scalar_lea.vmem %s0, %s245
      %s247 = smul.u32 8, %s21
      %p248 = scmp.lt.s32.totalorder %s20, 1
      %s249 = scalar_select %p248, %s20, 1
      %s250 = smul.addr %s249, 4
      %s251 = smul.addr %s250, 8
      %s252 = scalar_lea.vmem %s5, %s251
      %v254 = vld [vmem:[%s246] sm:$0xff]
      %v255 = vld [vmem:[%s246 + $0x8] sm:$0xff]
      %v256 = vld [vmem:[%s246 + $0x10] sm:$0xff]
      %v257 = vld [vmem:[%s246 + $0x18] sm:$0xff]
      %v258 = vld [vmem:[%s246 + $0x20] sm:$0xff]
      %v259 = vld [vmem:[%s246 + $0x28] sm:$0xff]
      %v260 = vld [vmem:[%s246 + $0x30] sm:$0xff]
      %v261 = vld [vmem:[%s246 + $0x38] sm:$0xff]
      %v262 = vld [vmem:[%s1] sm:$0xf]
      %v263 = vld [vmem:[%s1 + $0x4] sm:$0xf]
      %v264 = vld [vmem:[%s2] sm:$0xf]
      %v265 = vld [vmem:[%s2 + $0x4] sm:$0xf]
      %v268 = vunpack.c.l.b16 %v262
      %v269 = vunpack.c.l.b16 %v263
      %v270 = vpack.c.b16 %v269, %v268
      %v279 = vunpack.c.l.b16 %v254
      %v280 = vunpack.c.h.b16 %v254
      %v281 = vunpack.c.l.b16 %v255
      %v282 = vunpack.c.h.b16 %v255
      %v283 = vunpack.c.l.b16 %v256
      %v284 = vunpack.c.h.b16 %v256
      %v285 = vunpack.c.l.b16 %v257
      %v286 = vunpack.c.h.b16 %v257
      %v287 = vunpack.c.l.b16 %v258
      %v288 = vunpack.c.h.b16 %v258
      %v289 = vunpack.c.l.b16 %v259
      %v290 = vunpack.c.h.b16 %v259
      %v291 = vunpack.c.l.b16 %v260
      %v292 = vunpack.c.h.b16 %v260
      %v293 = vunpack.c.l.b16 %v261
      %v294 = vunpack.c.h.b16 %v261
      %v295 = vpack.c.b16 %v287, %v279
      %v296 = vpack.c.b16 %v288, %v280
      %v297 = vpack.c.b16 %v289, %v281
      %v298 = vpack.c.b16 %v290, %v282
      %v299 = vpack.c.b16 %v291, %v283
      %v300 = vpack.c.b16 %v292, %v284
      %v301 = vpack.c.b16 %v293, %v285
      %v302 = vpack.c.b16 %v294, %v286
      %vm311 = vcmask 130048
      %v313 = vsel %vm311, %v270, 0
      %315 = vmatpush.bf16.msra.mxu0 0
      %316 = vmatpush.bf16.msra.mxu0 0
      %317 = vmatpush.bf16.msra.mxu0 0
      %318 = vmatpush.bf16.msra.mxu0 0
      %319 = vmatpush.bf16.msra.mxu0 0
      %320 = vmatpush.bf16.msra.mxu0 0
      %321 = vmatpush.bf16.msra.mxu0 0
      %322 = vmatpush.bf16.msra.mxu0 %v295
      %323 = vmatmul.bf16.gmra.mxu0 %v313
      %v324 = vpop.f32.mrf.mxu0
      %v325 = vadd.f32 0.0, %v324
      %v326 = vpop.f32.mrf.mxu0
      %v327 = vadd.f32 0.0, %v326
      %328 = vdwg.mxu0
      %329 = vmatpush.bf16.msra.mxu0 0
      %330 = vmatpush.bf16.msra.mxu0 0
      %331 = vmatpush.bf16.msra.mxu0 0
      %332 = vmatpush.bf16.msra.mxu0 0
      %333 = vmatpush.bf16.msra.mxu0 0
      %334 = vmatpush.bf16.msra.mxu0 0
      %335 = vmatpush.bf16.msra.mxu0 0
      %336 = vmatpush.bf16.msra.mxu0 %v296
      %337 = vmatmul.bf16.gmra.mxu0 %v313
      %v338 = vpop.f32.mrf.mxu0
      %v339 = vadd.f32 0.0, %v338
      %v340 = vpop.f32.mrf.mxu0
      %v341 = vadd.f32 0.0, %v340
      %342 = vdwg.mxu0
      %343 = vmatpush.bf16.msra.mxu0 0
      %344 = vmatpush.bf16.msra.mxu0 0
      %345 = vmatpush.bf16.msra.mxu0 0
      %346 = vmatpush.bf16.msra.mxu0 0
      %347 = vmatpush.bf16.msra.mxu0 0
      %348 = vmatpush.bf16.msra.mxu0 0
      %349 = vmatpush.bf16.msra.mxu0 0
      %350 = vmatpush.bf16.msra.mxu0 %v297
      %351 = vmatmul.bf16.gmra.mxu0 %v313
      %v352 = vpop.f32.mrf.mxu0
      %v353 = vadd.f32 0.0, %v352
      %v354 = vpop.f32.mrf.mxu0
      %v355 = vadd.f32 0.0, %v354
      %356 = vdwg.mxu0
      %357 = vmatpush.bf16.msra.mxu0 0
      %358 = vmatpush.bf16.msra.mxu0 0
      %359 = vmatpush.bf16.msra.mxu0 0
      %360 = vmatpush.bf16.msra.mxu0 0
      %361 = vmatpush.bf16.msra.mxu0 0
      %362 = vmatpush.bf16.msra.mxu0 0
      %363 = vmatpush.bf16.msra.mxu0 0
      %364 = vmatpush.bf16.msra.mxu0 %v298
      %365 = vmatmul.bf16.gmra.mxu0 %v313
      %v366 = vpop.f32.mrf.mxu0
      %v367 = vadd.f32 0.0, %v366
      %v368 = vpop.f32.mrf.mxu0
      %v369 = vadd.f32 0.0, %v368
      %370 = vdwg.mxu0
      %371 = vmatpush.bf16.msra.mxu0 0
      %372 = vmatpush.bf16.msra.mxu0 0
      %373 = vmatpush.bf16.msra.mxu0 0
      %374 = vmatpush.bf16.msra.mxu0 0
      %375 = vmatpush.bf16.msra.mxu0 0
      %376 = vmatpush.bf16.msra.mxu0 0
      %377 = vmatpush.bf16.msra.mxu0 0
      %378 = vmatpush.bf16.msra.mxu0 %v299
      %379 = vmatmul.bf16.gmra.mxu0 %v313
      %v380 = vpop.f32.mrf.mxu0
      %v381 = vadd.f32 0.0, %v380
      %v382 = vpop.f32.mrf.mxu0
      %v383 = vadd.f32 0.0, %v382
      %384 = vdwg.mxu0
      %385 = vmatpush.bf16.msra.mxu0 0
      %386 = vmatpush.bf16.msra.mxu0 0
      %387 = vmatpush.bf16.msra.mxu0 0
      %388 = vmatpush.bf16.msra.mxu0 0
      %389 = vmatpush.bf16.msra.mxu0 0
      %390 = vmatpush.bf16.msra.mxu0 0
      %391 = vmatpush.bf16.msra.mxu0 0
      %392 = vmatpush.bf16.msra.mxu0 %v300
      %393 = vmatmul.bf16.gmra.mxu0 %v313
      %v394 = vpop.f32.mrf.mxu0
      %v395 = vadd.f32 0.0, %v394
      %v396 = vpop.f32.mrf.mxu0
      %v397 = vadd.f32 0.0, %v396
      %398 = vdwg.mxu0
      %399 = vmatpush.bf16.msra.mxu0 0
      %400 = vmatpush.bf16.msra.mxu0 0
      %401 = vmatpush.bf16.msra.mxu0 0
      %402 = vmatpush.bf16.msra.mxu0 0
      %403 = vmatpush.bf16.msra.mxu0 0
      %404 = vmatpush.bf16.msra.mxu0 0
      %405 = vmatpush.bf16.msra.mxu0 0
      %406 = vmatpush.bf16.msra.mxu0 %v301
      %407 = vmatmul.bf16.gmra.mxu0 %v313
      %v408 = vpop.f32.mrf.mxu0
      %v409 = vadd.f32 0.0, %v408
      %v410 = vpop.f32.mrf.mxu0
      %v411 = vadd.f32 0.0, %v410
      %412 = vdwg.mxu0
      %413 = vmatpush.bf16.msra.mxu0 0
      %414 = vmatpush.bf16.msra.mxu0 0
      %415 = vmatpush.bf16.msra.mxu0 0
      %416 = vmatpush.bf16.msra.mxu0 0
      %417 = vmatpush.bf16.msra.mxu0 0
      %418 = vmatpush.bf16.msra.mxu0 0
      %419 = vmatpush.bf16.msra.mxu0 0
      %420 = vmatpush.bf16.msra.mxu0 %v302
      %421 = vmatmul.bf16.gmra.mxu0 %v313
      %v422 = vpop.f32.mrf.mxu0
      %v423 = vadd.f32 0.0, %v422
      %v424 = vpop.f32.mrf.mxu0
      %v425 = vadd.f32 0.0, %v424
      %426 = vdwg.mxu0
      %v427 = vpack.c.bf16 %v339, %v325
      %v428 = vpack.c.bf16 %v367, %v353
      %v429 = vpack.c.bf16 %v395, %v381
      %v430 = vpack.c.bf16 %v423, %v409
      %v431 = vpack.c.bf16 %v341, %v327
      %v432 = vpack.c.bf16 %v369, %v355
      %v433 = vpack.c.bf16 %v397, %v383
      %v434 = vpack.c.bf16 %v425, %v411
      %436 = vset.pattern.permute.xlu0 0
      %437 = vperm.xlu0 %436, %v264
      %v438 = vpop.permute.xlu0 %437
      %v441 = vunpack.c.l.s4 839922192
      %v442 = vunpack.c.0.s8 %v441
      %v443 = vperm.slane %v438, %v442
      %445 = vset.pattern.permute.xlu0 0
      %446 = vperm.xlu0 %445, %v265
      %v447 = vpop.permute.xlu0 %446
      %v450 = vunpack.c.l.s4 839922192
      %v451 = vunpack.c.0.s8 %v450
      %v452 = vperm.slane %v447, %v451
      %v453 = vunpack.c.l.bf16 %v427
      %v454 = vunpack.c.h.bf16 %v427
      %v455 = vunpack.c.l.bf16 %v428
      %v456 = vunpack.c.h.bf16 %v428
      %v457 = vunpack.c.l.bf16 %v429
      %v458 = vunpack.c.h.bf16 %v429
      %v459 = vunpack.c.l.bf16 %v430
      %v460 = vunpack.c.h.bf16 %v430
      %v461 = vunpack.c.l.bf16 %v431
      %v462 = vunpack.c.h.bf16 %v431
      %v463 = vunpack.c.l.bf16 %v432
      %v464 = vunpack.c.h.bf16 %v432
      %v465 = vunpack.c.l.bf16 %v433
      %v466 = vunpack.c.h.bf16 %v433
      %v467 = vunpack.c.l.bf16 %v434
      %v468 = vunpack.c.h.bf16 %v434
      %v469 = vunpack.c.l.bf16 %v443
      %v470 = vunpack.c.l.bf16 %v452
      %v471 = vadd.f32 %v453, %v469
      %v472 = vadd.f32 %v454, %v469
      %v473 = vadd.f32 %v455, %v469
      %v474 = vadd.f32 %v456, %v469
      %v475 = vadd.f32 %v457, %v469
      %v476 = vadd.f32 %v458, %v469
      %v477 = vadd.f32 %v459, %v469
      %v478 = vadd.f32 %v460, %v469
      %v479 = vadd.f32 %v461, %v470
      %v480 = vadd.f32 %v462, %v470
      %v481 = vadd.f32 %v463, %v470
      %v482 = vadd.f32 %v464, %v470
      %v483 = vadd.f32 %v465, %v470
      %v484 = vadd.f32 %v466, %v470
      %v485 = vadd.f32 %v467, %v470
      %v486 = vadd.f32 %v468, %v470
      %v487 = vpack.c.bf16 %v472, %v471
      %v488 = vpack.c.bf16 %v474, %v473
      %v489 = vpack.c.bf16 %v476, %v475
      %v490 = vpack.c.bf16 %v478, %v477
      %v491 = vpack.c.bf16 %v480, %v479
      %v492 = vpack.c.bf16 %v482, %v481
      %v493 = vpack.c.bf16 %v484, %v483
      %v494 = vpack.c.bf16 %v486, %v485
      %v495 = vunpack.c.l.bf16 %v487
      %v496 = vunpack.c.h.bf16 %v487
      %v497 = vunpack.c.l.bf16 %v488
      %v498 = vunpack.c.h.bf16 %v488
      %v499 = vunpack.c.l.bf16 %v489
      %v500 = vunpack.c.h.bf16 %v489
      %v501 = vunpack.c.l.bf16 %v490
      %v502 = vunpack.c.h.bf16 %v490
      %v503 = vunpack.c.l.bf16 %v491
      %v504 = vunpack.c.h.bf16 %v491
      %v505 = vunpack.c.l.bf16 %v492
      %v506 = vunpack.c.h.bf16 %v492
      %v507 = vunpack.c.l.bf16 %v493
      %v508 = vunpack.c.h.bf16 %v493
      %v509 = vunpack.c.l.bf16 %v494
      %v510 = vunpack.c.h.bf16 %v494
      %v511 = vmax.f32 %v495, 0.0
      %v512 = vmax.f32 %v496, 0.0
      %v513 = vmax.f32 %v497, 0.0
      %v514 = vmax.f32 %v498, 0.0
      %v515 = vmax.f32 %v499, 0.0
      %v516 = vmax.f32 %v500, 0.0
      %v517 = vmax.f32 %v501, 0.0
      %v518 = vmax.f32 %v502, 0.0
      %v519 = vmax.f32 %v503, 0.0
      %v520 = vmax.f32 %v504, 0.0
      %v521 = vmax.f32 %v505, 0.0
      %v522 = vmax.f32 %v506, 0.0
      %v523 = vmax.f32 %v507, 0.0
      %v524 = vmax.f32 %v508, 0.0
      %v525 = vmax.f32 %v509, 0.0
      %v526 = vmax.f32 %v510, 0.0
      %v527 = vpack.c.bf16 %v519, %v511
      %v528 = vpack.c.bf16 %v520, %v512
      %v529 = vpack.c.bf16 %v521, %v513
      %v530 = vpack.c.bf16 %v522, %v514
      %v531 = vpack.c.bf16 %v523, %v515
      %v532 = vpack.c.bf16 %v524, %v516
      %v533 = vpack.c.bf16 %v525, %v517
      %v534 = vpack.c.bf16 %v526, %v518
      %v535 = vld [vmem:[%s3] sm:$0xf]
      %v536 = vld [vmem:[%s3 + $0x4] sm:$0xf]
      %v537 = vld [vmem:[%s3 + $0x8] sm:$0xf]
      %v538 = vld [vmem:[%s3 + $0xc] sm:$0xf]
      %v539 = vld [vmem:[%s4] sm:$0xf]
      %v540 = vld [vmem:[%s4 + $0x4] sm:$0xf]
      %v541 = vld [vmem:[%s4 + $0x8] sm:$0xf]
      %v542 = vld [vmem:[%s4 + $0xc] sm:$0xf]
      %v547 = vunpack.c.l.b16 %v535
      %v548 = vunpack.c.l.b16 %v536
      %v549 = vunpack.c.l.b16 %v537
      %v550 = vunpack.c.l.b16 %v538
      %v551 = vpack.c.b16 %v548, %v547
      %v552 = vpack.c.b16 %v550, %v549
      %v554 = vsel %vm311, %v551, 0
      %v557 = vsel %vm311, %v552, 0
      %559 = vmatpush.bf16.msra.mxu0 0
      %560 = vmatpush.bf16.msra.mxu0 0
      %561 = vmatpush.bf16.msra.mxu0 0
      %562 = vmatpush.bf16.msra.mxu0 0
      %563 = vmatpush.bf16.msra.mxu0 0
      %564 = vmatpush.bf16.msra.mxu0 0
      %565 = vmatpush.bf16.msra.mxu0 0
      %566 = vmatpush.bf16.msra.mxu0 %v527
      %567 = vmatmul.bf16.gmra.mxu0 %v554
      %v568 = vpop.f32.mrf.mxu0
      %v569 = vadd.f32 0.0, %v568
      %v570 = vpop.f32.mrf.mxu0
      %v571 = vadd.f32 0.0, %v570
      %572 = vmatmul.bf16.gmra.mxu0 %v557
      %v573 = vpop.f32.mrf.mxu0
      %v574 = vadd.f32 0.0, %v573
      %v575 = vpop.f32.mrf.mxu0
      %v576 = vadd.f32 0.0, %v575
      %577 = vdwg.mxu0
      %578 = vmatpush.bf16.msra.mxu0 0
      %579 = vmatpush.bf16.msra.mxu0 0
      %580 = vmatpush.bf16.msra.mxu0 0
      %581 = vmatpush.bf16.msra.mxu0 0
      %582 = vmatpush.bf16.msra.mxu0 0
      %583 = vmatpush.bf16.msra.mxu0 0
      %584 = vmatpush.bf16.msra.mxu0 0
      %585 = vmatpush.bf16.msra.mxu0 %v528
      %586 = vmatmul.bf16.gmra.mxu0 %v554
      %v587 = vpop.f32.mrf.mxu0
      %v588 = vadd.f32 0.0, %v587
      %v589 = vpop.f32.mrf.mxu0
      %v590 = vadd.f32 0.0, %v589
      %591 = vmatmul.bf16.gmra.mxu0 %v557
      %v592 = vpop.f32.mrf.mxu0
      %v593 = vadd.f32 0.0, %v592
      %v594 = vpop.f32.mrf.mxu0
      %v595 = vadd.f32 0.0, %v594
      %596 = vdwg.mxu0
      %597 = vmatpush.bf16.msra.mxu0 0
      %598 = vmatpush.bf16.msra.mxu0 0
      %599 = vmatpush.bf16.msra.mxu0 0
      %600 = vmatpush.bf16.msra.mxu0 0
      %601 = vmatpush.bf16.msra.mxu0 0
      %602 = vmatpush.bf16.msra.mxu0 0
      %603 = vmatpush.bf16.msra.mxu0 0
      %604 = vmatpush.bf16.msra.mxu0 %v529
      %605 = vmatmul.bf16.gmra.mxu0 %v554
      %v606 = vpop.f32.mrf.mxu0
      %v607 = vadd.f32 0.0, %v606
      %v608 = vpop.f32.mrf.mxu0
      %v609 = vadd.f32 0.0, %v608
      %610 = vmatmul.bf16.gmra.mxu0 %v557
      %v611 = vpop.f32.mrf.mxu0
      %v612 = vadd.f32 0.0, %v611
      %v613 = vpop.f32.mrf.mxu0
      %v614 = vadd.f32 0.0, %v613
      %615 = vdwg.mxu0
      %616 = vmatpush.bf16.msra.mxu0 0
      %617 = vmatpush.bf16.msra.mxu0 0
      %618 = vmatpush.bf16.msra.mxu0 0
      %619 = vmatpush.bf16.msra.mxu0 0
      %620 = vmatpush.bf16.msra.mxu0 0
      %621 = vmatpush.bf16.msra.mxu0 0
      %622 = vmatpush.bf16.msra.mxu0 0
      %623 = vmatpush.bf16.msra.mxu0 %v530
      %624 = vmatmul.bf16.gmra.mxu0 %v554
      %v625 = vpop.f32.mrf.mxu0
      %v626 = vadd.f32 0.0, %v625
      %v627 = vpop.f32.mrf.mxu0
      %v628 = vadd.f32 0.0, %v627
      %629 = vmatmul.bf16.gmra.mxu0 %v557
      %v630 = vpop.f32.mrf.mxu0
      %v631 = vadd.f32 0.0, %v630
      %v632 = vpop.f32.mrf.mxu0
      %v633 = vadd.f32 0.0, %v632
      %634 = vdwg.mxu0
      %635 = vmatpush.bf16.msra.mxu0 0
      %636 = vmatpush.bf16.msra.mxu0 0
      %637 = vmatpush.bf16.msra.mxu0 0
      %638 = vmatpush.bf16.msra.mxu0 0
      %639 = vmatpush.bf16.msra.mxu0 0
      %640 = vmatpush.bf16.msra.mxu0 0
      %641 = vmatpush.bf16.msra.mxu0 0
      %642 = vmatpush.bf16.msra.mxu0 %v531
      %643 = vmatmul.bf16.gmra.mxu0 %v554
      %v644 = vpop.f32.mrf.mxu0
      %v645 = vadd.f32 0.0, %v644
      %v646 = vpop.f32.mrf.mxu0
      %v647 = vadd.f32 0.0, %v646
      %648 = vmatmul.bf16.gmra.mxu0 %v557
      %v649 = vpop.f32.mrf.mxu0
      %v650 = vadd.f32 0.0, %v649
      %v651 = vpop.f32.mrf.mxu0
      %v652 = vadd.f32 0.0, %v651
      %653 = vdwg.mxu0
      %654 = vmatpush.bf16.msra.mxu0 0
      %655 = vmatpush.bf16.msra.mxu0 0
      %656 = vmatpush.bf16.msra.mxu0 0
      %657 = vmatpush.bf16.msra.mxu0 0
      %658 = vmatpush.bf16.msra.mxu0 0
      %659 = vmatpush.bf16.msra.mxu0 0
      %660 = vmatpush.bf16.msra.mxu0 0
      %661 = vmatpush.bf16.msra.mxu0 %v532
      %662 = vmatmul.bf16.gmra.mxu0 %v554
      %v663 = vpop.f32.mrf.mxu0
      %v664 = vadd.f32 0.0, %v663
      %v665 = vpop.f32.mrf.mxu0
      %v666 = vadd.f32 0.0, %v665
      %667 = vmatmul.bf16.gmra.mxu0 %v557
      %v668 = vpop.f32.mrf.mxu0
      %v669 = vadd.f32 0.0, %v668
      %v670 = vpop.f32.mrf.mxu0
      %v671 = vadd.f32 0.0, %v670
      %672 = vdwg.mxu0
      %673 = vmatpush.bf16.msra.mxu0 0
      %674 = vmatpush.bf16.msra.mxu0 0
      %675 = vmatpush.bf16.msra.mxu0 0
      %676 = vmatpush.bf16.msra.mxu0 0
      %677 = vmatpush.bf16.msra.mxu0 0
      %678 = vmatpush.bf16.msra.mxu0 0
      %679 = vmatpush.bf16.msra.mxu0 0
      %680 = vmatpush.bf16.msra.mxu0 %v533
      %681 = vmatmul.bf16.gmra.mxu0 %v554
      %v682 = vpop.f32.mrf.mxu0
      %v683 = vadd.f32 0.0, %v682
      %v684 = vpop.f32.mrf.mxu0
      %v685 = vadd.f32 0.0, %v684
      %686 = vmatmul.bf16.gmra.mxu0 %v557
      %v687 = vpop.f32.mrf.mxu0
      %v688 = vadd.f32 0.0, %v687
      %v689 = vpop.f32.mrf.mxu0
      %v690 = vadd.f32 0.0, %v689
      %691 = vdwg.mxu0
      %692 = vmatpush.bf16.msra.mxu0 0
      %693 = vmatpush.bf16.msra.mxu0 0
      %694 = vmatpush.bf16.msra.mxu0 0
      %695 = vmatpush.bf16.msra.mxu0 0
      %696 = vmatpush.bf16.msra.mxu0 0
      %697 = vmatpush.bf16.msra.mxu0 0
      %698 = vmatpush.bf16.msra.mxu0 0
      %699 = vmatpush.bf16.msra.mxu0 %v534
      %700 = vmatmul.bf16.gmra.mxu0 %v554
      %v701 = vpop.f32.mrf.mxu0
      %v702 = vadd.f32 0.0, %v701
      %v703 = vpop.f32.mrf.mxu0
      %v704 = vadd.f32 0.0, %v703
      %705 = vmatmul.bf16.gmra.mxu0 %v557
      %v706 = vpop.f32.mrf.mxu0
      %v707 = vadd.f32 0.0, %v706
      %v708 = vpop.f32.mrf.mxu0
      %v709 = vadd.f32 0.0, %v708
      %710 = vdwg.mxu0
      %v711 = vpack.c.bf16 %v588, %v569
      %v712 = vpack.c.bf16 %v626, %v607
      %v713 = vpack.c.bf16 %v664, %v645
      %v714 = vpack.c.bf16 %v702, %v683
      %v715 = vpack.c.bf16 %v590, %v571
      %v716 = vpack.c.bf16 %v628, %v609
      %v717 = vpack.c.bf16 %v666, %v647
      %v718 = vpack.c.bf16 %v704, %v685
      %v719 = vpack.c.bf16 %v593, %v574
      %v720 = vpack.c.bf16 %v631, %v612
      %v721 = vpack.c.bf16 %v669, %v650
      %v722 = vpack.c.bf16 %v707, %v688
      %v723 = vpack.c.bf16 %v595, %v576
      %v724 = vpack.c.bf16 %v633, %v614
      %v725 = vpack.c.bf16 %v671, %v652
      %v726 = vpack.c.bf16 %v709, %v690
      %728 = vset.pattern.permute.xlu0 0
      %729 = vperm.xlu0 %728, %v539
      %v730 = vpop.permute.xlu0 %729
      %v733 = vunpack.c.l.s4 839922192
      %v734 = vunpack.c.0.s8 %v733
      %v735 = vperm.slane %v730, %v734
      %737 = vset.pattern.permute.xlu0 0
      %738 = vperm.xlu0 %737, %v540
      %v739 = vpop.permute.xlu0 %738
      %v742 = vunpack.c.l.s4 839922192
      %v743 = vunpack.c.0.s8 %v742
      %v744 = vperm.slane %v739, %v743
      %746 = vset.pattern.permute.xlu0 0
      %747 = vperm.xlu0 %746, %v541
      %v748 = vpop.permute.xlu0 %747
      %v751 = vunpack.c.l.s4 839922192
      %v752 = vunpack.c.0.s8 %v751
      %v753 = vperm.slane %v748, %v752
      %755 = vset.pattern.permute.xlu0 0
      %756 = vperm.xlu0 %755, %v542
      %v757 = vpop.permute.xlu0 %756
      %v760 = vunpack.c.l.s4 839922192
      %v761 = vunpack.c.0.s8 %v760
      %v762 = vperm.slane %v757, %v761
      %v763 = vunpack.c.l.bf16 %v711
      %v764 = vunpack.c.h.bf16 %v711
      %v765 = vunpack.c.l.bf16 %v712
      %v766 = vunpack.c.h.bf16 %v712
      %v767 = vunpack.c.l.bf16 %v713
      %v768 = vunpack.c.h.bf16 %v713
      %v769 = vunpack.c.l.bf16 %v714
      %v770 = vunpack.c.h.bf16 %v714
      %v771 = vunpack.c.l.bf16 %v715
      %v772 = vunpack.c.h.bf16 %v715
      %v773 = vunpack.c.l.bf16 %v716
      %v774 = vunpack.c.h.bf16 %v716
      %v775 = vunpack.c.l.bf16 %v717
      %v776 = vunpack.c.h.bf16 %v717
      %v777 = vunpack.c.l.bf16 %v718
      %v778 = vunpack.c.h.bf16 %v718
      %v779 = vunpack.c.l.bf16 %v719
      %v780 = vunpack.c.h.bf16 %v719
      %v781 = vunpack.c.l.bf16 %v720
      %v782 = vunpack.c.h.bf16 %v720
      %v783 = vunpack.c.l.bf16 %v721
      %v784 = vunpack.c.h.bf16 %v721
      %v785 = vunpack.c.l.bf16 %v722
      %v786 = vunpack.c.h.bf16 %v722
      %v787 = vunpack.c.l.bf16 %v723
      %v788 = vunpack.c.h.bf16 %v723
      %v789 = vunpack.c.l.bf16 %v724
      %v790 = vunpack.c.h.bf16 %v724
      %v791 = vunpack.c.l.bf16 %v725
      %v792 = vunpack.c.h.bf16 %v725
      %v793 = vunpack.c.l.bf16 %v726
      %v794 = vunpack.c.h.bf16 %v726
      %v795 = vunpack.c.l.bf16 %v735
      %v796 = vunpack.c.l.bf16 %v744
      %v797 = vunpack.c.l.bf16 %v753
      %v798 = vunpack.c.l.bf16 %v762
      %v799 = vadd.f32 %v763, %v795
      %v800 = vadd.f32 %v764, %v795
      %v801 = vadd.f32 %v765, %v795
      %v802 = vadd.f32 %v766, %v795
      %v803 = vadd.f32 %v767, %v795
      %v804 = vadd.f32 %v768, %v795
      %v805 = vadd.f32 %v769, %v795
      %v806 = vadd.f32 %v770, %v795
      %v807 = vadd.f32 %v771, %v796
      %v808 = vadd.f32 %v772, %v796
      %v809 = vadd.f32 %v773, %v796
      %v810 = vadd.f32 %v774, %v796
      %v811 = vadd.f32 %v775, %v796
      %v812 = vadd.f32 %v776, %v796
      %v813 = vadd.f32 %v777, %v796
      %v814 = vadd.f32 %v778, %v796
      %v815 = vadd.f32 %v779, %v797
      %v816 = vadd.f32 %v780, %v797
      %v817 = vadd.f32 %v781, %v797
      %v818 = vadd.f32 %v782, %v797
      %v819 = vadd.f32 %v783, %v797
      %v820 = vadd.f32 %v784, %v797
      %v821 = vadd.f32 %v785, %v797
      %v822 = vadd.f32 %v786, %v797
      %v823 = vadd.f32 %v787, %v798
      %v824 = vadd.f32 %v788, %v798
      %v825 = vadd.f32 %v789, %v798
      %v826 = vadd.f32 %v790, %v798
      %v827 = vadd.f32 %v791, %v798
      %v828 = vadd.f32 %v792, %v798
      %v829 = vadd.f32 %v793, %v798
      %v830 = vadd.f32 %v794, %v798
      %v831 = vpack.c.bf16 %v800, %v799
      %v832 = vpack.c.bf16 %v802, %v801
      %v833 = vpack.c.bf16 %v804, %v803
      %v834 = vpack.c.bf16 %v806, %v805
      %v835 = vpack.c.bf16 %v808, %v807
      %v836 = vpack.c.bf16 %v810, %v809
      %v837 = vpack.c.bf16 %v812, %v811
      %v838 = vpack.c.bf16 %v814, %v813
      %v839 = vpack.c.bf16 %v816, %v815
      %v840 = vpack.c.bf16 %v818, %v817
      %v841 = vpack.c.bf16 %v820, %v819
      %v842 = vpack.c.bf16 %v822, %v821
      %v843 = vpack.c.bf16 %v824, %v823
      %v844 = vpack.c.bf16 %v826, %v825
      %v845 = vpack.c.bf16 %v828, %v827
      %v846 = vpack.c.bf16 %v830, %v829
      %v847 = vunpack.c.l.bf16 %v831
      %v848 = vunpack.c.h.bf16 %v831
      %v849 = vunpack.c.l.bf16 %v832
      %v850 = vunpack.c.h.bf16 %v832
      %v851 = vunpack.c.l.bf16 %v833
      %v852 = vunpack.c.h.bf16 %v833
      %v853 = vunpack.c.l.bf16 %v834
      %v854 = vunpack.c.h.bf16 %v834
      %v855 = vunpack.c.l.bf16 %v835
      %v856 = vunpack.c.h.bf16 %v835
      %v857 = vunpack.c.l.bf16 %v836
      %v858 = vunpack.c.h.bf16 %v836
      %v859 = vunpack.c.l.bf16 %v837
      %v860 = vunpack.c.h.bf16 %v837
      %v861 = vunpack.c.l.bf16 %v838
      %v862 = vunpack.c.h.bf16 %v838
      %v863 = vunpack.c.l.bf16 %v839
      %v864 = vunpack.c.h.bf16 %v839
      %v865 = vunpack.c.l.bf16 %v840
      %v866 = vunpack.c.h.bf16 %v840
      %v867 = vunpack.c.l.bf16 %v841
      %v868 = vunpack.c.h.bf16 %v841
      %v869 = vunpack.c.l.bf16 %v842
      %v870 = vunpack.c.h.bf16 %v842
      %v871 = vunpack.c.l.bf16 %v843
      %v872 = vunpack.c.h.bf16 %v843
      %v873 = vunpack.c.l.bf16 %v844
      %v874 = vunpack.c.h.bf16 %v844
      %v875 = vunpack.c.l.bf16 %v845
      %v876 = vunpack.c.h.bf16 %v845
      %v877 = vunpack.c.l.bf16 %v846
      %v878 = vunpack.c.h.bf16 %v846
      %v879 = vmax.f32 %v847, 0.0
      %v880 = vmax.f32 %v848, 0.0
      %v881 = vmax.f32 %v849, 0.0
      %v882 = vmax.f32 %v850, 0.0
      %v883 = vmax.f32 %v851, 0.0
      %v884 = vmax.f32 %v852, 0.0
      %v885 = vmax.f32 %v853, 0.0
      %v886 = vmax.f32 %v854, 0.0
      %v887 = vmax.f32 %v855, 0.0
      %v888 = vmax.f32 %v856, 0.0
      %v889 = vmax.f32 %v857, 0.0
      %v890 = vmax.f32 %v858, 0.0
      %v891 = vmax.f32 %v859, 0.0
      %v892 = vmax.f32 %v860, 0.0
      %v893 = vmax.f32 %v861, 0.0
      %v894 = vmax.f32 %v862, 0.0
      %v895 = vmax.f32 %v863, 0.0
      %v896 = vmax.f32 %v864, 0.0
      %v897 = vmax.f32 %v865, 0.0
      %v898 = vmax.f32 %v866, 0.0
      %v899 = vmax.f32 %v867, 0.0
      %v900 = vmax.f32 %v868, 0.0
      %v901 = vmax.f32 %v869, 0.0
      %v902 = vmax.f32 %v870, 0.0
      %v903 = vmax.f32 %v871, 0.0
      %v904 = vmax.f32 %v872, 0.0
      %v905 = vmax.f32 %v873, 0.0
      %v906 = vmax.f32 %v874, 0.0
      %v907 = vmax.f32 %v875, 0.0
      %v908 = vmax.f32 %v876, 0.0
      %v909 = vmax.f32 %v877, 0.0
      %v910 = vmax.f32 %v878, 0.0
      %v911 = vpack.c.bf16 %v880, %v879
      %v912 = vpack.c.bf16 %v882, %v881
      %v913 = vpack.c.bf16 %v884, %v883
      %v914 = vpack.c.bf16 %v886, %v885
      %v915 = vpack.c.bf16 %v888, %v887
      %v916 = vpack.c.bf16 %v890, %v889
      %v917 = vpack.c.bf16 %v892, %v891
      %v918 = vpack.c.bf16 %v894, %v893
      %v919 = vpack.c.bf16 %v896, %v895
      %v920 = vpack.c.bf16 %v898, %v897
      %v921 = vpack.c.bf16 %v900, %v899
      %v922 = vpack.c.bf16 %v902, %v901
      %v923 = vpack.c.bf16 %v904, %v903
      %v924 = vpack.c.bf16 %v906, %v905
      %v925 = vpack.c.bf16 %v908, %v907
      %v926 = vpack.c.bf16 %v910, %v909
      %v927 = vunpack.c.l.bf16 %v911
      %v928 = vunpack.c.l.bf16 %v915
      %v929 = vunpack.c.l.bf16 %v919
      %v930 = vunpack.c.l.bf16 %v923
      %v935 = vrot.slane %v911, 4
      %v936 = vrot.slane %v915, 4
      %v937 = vrot.slane %v919, 4
      %v938 = vrot.slane %v923, 4
      %v943 = vunpack.c.l.bf16 %v935
      %v944 = vunpack.c.l.bf16 %v936
      %v945 = vunpack.c.l.bf16 %v937
      %v946 = vunpack.c.l.bf16 %v938
      %v947 = vmax.f32 %v927, %v943
      %v948 = vmax.f32 %v928, %v944
      %v949 = vmax.f32 %v929, %v945
      %v950 = vmax.f32 %v930, %v946
      %v951 = vpack.c.bf16 %v947, %v947
      %v952 = vpack.c.bf16 %v948, %v948
      %v953 = vpack.c.bf16 %v949, %v949
      %v954 = vpack.c.bf16 %v950, %v950
      %v955 = vunpack.c.l.bf16 %v951
      %v956 = vunpack.c.l.bf16 %v952
      %v957 = vunpack.c.l.bf16 %v953
      %v958 = vunpack.c.l.bf16 %v954
      %v959 = vunpack.c.l.bf16 %v912
      %v960 = vunpack.c.l.bf16 %v916
      %v961 = vunpack.c.l.bf16 %v920
      %v962 = vunpack.c.l.bf16 %v924
      %v963 = vmax.f32 %v955, %v959
      %v964 = vmax.f32 %v956, %v960
      %v965 = vmax.f32 %v957, %v961
      %v966 = vmax.f32 %v958, %v962
      %v967 = vpack.c.bf16 %v963, %v963
      %v968 = vpack.c.bf16 %v964, %v964
      %v969 = vpack.c.bf16 %v965, %v965
      %v970 = vpack.c.bf16 %v966, %v966
      %v971 = vunpack.c.l.bf16 %v967
      %v972 = vunpack.c.l.bf16 %v968
      %v973 = vunpack.c.l.bf16 %v969
      %v974 = vunpack.c.l.bf16 %v970
      %v979 = vrot.slane %v912, 4
      %v980 = vrot.slane %v916, 4
      %v981 = vrot.slane %v920, 4
      %v982 = vrot.slane %v924, 4
      %v987 = vunpack.c.l.bf16 %v979
      %v988 = vunpack.c.l.bf16 %v980
      %v989 = vunpack.c.l.bf16 %v981
      %v990 = vunpack.c.l.bf16 %v982
      %v991 = vmax.f32 %v971, %v987
      %v992 = vmax.f32 %v972, %v988
      %v993 = vmax.f32 %v973, %v989
      %v994 = vmax.f32 %v974, %v990
      %v995 = vpack.c.bf16 %v991, %v991
      %v996 = vpack.c.bf16 %v992, %v992
      %v997 = vpack.c.bf16 %v993, %v993
      %v998 = vpack.c.bf16 %v994, %v994
      %v999 = vunpack.c.l.bf16 %v995
      %v1000 = vunpack.c.l.bf16 %v996
      %v1001 = vunpack.c.l.bf16 %v997
      %v1002 = vunpack.c.l.bf16 %v998
      %v1003 = vunpack.c.l.bf16 %v913
      %v1004 = vunpack.c.l.bf16 %v917
      %v1005 = vunpack.c.l.bf16 %v921
      %v1006 = vunpack.c.l.bf16 %v925
      %v1007 = vmax.f32 %v999, %v1003
      %v1008 = vmax.f32 %v1000, %v1004
      %v1009 = vmax.f32 %v1001, %v1005
      %v1010 = vmax.f32 %v1002, %v1006
      %v1011 = vpack.c.bf16 %v1007, %v1007
      %v1012 = vpack.c.bf16 %v1008, %v1008
      %v1013 = vpack.c.bf16 %v1009, %v1009
      %v1014 = vpack.c.bf16 %v1010, %v1010
      %v1015 = vunpack.c.l.bf16 %v1011
      %v1016 = vunpack.c.l.bf16 %v1012
      %v1017 = vunpack.c.l.bf16 %v1013
      %v1018 = vunpack.c.l.bf16 %v1014
      %v1023 = vrot.slane %v913, 4
      %v1024 = vrot.slane %v917, 4
      %v1025 = vrot.slane %v921, 4
      %v1026 = vrot.slane %v925, 4
      %v1031 = vunpack.c.l.bf16 %v1023
      %v1032 = vunpack.c.l.bf16 %v1024
      %v1033 = vunpack.c.l.bf16 %v1025
      %v1034 = vunpack.c.l.bf16 %v1026
      %v1035 = vmax.f32 %v1015, %v1031
      %v1036 = vmax.f32 %v1016, %v1032
      %v1037 = vmax.f32 %v1017, %v1033
      %v1038 = vmax.f32 %v1018, %v1034
      %v1039 = vpack.c.bf16 %v1035, %v1035
      %v1040 = vpack.c.bf16 %v1036, %v1036
      %v1041 = vpack.c.bf16 %v1037, %v1037
      %v1042 = vpack.c.bf16 %v1038, %v1038
      %v1043 = vunpack.c.l.bf16 %v1039
      %v1044 = vunpack.c.l.bf16 %v1040
      %v1045 = vunpack.c.l.bf16 %v1041
      %v1046 = vunpack.c.l.bf16 %v1042
      %v1047 = vunpack.c.l.bf16 %v914
      %v1048 = vunpack.c.l.bf16 %v918
      %v1049 = vunpack.c.l.bf16 %v922
      %v1050 = vunpack.c.l.bf16 %v926
      %v1051 = vmax.f32 %v1043, %v1047
      %v1052 = vmax.f32 %v1044, %v1048
      %v1053 = vmax.f32 %v1045, %v1049
      %v1054 = vmax.f32 %v1046, %v1050
      %v1055 = vpack.c.bf16 %v1051, %v1051
      %v1056 = vpack.c.bf16 %v1052, %v1052
      %v1057 = vpack.c.bf16 %v1053, %v1053
      %v1058 = vpack.c.bf16 %v1054, %v1054
      %v1059 = vunpack.c.l.bf16 %v1055
      %v1060 = vunpack.c.l.bf16 %v1056
      %v1061 = vunpack.c.l.bf16 %v1057
      %v1062 = vunpack.c.l.bf16 %v1058
      %v1067 = vrot.slane %v914, 4
      %v1068 = vrot.slane %v918, 4
      %v1069 = vrot.slane %v922, 4
      %v1070 = vrot.slane %v926, 4
      %v1075 = vunpack.c.l.bf16 %v1067
      %v1076 = vunpack.c.l.bf16 %v1068
      %v1077 = vunpack.c.l.bf16 %v1069
      %v1078 = vunpack.c.l.bf16 %v1070
      %v1079 = vmax.f32 %v1059, %v1075
      %v1080 = vmax.f32 %v1060, %v1076
      %v1081 = vmax.f32 %v1061, %v1077
      %v1082 = vmax.f32 %v1062, %v1078
      %v1083 = vpack.c.bf16 %v1079, %v1079
      %v1084 = vpack.c.bf16 %v1080, %v1080
      %v1085 = vpack.c.bf16 %v1081, %v1081
      %v1086 = vpack.c.bf16 %v1082, %v1082
      %p1087 = scmp.eq.s32.totalorder %s21, 0
      // Predicated region
      $region41: #{pointnet_sa_msg_forward.6} parent=39 // pred_check
        %p1088 = pneg %p1087
      $region42: #{pointnet_sa_msg_forward.6} parent=39 // pred_check_branch
        %1090 = sbr.rel (%p1088) target = $region44
      $region43: #{pointnet_sa_msg_forward.6} parent=39 // pred_region
        %v1091 = vunpack.c.l.bf16 %v1083
        %v1092 = vunpack.c.l.bf16 %v1084
        %v1093 = vunpack.c.l.bf16 %v1085
        %v1094 = vunpack.c.l.bf16 %v1086
        %1095 = vst [vmem:[%s252] sm:$0xff] %v1091
        %1096 = vst [vmem:[%s252 + $0x8] sm:$0xff] %v1092
        %1097 = vst [vmem:[%s252 + $0x10] sm:$0xff] %v1093
        %1098 = vst [vmem:[%s252 + $0x18] sm:$0xff] %v1094
      $region44: #{pointnet_sa_msg_forward.6} parent=39 // pred_fallthru
        _
      %p1099 = scmp.gt.s32.totalorder %s21, 0
      // Predicated region
      $region45: #{pointnet_sa_msg_forward.6} parent=39 // pred_check
        %p1100 = pneg %p1099
      $region46: #{pointnet_sa_msg_forward.6} parent=39 // pred_check_branch
        %1102 = sbr.rel (%p1100) target = $region48
      $region47: #{pointnet_sa_msg_forward.6} parent=39 // pred_region
        %v1103 = vld [vmem:[%s252] sm:$0xff]
        %v1104 = vld [vmem:[%s252 + $0x8] sm:$0xff]
        %v1105 = vld [vmem:[%s252 + $0x10] sm:$0xff]
        %v1106 = vld [vmem:[%s252 + $0x18] sm:$0xff]
        %v1107 = vunpack.c.l.bf16 %v1083
        %v1108 = vunpack.c.l.bf16 %v1084
        %v1109 = vunpack.c.l.bf16 %v1085
        %v1110 = vunpack.c.l.bf16 %v1086
        %v1111 = vmax.f32 %v1103, %v1107
        %v1112 = vmax.f32 %v1104, %v1108
        %v1113 = vmax.f32 %v1105, %v1109
        %v1114 = vmax.f32 %v1106, %v1110
        %1115 = vst [vmem:[%s252] sm:$0xff] %v1111
        %1116 = vst [vmem:[%s252 + $0x8] sm:$0xff] %v1112
        %1117 = vst [vmem:[%s252 + $0x10] sm:$0xff] %v1113
        %1118 = vst [vmem:[%s252 + $0x18] sm:$0xff] %v1114
      $region48: #{pointnet_sa_msg_forward.6} parent=39 // pred_fallthru
        _
      %p1119 = scmp.lt.s32.totalorder %s20, 1
      %s1120 = scalar_select %p1119, %s20, 1
      %s1121 = smul.addr %s1120, 4
      %s1122 = smul.addr %s1121, 8
      %s1123 = scalar_lea.vmem %s5, %s1122
      // Predicated region
      $region49: #{pointnet_sa_msg_forward.6} parent=39 // pred_check
        %p1124 = pneg %p158
      $region50: #{pointnet_sa_msg_forward.6} parent=39 // pred_check_branch
        %1126 = sbr.rel (%p1124) target = $region52
      $region51: #{pointnet_sa_msg_forward.6} parent=39 // pred_region
        _
      $region52: #{pointnet_sa_msg_forward.6} parent=39 // pred_fallthru
        _
    $region40: #{pointnet_sa_msg_forward.6} parent=5 // pred_fallthru
      _
    %p1127 = scmp.le.s32.totalorder 2, %s11
    // Predicated region
    $region53: #{pointnet_sa_msg_forward.6} parent=5 // pred_check
      %p1128 = pneg %p1127
    $region54: #{pointnet_sa_msg_forward.6} parent=5 // pred_check_branch
      %1130 = sbr.rel (%p1128) target = $region56
    $region55: #{pointnet_sa_msg_forward.6} parent=5 // pred_region
      %s1131 = ssub.s32 %s11, 2
      // Predicated region
      $region57: #{pointnet_sa_msg_forward.6} parent=55 // pred_check
        %p1132 = pneg %p164
      $region58: #{pointnet_sa_msg_forward.6} parent=55 // pred_check_branch
        %1134 = sbr.rel (%p1132) target = $region60
      $region59: #{pointnet_sa_msg_forward.6} parent=55 // pred_region
        %p1135 = scmp.lt.s32.totalorder %s22, 1
        %s1136 = scalar_select %p1135, %s22, 1
        %s1137 = smul.addr %s1136, 4
        %s1138 = smul.addr %s1137, 8
        %s1139 = scalar_lea.vmem %s5, %s1138
      $region60: #{pointnet_sa_msg_forward.6} parent=55 // pred_fallthru
        _
    $region56: #{pointnet_sa_msg_forward.6} parent=5 // pred_fallthru
      _
  $region6: #{pointnet_sa_msg_forward.6} parent=0 // loop_footer
    %s15 = sadd.s32 1, %s11
  $region7: #{pointnet_sa_msg_forward.6} parent=0 // loop_footer_branch
    %10 = sbr.rel target = $region3
  $region8: #{pointnet_sa_msg_forward.6} parent=0 // loop_exit
    _

// kernel: pointnet_sa_msg_forward.7
$region0: #{pointnet_sa_msg_forward.7}
  #allocation0 [shape = 'u32[]', space=smem, size = 0x4, offset = 0x4, fixed_abs, tag = 'smem constant byte address 0x4 - core index']
  #allocation1 [shape = 'u32[72,128]{1,0:T(1,128)}', space=vmem, size = 0x9000, scoped, tag = 'internal scratch']
  %s0 = inlined_call_operand.vmem [shape: bf16[2,16,2048], index: 0, kind: input, shape index: {}]
  %s1 = inlined_call_operand.vmem [shape: bf16[32,16], index: 1, kind: input, shape index: {}]
  %s2 = inlined_call_operand.vmem [shape: bf16[32,1], index: 2, kind: input, shape index: {}]
  %s3 = inlined_call_operand.vmem [shape: bf16[64,32], index: 3, kind: input, shape index: {}]
  %s4 = inlined_call_operand.vmem [shape: bf16[64,1], index: 4, kind: input, shape index: {}]
  %s5 = inlined_call_operand.vmem [shape: f32[2,64,128], index: 5, kind: output, shape index: {}]
  %s6 = sld [smem:[#allocation0]]
  $region61: #{pointnet_sa_msg_forward.7} parent=0
    _
  %s8 = ssub.s32 1, %s6
  %s9 = scalar_select 0, %s8, %s6
  loop: start=0, step=1, limit=4
  $region2: #{pointnet_sa_msg_forward.7} parent=0 // loop_pre_header
    _
  $region3: #{pointnet_sa_msg_forward.7} parent=0 // loop_header
    %s11 = sphi 0, %s15
    %p12 = scmp.ge.s32.totalorder %s11, 4
    %s18 = sphi 0, %s30
    %s19 = sphi 0, %s26
    %s20 = sphi 0, %s18
    %s21 = sphi 0, %s19
    %s22 = sphi 0, %s20
    %s23 = sphi 0, %s21
    %s35 = sphi 0, %s37
    %s38 = sphi 0, %s35
    %s39 = sphi 0, %s38
    %s55 = sphi 0, %s39
    %s59 = sphi 0, %s59
    %s61 = sphi 0, %s59
    %s62 = sphi 0, %s61
    %s76 = sphi 0, %s62
    %s80 = sphi 0, %s80
    %s82 = sphi 0, %s80
    %s83 = sphi 0, %s82
    %s97 = sphi 0, %s83
    %s101 = sphi 0, %s101
    %s103 = sphi 0, %s101
    %s104 = sphi 0, %s103
    %s118 = sphi 0, %s104
    %s122 = sphi 0, %s122
    %s124 = sphi 0, %s122
    %s125 = sphi 0, %s124
    %s139 = sphi 0, %s125
    %s145 = sphi 0, %s147
    %s148 = sphi 0, %s145
    %s149 = sphi 0, %s148
    %s165 = sphi 0, %s149
  $region4: #{pointnet_sa_msg_forward.7} parent=0 // loop_header_branch
    %14 = sbr.rel (%p12) target = $region8
  $region5: #{pointnet_sa_msg_forward.7} parent=0 // loop_body
    %s16 = ssub.s32 %s11, 1
    %s17 = ssub.s32 %s11, 2
    %s24 = sadd.s32 1, %s19
    %p25 = scmp.ge.s32.totalorder %s24, 1
    %s26 = scalar_select %p25, 0, %s24
    %s27 = sadd.s32 1, %s18
    %s28 = scalar_select %p25, %s27, %s18
    %p29 = scmp.ge.s32.totalorder %s28, 2
    %s30 = scalar_select %p29, 0, %s28
    %s31 = ssub.s32 %s18, %s30
    %s32 = ssub.s32 %s19, %s26
    %s33 = sor.u32 %s31, %s32
    %p34 = scmp.eq.s32.totalorder %s33, 0
    %s36 = sadd.s32 %s35, 1
    %s37 = scalar_select %p34, %s35, %s36
    %p40 = pneg %p34
    %p41 = scmp.eq.s32.totalorder %s11, 1
    %p42 = por %p40, %p41
    %p43 = scmp.ne.s32.totalorder %s35, %s38
    %p44 = scmp.eq.s32.totalorder %s11, 0
    %p45 = por %p43, %p44
    %p46 = scmp.ne.s32.totalorder %s35, %s38
    %p47 = scmp.eq.s32.totalorder %s16, 1
    %p48 = por %p46, %p47
    %p49 = scmp.ne.s32.totalorder %s38, %s39
    %p50 = scmp.eq.s32.totalorder %s16, 0
    %p51 = por %p49, %p50
    %p52 = scmp.ne.s32.totalorder %s38, %s39
    %p53 = scmp.eq.s32.totalorder %s17, 1
    %p54 = por %p52, %p53
    %p56 = scmp.ne.s32.totalorder %s39, %s55
    %p57 = scmp.eq.s32.totalorder %s17, 0
    %p58 = por %p56, %p57
    %s60 = sadd.s32 %s59, 1
    %p63 = scmp.eq.s32.totalorder %s11, 1
    %p64 = scmp.ne.s32.totalorder %s59, %s61
    %p65 = scmp.eq.s32.totalorder %s11, 0
    %p66 = por %p64, %p65
    %p67 = scmp.ne.s32.totalorder %s59, %s61
    %p68 = scmp.eq.s32.totalorder %s16, 1
    %p69 = por %p67, %p68
    %p70 = scmp.ne.s32.totalorder %s61, %s62
    %p71 = scmp.eq.s32.totalorder %s16, 0
    %p72 = por %p70, %p71
    %p73 = scmp.ne.s32.totalorder %s61, %s62
    %p74 = scmp.eq.s32.totalorder %s17, 1
    %p75 = por %p73, %p74
    %p77 = scmp.ne.s32.totalorder %s62, %s76
    %p78 = scmp.eq.s32.totalorder %s17, 0
    %p79 = por %p77, %p78
    %s81 = sadd.s32 %s80, 1
    %p84 = scmp.eq.s32.totalorder %s11, 1
    %p85 = scmp.ne.s32.totalorder %s80, %s82
    %p86 = scmp.eq.s32.totalorder %s11, 0
    %p87 = por %p85, %p86
    %p88 = scmp.ne.s32.totalorder %s80, %s82
    %p89 = scmp.eq.s32.totalorder %s16, 1
    %p90 = por %p88, %p89
    %p91 = scmp.ne.s32.totalorder %s82, %s83
    %p92 = scmp.eq.s32.totalorder %s16, 0
    %p93 = por %p91, %p92
    %p94 = scmp.ne.s32.totalorder %s82, %s83
    %p95 = scmp.eq.s32.totalorder %s17, 1
    %p96 = por %p94, %p95
    %p98 = scmp.ne.s32.totalorder %s83, %s97
    %p99 = scmp.eq.s32.totalorder %s17, 0
    %p100 = por %p98, %p99
    %s102 = sadd.s32 %s101, 1
    %p105 = scmp.eq.s32.totalorder %s11, 1
    %p106 = scmp.ne.s32.totalorder %s101, %s103
    %p107 = scmp.eq.s32.totalorder %s11, 0
    %p108 = por %p106, %p107
    %p109 = scmp.ne.s32.totalorder %s101, %s103
    %p110 = scmp.eq.s32.totalorder %s16, 1
    %p111 = por %p109, %p110
    %p112 = scmp.ne.s32.totalorder %s103, %s104
    %p113 = scmp.eq.s32.totalorder %s16, 0
    %p114 = por %p112, %p113
    %p115 = scmp.ne.s32.totalorder %s103, %s104
    %p116 = scmp.eq.s32.totalorder %s17, 1
    %p117 = por %p115, %p116
    %p119 = scmp.ne.s32.totalorder %s104, %s118
    %p120 = scmp.eq.s32.totalorder %s17, 0
    %p121 = por %p119, %p120
    %s123 = sadd.s32 %s122, 1
    %p126 = scmp.eq.s32.totalorder %s11, 1
    %p127 = scmp.ne.s32.totalorder %s122, %s124
    %p128 = scmp.eq.s32.totalorder %s11, 0
    %p129 = por %p127, %p128
    %p130 = scmp.ne.s32.totalorder %s122, %s124
    %p131 = scmp.eq.s32.totalorder %s16, 1
    %p132 = por %p130, %p131
    %p133 = scmp.ne.s32.totalorder %s124, %s125
    %p134 = scmp.eq.s32.totalorder %s16, 0
    %p135 = por %p133, %p134
    %p136 = scmp.ne.s32.totalorder %s124, %s125
    %p137 = scmp.eq.s32.totalorder %s17, 1
    %p138 = por %p136, %p137
    %p140 = scmp.ne.s32.totalorder %s125, %s139
    %p141 = scmp.eq.s32.totalorder %s17, 0
    %p142 = por %p140, %p141
    %s143 = ssub.s32 %s18, %s30
    %p144 = scmp.eq.s32.totalorder %s143, 0
    %s146 = sadd.s32 %s145, 1
    %s147 = scalar_select %p144, %s145, %s146
    %p150 = pneg %p144
    %p151 = scmp.eq.s32.totalorder %s11, 1
    %p152 = por %p150, %p151
    %p153 = scmp.ne.s32.totalorder %s145, %s148
    %p154 = scmp.eq.s32.totalorder %s11, 0
    %p155 = por %p153, %p154
    %p156 = scmp.ne.s32.totalorder %s145, %s148
    %p157 = scmp.eq.s32.totalorder %s16, 1
    %p158 = por %p156, %p157
    %p159 = scmp.ne.s32.totalorder %s148, %s149
    %p160 = scmp.eq.s32.totalorder %s16, 0
    %p161 = por %p159, %p160
    %p162 = scmp.ne.s32.totalorder %s148, %s149
    %p163 = scmp.eq.s32.totalorder %s17, 1
    %p164 = por %p162, %p163
    %p166 = scmp.ne.s32.totalorder %s149, %s165
    %p167 = scmp.eq.s32.totalorder %s17, 0
    %p168 = por %p166, %p167
    %p169 = scmp.le.s32.totalorder 1, %s11
    %p170 = scmp.lt.s32.totalorder %s11, 3
    %p171 = pnand %p169, %p170
    %p172 = pneg %p171
    // Predicated region
    $region9: #{pointnet_sa_msg_forward.7} parent=5 // pred_check
      _
    $region10: #{pointnet_sa_msg_forward.7} parent=5 // pred_check_branch
      %174 = sbr.rel (%p171) target = $region12
    $region11: #{pointnet_sa_msg_forward.7} parent=5 // pred_region
      %s175 = ssub.s32 %s11, 1
      // Predicated region
      $region13: #{pointnet_sa_msg_forward.7} parent=11 // pred_check
        %p176 = pneg %p72
      $region14: #{pointnet_sa_msg_forward.7} parent=11 // pred_check_branch
        %178 = sbr.rel (%p176) target = $region16
      $region15: #{pointnet_sa_msg_forward.7} parent=11 // pred_region
        _
      $region16: #{pointnet_sa_msg_forward.7} parent=11 // pred_fallthru
        _
      // Predicated region
      $region17: #{pointnet_sa_msg_forward.7} parent=11 // pred_check
        %p179 = pneg %p93
      $region18: #{pointnet_sa_msg_forward.7} parent=11 // pred_check_branch
        %181 = sbr.rel (%p179) target = $region20
      $region19: #{pointnet_sa_msg_forward.7} parent=11 // pred_region
        _
      $region20: #{pointnet_sa_msg_forward.7} parent=11 // pred_fallthru
        _
      // Predicated region
      $region21: #{pointnet_sa_msg_forward.7} parent=11 // pred_check
        %p182 = pneg %p114
      $region22: #{pointnet_sa_msg_forward.7} parent=11 // pred_check_branch
        %184 = sbr.rel (%p182) target = $region24
      $region23: #{pointnet_sa_msg_forward.7} parent=11 // pred_region
        _
      $region24: #{pointnet_sa_msg_forward.7} parent=11 // pred_fallthru
        _
      // Predicated region
      $region25: #{pointnet_sa_msg_forward.7} parent=11 // pred_check
        %p185 = pneg %p135
      $region26: #{pointnet_sa_msg_forward.7} parent=11 // pred_check_branch
        %187 = sbr.rel (%p185) target = $region28
      $region27: #{pointnet_sa_msg_forward.7} parent=11 // pred_region
        _
      $region28: #{pointnet_sa_msg_forward.7} parent=11 // pred_fallthru
        _
    $region12: #{pointnet_sa_msg_forward.7} parent=5 // pred_fallthru
      _
    %p188 = scmp.lt.s32.totalorder %s11, 2
    // Predicated region
    $region29: #{pointnet_sa_msg_forward.7} parent=5 // pred_check
      %p189 = pneg %p188
    $region30: #{pointnet_sa_msg_forward.7} parent=5 // pred_check_branch
      %191 = sbr.rel (%p189) target = $region32
    $region31: #{pointnet_sa_msg_forward.7} parent=5 // pred_region
      // Predicated region
      $region33: #{pointnet_sa_msg_forward.7} parent=31 // pred_check
        %p192 = pneg %p45
      $region34: #{pointnet_sa_msg_forward.7} parent=31 // pred_check_branch
        %194 = sbr.rel (%p192) target = $region36
      $region35: #{pointnet_sa_msg_forward.7} parent=31 // pred_region
        %s195 = smul.u32 16, %s19
        %p196 = scmp.lt.s32.totalorder %s18, 1
        %s197 = scalar_select %p196, %s18, 1
        %p198 = scmp.lt.s32.totalorder %s195, 15
        %s199 = scalar_select %p198, %s195, 15
        %s200 = smul.addr %s197, 32
        %s201 = sadd.s32 %s199, %s200
        %s202 = smul.addr %s201, 4
        %s203 = scalar_lea.vmem %s0, %s202
        %s204 = smul.u32 16, %s19
      $region36: #{pointnet_sa_msg_forward.7} parent=31 // pred_fallthru
        _
    $region32: #{pointnet_sa_msg_forward.7} parent=5 // pred_fallthru
      _
    %p205 = scmp.le.s32.totalorder 1, %s11
    %p206 = scmp.lt.s32.totalorder %s11, 3
    %p207 = pnand %p205, %p206
    %p208 = pneg %p207
    // Predicated region
    $region37: #{pointnet_sa_msg_forward.7} parent=5 // pred_check
      _
    $region38: #{pointnet_sa_msg_forward.7} parent=5 // pred_check_branch
      %210 = sbr.rel (%p207) target = $region40
    $region39: #{pointnet_sa_msg_forward.7} parent=5 // pred_region
      %s211 = ssub.s32 %s11, 1
      %s212 = smul.u32 16, %s21
      %p213 = scmp.lt.s32.totalorder %s20, 1
      %s214 = scalar_select %p213, %s20, 1
      %p215 = scmp.lt.s32.totalorder %s212, 15
      %s216 = scalar_select %p215, %s212, 15
      %s217 = smul.addr %s214, 32
      %s218 = sadd.s32 %s216, %s217
      %s219 = smul.addr %s218, 4
      %s220 = scalar_lea.vmem %s0, %s219
      %p221 = pneg %p51
      %p222 = pneg %p48
      %p223 = pneg %p72
      %p224 = pneg %p69
      %p225 = pneg %p93
      %p226 = pneg %p90
      %p227 = pneg %p114
      %p228 = pneg %p111
      %p229 = pneg %p135
      %p230 = pneg %p132
      %p231 = pneg %p161
      %p232 = pneg %p158
      %p233 = scmp.lt.s32.totalorder %s20, 1
      %s234 = scalar_select %p233, %s20, 1
      %s235 = smul.addr %s234, 8
      %s236 = smul.addr %s235, 8
      %s237 = scalar_lea.vmem %s5, %s236
      %s238 = smul.u32 16, %s21
      %p239 = scmp.lt.s32.totalorder %s20, 1
      %s240 = scalar_select %p239, %s20, 1
      %p241 = scmp.lt.s32.totalorder %s238, 15
      %s242 = scalar_select %p241, %s238, 15
      %s243 = smul.addr %s240, 32
      %s244 = sadd.s32 %s242, %s243
      %s245 = smul.addr %s244, 4
      %s246 = scalar_lea.vmem %s0, %s245
      %s247 = smul.u32 16, %s21
      %p248 = scmp.lt.s32.totalorder %s20, 1
      %s249 = scalar_select %p248, %s20, 1
      %s250 = smul.addr %s249, 8
      %s251 = smul.addr %s250, 8
      %s252 = scalar_lea.vmem %s5, %s251
      %v254 = vld [vmem:[%s246] sm:$0xff]
      %v255 = vld [vmem:[%s246 + $0x8] sm:$0xff]
      %v256 = vld [vmem:[%s246 + $0x10] sm:$0xff]
      %v257 = vld [vmem:[%s246 + $0x18] sm:$0xff]
      %v258 = vld [vmem:[%s246 + $0x20] sm:$0xff]
      %v259 = vld [vmem:[%s246 + $0x28] sm:$0xff]
      %v260 = vld [vmem:[%s246 + $0x30] sm:$0xff]
      %v261 = vld [vmem:[%s246 + $0x38] sm:$0xff]
      %v262 = vld [vmem:[%s246 + $0x40] sm:$0xff]
      %v263 = vld [vmem:[%s246 + $0x48] sm:$0xff]
      %v264 = vld [vmem:[%s246 + $0x50] sm:$0xff]
      %v265 = vld [vmem:[%s246 + $0x58] sm:$0xff]
      %v266 = vld [vmem:[%s246 + $0x60] sm:$0xff]
      %v267 = vld [vmem:[%s246 + $0x68] sm:$0xff]
      %v268 = vld [vmem:[%s246 + $0x70] sm:$0xff]
      %v269 = vld [vmem:[%s246 + $0x78] sm:$0xff]
      %v270 = vld [vmem:[%s1] sm:$0xf]
      %v271 = vld [vmem:[%s1 + $0x4] sm:$0xf]
      %v272 = vld [vmem:[%s1 + $0x8] sm:$0xf]
      %v273 = vld [vmem:[%s1 + $0xc] sm:$0xf]
      %v274 = vld [vmem:[%s2] sm:$0xf]
      %v275 = vld [vmem:[%s2 + $0x4] sm:$0xf]
      %v276 = vld [vmem:[%s2 + $0x8] sm:$0xf]
      %v277 = vld [vmem:[%s2 + $0xc] sm:$0xf]
      %v282 = vunpack.c.l.b16 %v270
      %v283 = vunpack.c.l.b16 %v271
      %v284 = vunpack.c.l.b16 %v272
      %v285 = vunpack.c.l.b16 %v273
      %v286 = vpack.c.b16 %v283, %v282
      %v287 = vpack.c.b16 %v285, %v284
      %v304 = vunpack.c.l.b16 %v254
      %v305 = vunpack.c.h.b16 %v254
      %v306 = vunpack.c.l.b16 %v255
      %v307 = vunpack.c.h.b16 %v255
      %v308 = vunpack.c.l.b16 %v256
      %v309 = vunpack.c.h.b16 %v256
      %v310 = vunpack.c.l.b16 %v257
      %v311 = vunpack.c.h.b16 %v257
      %v312 = vunpack.c.l.b16 %v258
      %v313 = vunpack.c.h.b16 %v258
      %v314 = vunpack.c.l.b16 %v259
      %v315 = vunpack.c.h.b16 %v259
      %v316 = vunpack.c.l.b16 %v260
      %v317 = vunpack.c.h.b16 %v260
      %v318 = vunpack.c.l.b16 %v261
      %v319 = vunpack.c.h.b16 %v261
      %v320 = vunpack.c.l.b16 %v262
      %v321 = vunpack.c.h.b16 %v262
      %v322 = vunpack.c.l.b16 %v263
      %v323 = vunpack.c.h.b16 %v263
      %v324 = vunpack.c.l.b16 %v264
      %v325 = vunpack.c.h.b16 %v264
      %v326 = vunpack.c.l.b16 %v265
      %v327 = vunpack.c.h.b16 %v265
      %v328 = vunpack.c.l.b16 %v266
      %v329 = vunpack.c.h.b16 %v266
      %v330 = vunpack.c.l.b16 %v267
      %v331 = vunpack.c.h.b16 %v267
      %v332 = vunpack.c.l.b16 %v268
      %v333 = vunpack.c.h.b16 %v268
      %v334 = vunpack.c.l.b16 %v269
      %v335 = vunpack.c.h.b16 %v269
      %v336 = vpack.c.b16 %v320, %v304
      %v337 = vpack.c.b16 %v321, %v305
      %v338 = vpack.c.b16 %v322, %v306
      %v339 = vpack.c.b16 %v323, %v307
      %v340 = vpack.c.b16 %v324, %v308
      %v341 = vpack.c.b16 %v325, %v309
      %v342 = vpack.c.b16 %v326, %v310
      %v343 = vpack.c.b16 %v327, %v311
      %v344 = vpack.c.b16 %v328, %v312
      %v345 = vpack.c.b16 %v329, %v313
      %v346 = vpack.c.b16 %v330, %v314
      %v347 = vpack.c.b16 %v331, %v315
      %v348 = vpack.c.b16 %v332, %v316
      %v349 = vpack.c.b16 %v333, %v317
      %v350 = vpack.c.b16 %v334, %v318
      %v351 = vpack.c.b16 %v335, %v319
      %vm368 = vcmask 130048
      %v370 = vsel %vm368, %v286, 0
      %v373 = vsel %vm368, %v287, 0
      %375 = vmatpush.bf16.msra.mxu0 0
      %376 = vmatpush.bf16.msra.mxu0 0
      %377 = vmatpush.bf16.msra.mxu0 0
      %378 = vmatpush.bf16.msra.mxu0 0
      %379 = vmatpush.bf16.msra.mxu0 0
      %380 = vmatpush.bf16.msra.mxu0 0
      %381 = vmatpush.bf16.msra.mxu0 0
      %382 = vmatpush.bf16.msra.mxu0 %v336
      %383 = vmatmul.bf16.gmra.mxu0 %v370
      %v384 = vpop.f32.mrf.mxu0
      %v385 = vadd.f32 0.0, %v384
      %v386 = vpop.f32.mrf.mxu0
      %v387 = vadd.f32 0.0, %v386
      %388 = vmatmul.bf16.gmra.mxu0 %v373
      %v389 = vpop.f32.mrf.mxu0
      %v390 = vadd.f32 0.0, %v389
      %v391 = vpop.f32.mrf.mxu0
      %v392 = vadd.f32 0.0, %v391
      %393 = vdwg.mxu0
      %394 = vmatpush.bf16.msra.mxu0 0
      %395 = vmatpush.bf16.msra.mxu0 0
      %396 = vmatpush.bf16.msra.mxu0 0
      %397 = vmatpush.bf16.msra.mxu0 0
      %398 = vmatpush.bf16.msra.mxu0 0
      %399 = vmatpush.bf16.msra.mxu0 0
      %400 = vmatpush.bf16.msra.mxu0 0
      %401 = vmatpush.bf16.msra.mxu0 %v337
      %402 = vmatmul.bf16.gmra.mxu0 %v370
      %v403 = vpop.f32.mrf.mxu0
      %v404 = vadd.f32 0.0, %v403
      %v405 = vpop.f32.mrf.mxu0
      %v406 = vadd.f32 0.0, %v405
      %407 = vmatmul.bf16.gmra.mxu0 %v373
      %v408 = vpop.f32.mrf.mxu0
      %v409 = vadd.f32 0.0, %v408
      %v410 = vpop.f32.mrf.mxu0
      %v411 = vadd.f32 0.0, %v410
      %412 = vdwg.mxu0
      %413 = vmatpush.bf16.msra.mxu0 0
      %414 = vmatpush.bf16.msra.mxu0 0
      %415 = vmatpush.bf16.msra.mxu0 0
      %416 = vmatpush.bf16.msra.mxu0 0
      %417 = vmatpush.bf16.msra.mxu0 0
      %418 = vmatpush.bf16.msra.mxu0 0
      %419 = vmatpush.bf16.msra.mxu0 0
      %420 = vmatpush.bf16.msra.mxu0 %v338
      %421 = vmatmul.bf16.gmra.mxu0 %v370
      %v422 = vpop.f32.mrf.mxu0
      %v423 = vadd.f32 0.0, %v422
      %v424 = vpop.f32.mrf.mxu0
      %v425 = vadd.f32 0.0, %v424
      %426 = vmatmul.bf16.gmra.mxu0 %v373
      %v427 = vpop.f32.mrf.mxu0
      %v428 = vadd.f32 0.0, %v427
      %v429 = vpop.f32.mrf.mxu0
      %v430 = vadd.f32 0.0, %v429
      %431 = vdwg.mxu0
      %432 = vmatpush.bf16.msra.mxu0 0
      %433 = vmatpush.bf16.msra.mxu0 0
      %434 = vmatpush.bf16.msra.mxu0 0
      %435 = vmatpush.bf16.msra.mxu0 0
      %436 = vmatpush.bf16.msra.mxu0 0
      %437 = vmatpush.bf16.msra.mxu0 0
      %438 = vmatpush.bf16.msra.mxu0 0
      %439 = vmatpush.bf16.msra.mxu0 %v339
      %440 = vmatmul.bf16.gmra.mxu0 %v370
      %v441 = vpop.f32.mrf.mxu0
      %v442 = vadd.f32 0.0, %v441
      %v443 = vpop.f32.mrf.mxu0
      %v444 = vadd.f32 0.0, %v443
      %445 = vmatmul.bf16.gmra.mxu0 %v373
      %v446 = vpop.f32.mrf.mxu0
      %v447 = vadd.f32 0.0, %v446
      %v448 = vpop.f32.mrf.mxu0
      %v449 = vadd.f32 0.0, %v448
      %450 = vdwg.mxu0
      %451 = vmatpush.bf16.msra.mxu0 0
      %452 = vmatpush.bf16.msra.mxu0 0
      %453 = vmatpush.bf16.msra.mxu0 0
      %454 = vmatpush.bf16.msra.mxu0 0
      %455 = vmatpush.bf16.msra.mxu0 0
      %456 = vmatpush.bf16.msra.mxu0 0
      %457 = vmatpush.bf16.msra.mxu0 0
      %458 = vmatpush.bf16.msra.mxu0 %v340
      %459 = vmatmul.bf16.gmra.mxu0 %v370
      %v460 = vpop.f32.mrf.mxu0
      %v461 = vadd.f32 0.0, %v460
      %v462 = vpop.f32.mrf.mxu0
      %v463 = vadd.f32 0.0, %v462
      %464 = vmatmul.bf16.gmra.mxu0 %v373
      %v465 = vpop.f32.mrf.mxu0
      %v466 = vadd.f32 0.0, %v465
      %v467 = vpop.f32.mrf.mxu0
      %v468 = vadd.f32 0.0, %v467
      %469 = vdwg.mxu0
      %470 = vmatpush.bf16.msra.mxu0 0
      %471 = vmatpush.bf16.msra.mxu0 0
      %472 = vmatpush.bf16.msra.mxu0 0
      %473 = vmatpush.bf16.msra.mxu0 0
      %474 = vmatpush.bf16.msra.mxu0 0
      %475 = vmatpush.bf16.msra.mxu0 0
      %476 = vmatpush.bf16.msra.mxu0 0
      %477 = vmatpush.bf16.msra.mxu0 %v341
      %478 = vmatmul.bf16.gmra.mxu0 %v370
      %v479 = vpop.f32.mrf.mxu0
      %v480 = vadd.f32 0.0, %v479
      %v481 = vpop.f32.mrf.mxu0
      %v482 = vadd.f32 0.0, %v481
      %483 = vmatmul.bf16.gmra.mxu0 %v373
      %v484 = vpop.f32.mrf.mxu0
      %v485 = vadd.f32 0.0, %v484
      %v486 = vpop.f32.mrf.mxu0
      %v487 = vadd.f32 0.0, %v486
      %488 = vdwg.mxu0
      %489 = vmatpush.bf16.msra.mxu0 0
      %490 = vmatpush.bf16.msra.mxu0 0
      %491 = vmatpush.bf16.msra.mxu0 0
      %492 = vmatpush.bf16.msra.mxu0 0
      %493 = vmatpush.bf16.msra.mxu0 0
      %494 = vmatpush.bf16.msra.mxu0 0
      %495 = vmatpush.bf16.msra.mxu0 0
      %496 = vmatpush.bf16.msra.mxu0 %v342
      %497 = vmatmul.bf16.gmra.mxu0 %v370
      %v498 = vpop.f32.mrf.mxu0
      %v499 = vadd.f32 0.0, %v498
      %v500 = vpop.f32.mrf.mxu0
      %v501 = vadd.f32 0.0, %v500
      %502 = vmatmul.bf16.gmra.mxu0 %v373
      %v503 = vpop.f32.mrf.mxu0
      %v504 = vadd.f32 0.0, %v503
      %v505 = vpop.f32.mrf.mxu0
      %v506 = vadd.f32 0.0, %v505
      %507 = vdwg.mxu0
      %508 = vmatpush.bf16.msra.mxu0 0
      %509 = vmatpush.bf16.msra.mxu0 0
      %510 = vmatpush.bf16.msra.mxu0 0
      %511 = vmatpush.bf16.msra.mxu0 0
      %512 = vmatpush.bf16.msra.mxu0 0
      %513 = vmatpush.bf16.msra.mxu0 0
      %514 = vmatpush.bf16.msra.mxu0 0
      %515 = vmatpush.bf16.msra.mxu0 %v343
      %516 = vmatmul.bf16.gmra.mxu0 %v370
      %v517 = vpop.f32.mrf.mxu0
      %v518 = vadd.f32 0.0, %v517
      %v519 = vpop.f32.mrf.mxu0
      %v520 = vadd.f32 0.0, %v519
      %521 = vmatmul.bf16.gmra.mxu0 %v373
      %v522 = vpop.f32.mrf.mxu0
      %v523 = vadd.f32 0.0, %v522
      %v524 = vpop.f32.mrf.mxu0
      %v525 = vadd.f32 0.0, %v524
      %526 = vdwg.mxu0
      %527 = vmatpush.bf16.msra.mxu0 0
      %528 = vmatpush.bf16.msra.mxu0 0
      %529 = vmatpush.bf16.msra.mxu0 0
      %530 = vmatpush.bf16.msra.mxu0 0
      %531 = vmatpush.bf16.msra.mxu0 0
      %532 = vmatpush.bf16.msra.mxu0 0
      %533 = vmatpush.bf16.msra.mxu0 0
      %534 = vmatpush.bf16.msra.mxu0 %v344
      %535 = vmatmul.bf16.gmra.mxu0 %v370
      %v536 = vpop.f32.mrf.mxu0
      %v537 = vadd.f32 0.0, %v536
      %v538 = vpop.f32.mrf.mxu0
      %v539 = vadd.f32 0.0, %v538
      %540 = vmatmul.bf16.gmra.mxu0 %v373
      %v541 = vpop.f32.mrf.mxu0
      %v542 = vadd.f32 0.0, %v541
      %v543 = vpop.f32.mrf.mxu0
      %v544 = vadd.f32 0.0, %v543
      %545 = vdwg.mxu0
      %546 = vmatpush.bf16.msra.mxu0 0
      %547 = vmatpush.bf16.msra.mxu0 0
      %548 = vmatpush.bf16.msra.mxu0 0
      %549 = vmatpush.bf16.msra.mxu0 0
      %550 = vmatpush.bf16.msra.mxu0 0
      %551 = vmatpush.bf16.msra.mxu0 0
      %552 = vmatpush.bf16.msra.mxu0 0
      %553 = vmatpush.bf16.msra.mxu0 %v345
      %554 = vmatmul.bf16.gmra.mxu0 %v370
      %v555 = vpop.f32.mrf.mxu0
      %v556 = vadd.f32 0.0, %v555
      %v557 = vpop.f32.mrf.mxu0
      %v558 = vadd.f32 0.0, %v557
      %559 = vmatmul.bf16.gmra.mxu0 %v373
      %v560 = vpop.f32.mrf.mxu0
      %v561 = vadd.f32 0.0, %v560
      %v562 = vpop.f32.mrf.mxu0
      %v563 = vadd.f32 0.0, %v562
      %564 = vdwg.mxu0
      %565 = vmatpush.bf16.msra.mxu0 0
      %566 = vmatpush.bf16.msra.mxu0 0
      %567 = vmatpush.bf16.msra.mxu0 0
      %568 = vmatpush.bf16.msra.mxu0 0
      %569 = vmatpush.bf16.msra.mxu0 0
      %570 = vmatpush.bf16.msra.mxu0 0
      %571 = vmatpush.bf16.msra.mxu0 0
      %572 = vmatpush.bf16.msra.mxu0 %v346
      %573 = vmatmul.bf16.gmra.mxu0 %v370
      %v574 = vpop.f32.mrf.mxu0
      %v575 = vadd.f32 0.0, %v574
      %v576 = vpop.f32.mrf.mxu0
      %v577 = vadd.f32 0.0, %v576
      %578 = vmatmul.bf16.gmra.mxu0 %v373
      %v579 = vpop.f32.mrf.mxu0
      %v580 = vadd.f32 0.0, %v579
      %v581 = vpop.f32.mrf.mxu0
      %v582 = vadd.f32 0.0, %v581
      %583 = vdwg.mxu0
      %584 = vmatpush.bf16.msra.mxu0 0
      %585 = vmatpush.bf16.msra.mxu0 0
      %586 = vmatpush.bf16.msra.mxu0 0
      %587 = vmatpush.bf16.msra.mxu0 0
      %588 = vmatpush.bf16.msra.mxu0 0
      %589 = vmatpush.bf16.msra.mxu0 0
      %590 = vmatpush.bf16.msra.mxu0 0
      %591 = vmatpush.bf16.msra.mxu0 %v347
      %592 = vmatmul.bf16.gmra.mxu0 %v370
      %v593 = vpop.f32.mrf.mxu0
      %v594 = vadd.f32 0.0, %v593
      %v595 = vpop.f32.mrf.mxu0
      %v596 = vadd.f32 0.0, %v595
      %597 = vmatmul.bf16.gmra.mxu0 %v373
      %v598 = vpop.f32.mrf.mxu0
      %v599 = vadd.f32 0.0, %v598
      %v600 = vpop.f32.mrf.mxu0
      %v601 = vadd.f32 0.0, %v600
      %602 = vdwg.mxu0
      %603 = vmatpush.bf16.msra.mxu0 0
      %604 = vmatpush.bf16.msra.mxu0 0
      %605 = vmatpush.bf16.msra.mxu0 0
      %606 = vmatpush.bf16.msra.mxu0 0
      %607 = vmatpush.bf16.msra.mxu0 0
      %608 = vmatpush.bf16.msra.mxu0 0
      %609 = vmatpush.bf16.msra.mxu0 0
      %610 = vmatpush.bf16.msra.mxu0 %v348
      %611 = vmatmul.bf16.gmra.mxu0 %v370
      %v612 = vpop.f32.mrf.mxu0
      %v613 = vadd.f32 0.0, %v612
      %v614 = vpop.f32.mrf.mxu0
      %v615 = vadd.f32 0.0, %v614
      %616 = vmatmul.bf16.gmra.mxu0 %v373
      %v617 = vpop.f32.mrf.mxu0
      %v618 = vadd.f32 0.0, %v617
      %v619 = vpop.f32.mrf.mxu0
      %v620 = vadd.f32 0.0, %v619
      %621 = vdwg.mxu0
      %622 = vmatpush.bf16.msra.mxu0 0
      %623 = vmatpush.bf16.msra.mxu0 0
      %624 = vmatpush.bf16.msra.mxu0 0
      %625 = vmatpush.bf16.msra.mxu0 0
      %626 = vmatpush.bf16.msra.mxu0 0
      %627 = vmatpush.bf16.msra.mxu0 0
      %628 = vmatpush.bf16.msra.mxu0 0
      %629 = vmatpush.bf16.msra.mxu0 %v349
      %630 = vmatmul.bf16.gmra.mxu0 %v370
      %v631 = vpop.f32.mrf.mxu0
      %v632 = vadd.f32 0.0, %v631
      %v633 = vpop.f32.mrf.mxu0
      %v634 = vadd.f32 0.0, %v633
      %635 = vmatmul.bf16.gmra.mxu0 %v373
      %v636 = vpop.f32.mrf.mxu0
      %v637 = vadd.f32 0.0, %v636
      %v638 = vpop.f32.mrf.mxu0
      %v639 = vadd.f32 0.0, %v638
      %640 = vdwg.mxu0
      %641 = vmatpush.bf16.msra.mxu0 0
      %642 = vmatpush.bf16.msra.mxu0 0
      %643 = vmatpush.bf16.msra.mxu0 0
      %644 = vmatpush.bf16.msra.mxu0 0
      %645 = vmatpush.bf16.msra.mxu0 0
      %646 = vmatpush.bf16.msra.mxu0 0
      %647 = vmatpush.bf16.msra.mxu0 0
      %648 = vmatpush.bf16.msra.mxu0 %v350
      %649 = vmatmul.bf16.gmra.mxu0 %v370
      %v650 = vpop.f32.mrf.mxu0
      %v651 = vadd.f32 0.0, %v650
      %v652 = vpop.f32.mrf.mxu0
      %v653 = vadd.f32 0.0, %v652
      %654 = vmatmul.bf16.gmra.mxu0 %v373
      %v655 = vpop.f32.mrf.mxu0
      %v656 = vadd.f32 0.0, %v655
      %v657 = vpop.f32.mrf.mxu0
      %v658 = vadd.f32 0.0, %v657
      %659 = vdwg.mxu0
      %660 = vmatpush.bf16.msra.mxu0 0
      %661 = vmatpush.bf16.msra.mxu0 0
      %662 = vmatpush.bf16.msra.mxu0 0
      %663 = vmatpush.bf16.msra.mxu0 0
      %664 = vmatpush.bf16.msra.mxu0 0
      %665 = vmatpush.bf16.msra.mxu0 0
      %666 = vmatpush.bf16.msra.mxu0 0
      %667 = vmatpush.bf16.msra.mxu0 %v351
      %668 = vmatmul.bf16.gmra.mxu0 %v370
      %v669 = vpop.f32.mrf.mxu0
      %v670 = vadd.f32 0.0, %v669
      %v671 = vpop.f32.mrf.mxu0
      %v672 = vadd.f32 0.0, %v671
      %673 = vmatmul.bf16.gmra.mxu0 %v373
      %v674 = vpop.f32.mrf.mxu0
      %v675 = vadd.f32 0.0, %v674
      %v676 = vpop.f32.mrf.mxu0
      %v677 = vadd.f32 0.0, %v676
      %678 = vdwg.mxu0
      %v679 = vpack.c.bf16 %v404, %v385
      %v680 = vpack.c.bf16 %v442, %v423
      %v681 = vpack.c.bf16 %v480, %v461
      %v682 = vpack.c.bf16 %v518, %v499
      %v683 = vpack.c.bf16 %v556, %v537
      %v684 = vpack.c.bf16 %v594, %v575
      %v685 = vpack.c.bf16 %v632, %v613
      %v686 = vpack.c.bf16 %v670, %v651
      %v687 = vpack.c.bf16 %v406, %v387
      %v688 = vpack.c.bf16 %v444, %v425
      %v689 = vpack.c.bf16 %v482, %v463
      %v690 = vpack.c.bf16 %v520, %v501
      %v691 = vpack.c.bf16 %v558, %v539
      %v692 = vpack.c.bf16 %v596, %v577
      %v693 = vpack.c.bf16 %v634, %v615
      %v694 = vpack.c.bf16 %v672, %v653
      %v695 = vpack.c.bf16 %v409, %v390
      %v696 = vpack.c.bf16 %v447, %v428
      %v697 = vpack.c.bf16 %v485, %v466
      %v698 = vpack.c.bf16 %v523, %v504
      %v699 = vpack.c.bf16 %v561, %v542
      %v700 = vpack.c.bf16 %v599, %v580
      %v701 = vpack.c.bf16 %v637, %v618
      %v702 = vpack.c.bf16 %v675, %v656
      %v703 = vpack.c.bf16 %v411, %v392
      %v704 = vpack.c.bf16 %v449, %v430
      %v705 = vpack.c.bf16 %v487, %v468
      %v706 = vpack.c.bf16 %v525, %v506
      %v707 = vpack.c.bf16 %v563, %v544
      %v708 = vpack.c.bf16 %v601, %v582
      %v709 = vpack.c.bf16 %v639, %v620
      %v710 = vpack.c.bf16 %v677, %v658
      %712 = vset.pattern.permute.xlu0 0
      %713 = vperm.xlu0 %712, %v274
      %v714 = vpop.permute.xlu0 %713
      %v717 = vunpack.c.l.s4 839922192
      %v718 = vunpack.c.0.s8 %v717
      %v719 = vperm.slane %v714, %v718
      %721 = vset.pattern.permute.xlu0 0
      %722 = vperm.xlu0 %721, %v275
      %v723 = vpop.permute.xlu0 %722
      %v726 = vunpack.c.l.s4 839922192
      %v727 = vunpack.c.0.s8 %v726
      %v728 = vperm.slane %v723, %v727
      %730 = vset.pattern.permute.xlu0 0
      %731 = vperm.xlu0 %730, %v276
      %v732 = vpop.permute.xlu0 %731
      %v735 = vunpack.c.l.s4 839922192
      %v736 = vunpack.c.0.s8 %v735
      %v737 = vperm.slane %v732, %v736
      %739 = vset.pattern.permute.xlu0 0
      %740 = vperm.xlu0 %739, %v277
      %v741 = vpop.permute.xlu0 %740
      %v744 = vunpack.c.l.s4 839922192
      %v745 = vunpack.c.0.s8 %v744
      %v746 = vperm.slane %v741, %v745
      %v747 = vunpack.c.l.bf16 %v679
      %v748 = vunpack.c.h.bf16 %v679
      %v749 = vunpack.c.l.bf16 %v680
      %v750 = vunpack.c.h.bf16 %v680
      %v751 = vunpack.c.l.bf16 %v681
      %v752 = vunpack.c.h.bf16 %v681
      %v753 = vunpack.c.l.bf16 %v682
      %v754 = vunpack.c.h.bf16 %v682
      %v755 = vunpack.c.l.bf16 %v683
      %v756 = vunpack.c.h.bf16 %v683
      %v757 = vunpack.c.l.bf16 %v684
      %v758 = vunpack.c.h.bf16 %v684
      %v759 = vunpack.c.l.bf16 %v685
      %v760 = vunpack.c.h.bf16 %v685
      %v761 = vunpack.c.l.bf16 %v686
      %v762 = vunpack.c.h.bf16 %v686
      %v763 = vunpack.c.l.bf16 %v687
      %v764 = vunpack.c.h.bf16 %v687
      %v765 = vunpack.c.l.bf16 %v688
      %v766 = vunpack.c.h.bf16 %v688
      %v767 = vunpack.c.l.bf16 %v689
      %v768 = vunpack.c.h.bf16 %v689
      %v769 = vunpack.c.l.bf16 %v690
      %v770 = vunpack.c.h.bf16 %v690
      %v771 = vunpack.c.l.bf16 %v691
      %v772 = vunpack.c.h.bf16 %v691
      %v773 = vunpack.c.l.bf16 %v692
      %v774 = vunpack.c.h.bf16 %v692
      %v775 = vunpack.c.l.bf16 %v693
      %v776 = vunpack.c.h.bf16 %v693
      %v777 = vunpack.c.l.bf16 %v694
      %v778 = vunpack.c.h.bf16 %v694
      %v779 = vunpack.c.l.bf16 %v695
      %v780 = vunpack.c.h.bf16 %v695
      %v781 = vunpack.c.l.bf16 %v696
      %v782 = vunpack.c.h.bf16 %v696
      %v783 = vunpack.c.l.bf16 %v697
      %v784 = vunpack.c.h.bf16 %v697
      %v785 = vunpack.c.l.bf16 %v698
      %v786 = vunpack.c.h.bf16 %v698
      %v787 = vunpack.c.l.bf16 %v699
      %v788 = vunpack.c.h.bf16 %v699
      %v789 = vunpack.c.l.bf16 %v700
      %v790 = vunpack.c.h.bf16 %v700
      %v791 = vunpack.c.l.bf16 %v701
      %v792 = vunpack.c.h.bf16 %v701
      %v793 = vunpack.c.l.bf16 %v702
      %v794 = vunpack.c.h.bf16 %v702
      %v795 = vunpack.c.l.bf16 %v703
      %v796 = vunpack.c.h.bf16 %v703
      %v797 = vunpack.c.l.bf16 %v704
      %v798 = vunpack.c.h.bf16 %v704
      %v799 = vunpack.c.l.bf16 %v705
      %v800 = vunpack.c.h.bf16 %v705
      %v801 = vunpack.c.l.bf16 %v706
      %v802 = vunpack.c.h.bf16 %v706
      %v803 = vunpack.c.l.bf16 %v707
      %v804 = vunpack.c.h.bf16 %v707
      %v805 = vunpack.c.l.bf16 %v708
      %v806 = vunpack.c.h.bf16 %v708
      %v807 = vunpack.c.l.bf16 %v709
      %v808 = vunpack.c.h.bf16 %v709
      %v809 = vunpack.c.l.bf16 %v710
      %v810 = vunpack.c.h.bf16 %v710
      %v811 = vunpack.c.l.bf16 %v719
      %v812 = vunpack.c.l.bf16 %v728
      %v813 = vunpack.c.l.bf16 %v737
      %v814 = vunpack.c.l.bf16 %v746
      %v815 = vadd.f32 %v747, %v811
      %v816 = vadd.f32 %v748, %v811
      %v817 = vadd.f32 %v749, %v811
      %v818 = vadd.f32 %v750, %v811
      %v819 = vadd.f32 %v751, %v811
      %v820 = vadd.f32 %v752, %v811
      %v821 = vadd.f32 %v753, %v811
      %v822 = vadd.f32 %v754, %v811
      %v823 = vadd.f32 %v755, %v811
      %v824 = vadd.f32 %v756, %v811
      %v825 = vadd.f32 %v757, %v811
      %v826 = vadd.f32 %v758, %v811
      %v827 = vadd.f32 %v759, %v811
      %v828 = vadd.f32 %v760, %v811
      %v829 = vadd.f32 %v761, %v811
      %v830 = vadd.f32 %v762, %v811
      %v831 = vadd.f32 %v763, %v812
      %v832 = vadd.f32 %v764, %v812
      %v833 = vadd.f32 %v765, %v812
      %v834 = vadd.f32 %v766, %v812
      %v835 = vadd.f32 %v767, %v812
      %v836 = vadd.f32 %v768, %v812
      %v837 = vadd.f32 %v769, %v812
      %v838 = vadd.f32 %v770, %v812
      %v839 = vadd.f32 %v771, %v812
      %v840 = vadd.f32 %v772, %v812
      %v841 = vadd.f32 %v773, %v812
      %v842 = vadd.f32 %v774, %v812
      %v843 = vadd.f32 %v775, %v812
      %v844 = vadd.f32 %v776, %v812
      %v845 = vadd.f32 %v777, %v812
      %v846 = vadd.f32 %v778, %v812
      %v847 = vadd.f32 %v779, %v813
      %v848 = vadd.f32 %v780, %v813
      %v849 = vadd.f32 %v781, %v813
      %v850 = vadd.f32 %v782, %v813
      %v851 = vadd.f32 %v783, %v813
      %v852 = vadd.f32 %v784, %v813
      %v853 = vadd.f32 %v785, %v813
      %v854 = vadd.f32 %v786, %v813
      %v855 = vadd.f32 %v787, %v813
      %v856 = vadd.f32 %v788, %v813
      %v857 = vadd.f32 %v789, %v813
      %v858 = vadd.f32 %v790, %v813
      %v859 = vadd.f32 %v791, %v813
      %v860 = vadd.f32 %v792, %v813
      %v861 = vadd.f32 %v793, %v813
      %v862 = vadd.f32 %v794, %v813
      %v863 = vadd.f32 %v795, %v814
      %v864 = vadd.f32 %v796, %v814
      %v865 = vadd.f32 %v797, %v814
      %v866 = vadd.f32 %v798, %v814
      %v867 = vadd.f32 %v799, %v814
      %v868 = vadd.f32 %v800, %v814
      %v869 = vadd.f32 %v801, %v814
      %v870 = vadd.f32 %v802, %v814
      %v871 = vadd.f32 %v803, %v814
      %v872 = vadd.f32 %v804, %v814
      %v873 = vadd.f32 %v805, %v814
      %v874 = vadd.f32 %v806, %v814
      %v875 = vadd.f32 %v807, %v814
      %v876 = vadd.f32 %v808, %v814
      %v877 = vadd.f32 %v809, %v814
      %v878 = vadd.f32 %v810, %v814
      %v879 = vpack.c.bf16 %v816, %v815
      %v880 = vpack.c.bf16 %v818, %v817
      %v881 = vpack.c.bf16 %v820, %v819
      %v882 = vpack.c.bf16 %v822, %v821
      %v883 = vpack.c.bf16 %v824, %v823
      %v884 = vpack.c.bf16 %v826, %v825
      %v885 = vpack.c.bf16 %v828, %v827
      %v886 = vpack.c.bf16 %v830, %v829
      %v887 = vpack.c.bf16 %v832, %v831
      %v888 = vpack.c.bf16 %v834, %v833
      %v889 = vpack.c.bf16 %v836, %v835
      %v890 = vpack.c.bf16 %v838, %v837
      %v891 = vpack.c.bf16 %v840, %v839
      %v892 = vpack.c.bf16 %v842, %v841
      %v893 = vpack.c.bf16 %v844, %v843
      %v894 = vpack.c.bf16 %v846, %v845
      %v895 = vpack.c.bf16 %v848, %v847
      %v896 = vpack.c.bf16 %v850, %v849
      %v897 = vpack.c.bf16 %v852, %v851
      %v898 = vpack.c.bf16 %v854, %v853
      %v899 = vpack.c.bf16 %v856, %v855
      %v900 = vpack.c.bf16 %v858, %v857
      %v901 = vpack.c.bf16 %v860, %v859
      %v902 = vpack.c.bf16 %v862, %v861
      %v903 = vpack.c.bf16 %v864, %v863
      %v904 = vpack.c.bf16 %v866, %v865
      %v905 = vpack.c.bf16 %v868, %v867
      %v906 = vpack.c.bf16 %v870, %v869
      %v907 = vpack.c.bf16 %v872, %v871
      %v908 = vpack.c.bf16 %v874, %v873
      %v909 = vpack.c.bf16 %v876, %v875
      %v910 = vpack.c.bf16 %v878, %v877
      %v911 = vunpack.c.l.bf16 %v879
      %v912 = vunpack.c.h.bf16 %v879
      %v913 = vunpack.c.l.bf16 %v880
      %v914 = vunpack.c.h.bf16 %v880
      %v915 = vunpack.c.l.bf16 %v881
      %v916 = vunpack.c.h.bf16 %v881
      %v917 = vunpack.c.l.bf16 %v882
      %v918 = vunpack.c.h.bf16 %v882
      %v919 = vunpack.c.l.bf16 %v883
      %v920 = vunpack.c.h.bf16 %v883
      %v921 = vunpack.c.l.bf16 %v884
      %v922 = vunpack.c.h.bf16 %v884
      %v923 = vunpack.c.l.bf16 %v885
      %v924 = vunpack.c.h.bf16 %v885
      %v925 = vunpack.c.l.bf16 %v886
      %v926 = vunpack.c.h.bf16 %v886
      %v927 = vunpack.c.l.bf16 %v887
      %v928 = vunpack.c.h.bf16 %v887
      %v929 = vunpack.c.l.bf16 %v888
      %v930 = vunpack.c.h.bf16 %v888
      %v931 = vunpack.c.l.bf16 %v889
      %v932 = vunpack.c.h.bf16 %v889
      %v933 = vunpack.c.l.bf16 %v890
      %v934 = vunpack.c.h.bf16 %v890
      %v935 = vunpack.c.l.bf16 %v891
      %v936 = vunpack.c.h.bf16 %v891
      %v937 = vunpack.c.l.bf16 %v892
      %v938 = vunpack.c.h.bf16 %v892
      %v939 = vunpack.c.l.bf16 %v893
      %v940 = vunpack.c.h.bf16 %v893
      %v941 = vunpack.c.l.bf16 %v894
      %v942 = vunpack.c.h.bf16 %v894
      %v943 = vunpack.c.l.bf16 %v895
      %v944 = vunpack.c.h.bf16 %v895
      %v945 = vunpack.c.l.bf16 %v896
      %v946 = vunpack.c.h.bf16 %v896
      %v947 = vunpack.c.l.bf16 %v897
      %v948 = vunpack.c.h.bf16 %v897
      %v949 = vunpack.c.l.bf16 %v898
      %v950 = vunpack.c.h.bf16 %v898
      %v951 = vunpack.c.l.bf16 %v899
      %v952 = vunpack.c.h.bf16 %v899
      %v953 = vunpack.c.l.bf16 %v900
      %v954 = vunpack.c.h.bf16 %v900
      %v955 = vunpack.c.l.bf16 %v901
      %v956 = vunpack.c.h.bf16 %v901
      %v957 = vunpack.c.l.bf16 %v902
      %v958 = vunpack.c.h.bf16 %v902
      %v959 = vunpack.c.l.bf16 %v903
      %v960 = vunpack.c.h.bf16 %v903
      %v961 = vunpack.c.l.bf16 %v904
      %v962 = vunpack.c.h.bf16 %v904
      %v963 = vunpack.c.l.bf16 %v905
      %v964 = vunpack.c.h.bf16 %v905
      %v965 = vunpack.c.l.bf16 %v906
      %v966 = vunpack.c.h.bf16 %v906
      %v967 = vunpack.c.l.bf16 %v907
      %v968 = vunpack.c.h.bf16 %v907
      %v969 = vunpack.c.l.bf16 %v908
      %v970 = vunpack.c.h.bf16 %v908
      %v971 = vunpack.c.l.bf16 %v909
      %v972 = vunpack.c.h.bf16 %v909
      %v973 = vunpack.c.l.bf16 %v910
      %v974 = vunpack.c.h.bf16 %v910
      %v975 = vmax.f32 %v911, 0.0
      %v976 = vmax.f32 %v912, 0.0
      %v977 = vmax.f32 %v913, 0.0
      %v978 = vmax.f32 %v914, 0.0
      %v979 = vmax.f32 %v915, 0.0
      %v980 = vmax.f32 %v916, 0.0
      %v981 = vmax.f32 %v917, 0.0
      %v982 = vmax.f32 %v918, 0.0
      %v983 = vmax.f32 %v919, 0.0
      %v984 = vmax.f32 %v920, 0.0
      %v985 = vmax.f32 %v921, 0.0
      %v986 = vmax.f32 %v922, 0.0
      %v987 = vmax.f32 %v923, 0.0
      %v988 = vmax.f32 %v924, 0.0
      %v989 = vmax.f32 %v925, 0.0
      %v990 = vmax.f32 %v926, 0.0
      %v991 = vmax.f32 %v927, 0.0
      %v992 = vmax.f32 %v928, 0.0
      %v993 = vmax.f32 %v929, 0.0
      %v994 = vmax.f32 %v930, 0.0
      %v995 = vmax.f32 %v931, 0.0
      %v996 = vmax.f32 %v932, 0.0
      %v997 = vmax.f32 %v933, 0.0
      %v998 = vmax.f32 %v934, 0.0
      %v999 = vmax.f32 %v935, 0.0
      %v1000 = vmax.f32 %v936, 0.0
      %v1001 = vmax.f32 %v937, 0.0
      %v1002 = vmax.f32 %v938, 0.0
      %v1003 = vmax.f32 %v939, 0.0
      %v1004 = vmax.f32 %v940, 0.0
      %v1005 = vmax.f32 %v941, 0.0
      %v1006 = vmax.f32 %v942, 0.0
      %v1007 = vmax.f32 %v943, 0.0
      %v1008 = vmax.f32 %v944, 0.0
      %v1009 = vmax.f32 %v945, 0.0
      %v1010 = vmax.f32 %v946, 0.0
      %v1011 = vmax.f32 %v947, 0.0
      %v1012 = vmax.f32 %v948, 0.0
      %v1013 = vmax.f32 %v949, 0.0
      %v1014 = vmax.f32 %v950, 0.0
      %v1015 = vmax.f32 %v951, 0.0
      %v1016 = vmax.f32 %v952, 0.0
      %v1017 = vmax.f32 %v953, 0.0
      %v1018 = vmax.f32 %v954, 0.0
      %v1019 = vmax.f32 %v955, 0.0
      %v1020 = vmax.f32 %v956, 0.0
      %v1021 = vmax.f32 %v957, 0.0
      %v1022 = vmax.f32 %v958, 0.0
      %v1023 = vmax.f32 %v959, 0.0
      %v1024 = vmax.f32 %v960, 0.0
      %v1025 = vmax.f32 %v961, 0.0
      %v1026 = vmax.f32 %v962, 0.0
      %v1027 = vmax.f32 %v963, 0.0
      %v1028 = vmax.f32 %v964, 0.0
      %v1029 = vmax.f32 %v965, 0.0
      %v1030 = vmax.f32 %v966, 0.0
      %v1031 = vmax.f32 %v967, 0.0
      %v1032 = vmax.f32 %v968, 0.0
      %v1033 = vmax.f32 %v969, 0.0
      %v1034 = vmax.f32 %v970, 0.0
      %v1035 = vmax.f32 %v971, 0.0
      %v1036 = vmax.f32 %v972, 0.0
      %v1037 = vmax.f32 %v973, 0.0
      %v1038 = vmax.f32 %v974, 0.0
      %v1039 = vpack.c.bf16 %v991, %v975
      %v1040 = vpack.c.bf16 %v992, %v976
      %v1041 = vpack.c.bf16 %v993, %v977
      %v1042 = vpack.c.bf16 %v994, %v978
      %v1043 = vpack.c.bf16 %v995, %v979
      %v1044 = vpack.c.bf16 %v996, %v980
      %v1045 = vpack.c.bf16 %v997, %v981
      %v1046 = vpack.c.bf16 %v998, %v982
      %v1047 = vpack.c.bf16 %v999, %v983
      %v1048 = vpack.c.bf16 %v1000, %v984
      %v1049 = vpack.c.bf16 %v1001, %v985
      %v1050 = vpack.c.bf16 %v1002, %v986
      %v1051 = vpack.c.bf16 %v1003, %v987
      %v1052 = vpack.c.bf16 %v1004, %v988
      %v1053 = vpack.c.bf16 %v1005, %v989
      %v1054 = vpack.c.bf16 %v1006, %v990
      %v1055 = vpack.c.bf16 %v1023, %v1007
      %v1056 = vpack.c.bf16 %v1024, %v1008
      %v1057 = vpack.c.bf16 %v1025, %v1009
      %v1058 = vpack.c.bf16 %v1026, %v1010
      %v1059 = vpack.c.bf16 %v1027, %v1011
      %v1060 = vpack.c.bf16 %v1028, %v1012
      %v1061 = vpack.c.bf16 %v1029, %v1013
      %v1062 = vpack.c.bf16 %v1030, %v1014
      %v1063 = vpack.c.bf16 %v1031, %v1015
      %v1064 = vpack.c.bf16 %v1032, %v1016
      %v1065 = vpack.c.bf16 %v1033, %v1017
      %v1066 = vpack.c.bf16 %v1034, %v1018
      %v1067 = vpack.c.bf16 %v1035, %v1019
      %v1068 = vpack.c.bf16 %v1036, %v1020
      %v1069 = vpack.c.bf16 %v1037, %v1021
      %v1070 = vpack.c.bf16 %v1038, %v1022
      %v1071 = vld [vmem:[%s3] sm:$0xf]
      %v1072 = vld [vmem:[%s3 + $0x4] sm:$0xf]
      %v1073 = vld [vmem:[%s3 + $0x8] sm:$0xf]
      %v1074 = vld [vmem:[%s3 + $0xc] sm:$0xf]
      %v1075 = vld [vmem:[%s3 + $0x10] sm:$0xf]
      %v1076 = vld [vmem:[%s3 + $0x14] sm:$0xf]
      %v1077 = vld [vmem:[%s3 + $0x18] sm:$0xf]
      %v1078 = vld [vmem:[%s3 + $0x1c] sm:$0xf]
      %v1079 = vld [vmem:[%s4] sm:$0xf]
      %v1080 = vld [vmem:[%s4 + $0x4] sm:$0xf]
      %v1081 = vld [vmem:[%s4 + $0x8] sm:$0xf]
      %v1082 = vld [vmem:[%s4 + $0xc] sm:$0xf]
      %v1083 = vld [vmem:[%s4 + $0x10] sm:$0xf]
      %v1084 = vld [vmem:[%s4 + $0x14] sm:$0xf]
      %v1085 = vld [vmem:[%s4 + $0x18] sm:$0xf]
      %v1086 = vld [vmem:[%s4 + $0x1c] sm:$0xf]
      %v1095 = vunpack.c.l.b16 %v1071
      %v1096 = vunpack.c.l.b16 %v1072
      %v1097 = vunpack.c.l.b16 %v1073
      %v1098 = vunpack.c.l.b16 %v1074
      %v1099 = vunpack.c.l.b16 %v1075
      %v1100 = vunpack.c.l.b16 %v1076
      %v1101 = vunpack.c.l.b16 %v1077
      %v1102 = vunpack.c.l.b16 %v1078
      %v1103 = vpack.c.b16 %v1096, %v1095
      %v1104 = vpack.c.b16 %v1098, %v1097
      %v1105 = vpack.c.b16 %v1100, %v1099
      %v1106 = vpack.c.b16 %v1102, %v1101
      %vm1107 = vcmask 261120
      %v1109 = vsel %vm1107, %v1103, 0
      %v1112 = vsel %vm1107, %v1104, 0
      %v1115 = vsel %vm1107, %v1105, 0
      %v1118 = vsel %vm1107, %v1106, 0
      %1120 = vmatpush.bf16.msra.mxu0 0
      %1121 = vmatpush.bf16.msra.mxu0 0
      %1122 = vmatpush.bf16.msra.mxu0 0
      %1123 = vmatpush.bf16.msra.mxu0 0
      %1124 = vmatpush.bf16.msra.mxu0 0
      %1125 = vmatpush.bf16.msra.mxu0 0
      %1126 = vmatpush.bf16.msra.mxu0 %v1055
      %1127 = vmatpush.bf16.msra.mxu0 %v1039
      %1128 = vmatmul.bf16.gmra.mxu0 %v1109
      %v1129 = vpop.f32.mrf.mxu0
      %v1130 = vadd.f32 0.0, %v1129
      %v1131 = vpop.f32.mrf.mxu0
      %v1132 = vadd.f32 0.0, %v1131
      %1133 = vmatmul.bf16.gmra.mxu0 %v1112
      %v1134 = vpop.f32.mrf.mxu0
      %v1135 = vadd.f32 0.0, %v1134
      %v1136 = vpop.f32.mrf.mxu0
      %v1137 = vadd.f32 0.0, %v1136
      %1138 = vmatmul.bf16.gmra.mxu0 %v1115
      %v1139 = vpop.f32.mrf.mxu0
      %v1140 = vadd.f32 0.0, %v1139
      %v1141 = vpop.f32.mrf.mxu0
      %v1142 = vadd.f32 0.0, %v1141
      %1143 = vmatmul.bf16.gmra.mxu0 %v1118
      %v1144 = vpop.f32.mrf.mxu0
      %v1145 = vadd.f32 0.0, %v1144
      %v1146 = vpop.f32.mrf.mxu0
      %v1147 = vadd.f32 0.0, %v1146
      %1148 = vdwg.mxu0
      %1149 = vmatpush.bf16.msra.mxu0 0
      %1150 = vmatpush.bf16.msra.mxu0 0
      %1151 = vmatpush.bf16.msra.mxu0 0
      %1152 = vmatpush.bf16.msra.mxu0 0
      %1153 = vmatpush.bf16.msra.mxu0 0
      %1154 = vmatpush.bf16.msra.mxu0 0
      %1155 = vmatpush.bf16.msra.mxu0 %v1056
      %1156 = vmatpush.bf16.msra.mxu0 %v1040
      %1157 = vmatmul.bf16.gmra.mxu0 %v1109
      %v1158 = vpop.f32.mrf.mxu0
      %v1159 = vadd.f32 0.0, %v1158
      %v1160 = vpop.f32.mrf.mxu0
      %v1161 = vadd.f32 0.0, %v1160
      %1162 = vmatmul.bf16.gmra.mxu0 %v1112
      %v1163 = vpop.f32.mrf.mxu0
      %v1164 = vadd.f32 0.0, %v1163
      %v1165 = vpop.f32.mrf.mxu0
      %v1166 = vadd.f32 0.0, %v1165
      %1167 = vmatmul.bf16.gmra.mxu0 %v1115
      %v1168 = vpop.f32.mrf.mxu0
      %v1169 = vadd.f32 0.0, %v1168
      %v1170 = vpop.f32.mrf.mxu0
      %v1171 = vadd.f32 0.0, %v1170
      %1172 = vmatmul.bf16.gmra.mxu0 %v1118
      %v1173 = vpop.f32.mrf.mxu0
      %v1174 = vadd.f32 0.0, %v1173
      %v1175 = vpop.f32.mrf.mxu0
      %v1176 = vadd.f32 0.0, %v1175
      %1177 = vdwg.mxu0
      %1178 = vmatpush.bf16.msra.mxu0 0
      %1179 = vmatpush.bf16.msra.mxu0 0
      %1180 = vmatpush.bf16.msra.mxu0 0
      %1181 = vmatpush.bf16.msra.mxu0 0
      %1182 = vmatpush.bf16.msra.mxu0 0
      %1183 = vmatpush.bf16.msra.mxu0 0
      %1184 = vmatpush.bf16.msra.mxu0 %v1057
      %1185 = vmatpush.bf16.msra.mxu0 %v1041
      %1186 = vmatmul.bf16.gmra.mxu0 %v1109
      %v1187 = vpop.f32.mrf.mxu0
      %v1188 = vadd.f32 0.0, %v1187
      %v1189 = vpop.f32.mrf.mxu0
      %v1190 = vadd.f32 0.0, %v1189
      %1191 = vmatmul.bf16.gmra.mxu0 %v1112
      %v1192 = vpop.f32.mrf.mxu0
      %v1193 = vadd.f32 0.0, %v1192
      %v1194 = vpop.f32.mrf.mxu0
      %v1195 = vadd.f32 0.0, %v1194
      %1196 = vmatmul.bf16.gmra.mxu0 %v1115
      %v1197 = vpop.f32.mrf.mxu0
      %v1198 = vadd.f32 0.0, %v1197
      %v1199 = vpop.f32.mrf.mxu0
      %v1200 = vadd.f32 0.0, %v1199
      %1201 = vmatmul.bf16.gmra.mxu0 %v1118
      %v1202 = vpop.f32.mrf.mxu0
      %v1203 = vadd.f32 0.0, %v1202
      %v1204 = vpop.f32.mrf.mxu0
      %v1205 = vadd.f32 0.0, %v1204
      %1206 = vdwg.mxu0
      %1207 = vmatpush.bf16.msra.mxu0 0
      %1208 = vmatpush.bf16.msra.mxu0 0
      %1209 = vmatpush.bf16.msra.mxu0 0
      %1210 = vmatpush.bf16.msra.mxu0 0
      %1211 = vmatpush.bf16.msra.mxu0 0
      %1212 = vmatpush.bf16.msra.mxu0 0
      %1213 = vmatpush.bf16.msra.mxu0 %v1058
      %1214 = vmatpush.bf16.msra.mxu0 %v1042
      %1215 = vmatmul.bf16.gmra.mxu0 %v1109
      %v1216 = vpop.f32.mrf.mxu0
      %v1217 = vadd.f32 0.0, %v1216
      %v1218 = vpop.f32.mrf.mxu0
      %v1219 = vadd.f32 0.0, %v1218
      %1220 = vmatmul.bf16.gmra.mxu0 %v1112
      %v1221 = vpop.f32.mrf.mxu0
      %v1222 = vadd.f32 0.0, %v1221
      %v1223 = vpop.f32.mrf.mxu0
      %v1224 = vadd.f32 0.0, %v1223
      %1225 = vmatmul.bf16.gmra.mxu0 %v1115
      %v1226 = vpop.f32.mrf.mxu0
      %v1227 = vadd.f32 0.0, %v1226
      %v1228 = vpop.f32.mrf.mxu0
      %v1229 = vadd.f32 0.0, %v1228
      %1230 = vmatmul.bf16.gmra.mxu0 %v1118
      %v1231 = vpop.f32.mrf.mxu0
      %v1232 = vadd.f32 0.0, %v1231
      %v1233 = vpop.f32.mrf.mxu0
      %v1234 = vadd.f32 0.0, %v1233
      %1235 = vdwg.mxu0
      %1236 = vmatpush.bf16.msra.mxu0 0
      %1237 = vmatpush.bf16.msra.mxu0 0
      %1238 = vmatpush.bf16.msra.mxu0 0
      %1239 = vmatpush.bf16.msra.mxu0 0
      %1240 = vmatpush.bf16.msra.mxu0 0
      %1241 = vmatpush.bf16.msra.mxu0 0
      %1242 = vmatpush.bf16.msra.mxu0 %v1059
      %1243 = vmatpush.bf16.msra.mxu0 %v1043
      %1244 = vmatmul.bf16.gmra.mxu0 %v1109
      %v1245 = vpop.f32.mrf.mxu0
      %v1246 = vadd.f32 0.0, %v1245
      %v1247 = vpop.f32.mrf.mxu0
      %v1248 = vadd.f32 0.0, %v1247
      %1249 = vmatmul.bf16.gmra.mxu0 %v1112
      %v1250 = vpop.f32.mrf.mxu0
      %v1251 = vadd.f32 0.0, %v1250
      %v1252 = vpop.f32.mrf.mxu0
      %v1253 = vadd.f32 0.0, %v1252
      %1254 = vmatmul.bf16.gmra.mxu0 %v1115
      %v1255 = vpop.f32.mrf.mxu0
      %v1256 = vadd.f32 0.0, %v1255
      %v1257 = vpop.f32.mrf.mxu0
      %v1258 = vadd.f32 0.0, %v1257
      %1259 = vmatmul.bf16.gmra.mxu0 %v1118
      %v1260 = vpop.f32.mrf.mxu0
      %v1261 = vadd.f32 0.0, %v1260
      %v1262 = vpop.f32.mrf.mxu0
      %v1263 = vadd.f32 0.0, %v1262
      %1264 = vdwg.mxu0
      %1265 = vmatpush.bf16.msra.mxu0 0
      %1266 = vmatpush.bf16.msra.mxu0 0
      %1267 = vmatpush.bf16.msra.mxu0 0
      %1268 = vmatpush.bf16.msra.mxu0 0
      %1269 = vmatpush.bf16.msra.mxu0 0
      %1270 = vmatpush.bf16.msra.mxu0 0
      %1271 = vmatpush.bf16.msra.mxu0 %v1060
      %1272 = vmatpush.bf16.msra.mxu0 %v1044
      %1273 = vmatmul.bf16.gmra.mxu0 %v1109
      %v1274 = vpop.f32.mrf.mxu0
      %v1275 = vadd.f32 0.0, %v1274
      %v1276 = vpop.f32.mrf.mxu0
      %v1277 = vadd.f32 0.0, %v1276
      %1278 = vmatmul.bf16.gmra.mxu0 %v1112
      %v1279 = vpop.f32.mrf.mxu0
      %v1280 = vadd.f32 0.0, %v1279
      %v1281 = vpop.f32.mrf.mxu0
      %v1282 = vadd.f32 0.0, %v1281
      %1283 = vmatmul.bf16.gmra.mxu0 %v1115
      %v1284 = vpop.f32.mrf.mxu0
      %v1285 = vadd.f32 0.0, %v1284
      %v1286 = vpop.f32.mrf.mxu0
      %v1287 = vadd.f32 0.0, %v1286
      %1288 = vmatmul.bf16.gmra.mxu0 %v1118
      %v1289 = vpop.f32.mrf.mxu0
      %v1290 = vadd.f32 0.0, %v1289
      %v1291 = vpop.f32.mrf.mxu0
      %v1292 = vadd.f32 0.0, %v1291
      %1293 = vdwg.mxu0
      %1294 = vmatpush.bf16.msra.mxu0 0
      %1295 = vmatpush.bf16.msra.mxu0 0
      %1296 = vmatpush.bf16.msra.mxu0 0
      %1297 = vmatpush.bf16.msra.mxu0 0
      %1298 = vmatpush.bf16.msra.mxu0 0
      %1299 = vmatpush.bf16.msra.mxu0 0
      %1300 = vmatpush.bf16.msra.mxu0 %v1061
      %1301 = vmatpush.bf16.msra.mxu0 %v1045
      %1302 = vmatmul.bf16.gmra.mxu0 %v1109
      %v1303 = vpop.f32.mrf.mxu0
      %v1304 = vadd.f32 0.0, %v1303
      %v1305 = vpop.f32.mrf.mxu0
      %v1306 = vadd.f32 0.0, %v1305
      %1307 = vmatmul.bf16.gmra.mxu0 %v1112
      %v1308 = vpop.f32.mrf.mxu0
      %v1309 = vadd.f32 0.0, %v1308
      %v1310 = vpop.f32.mrf.mxu0
      %v1311 = vadd.f32 0.0, %v1310
      %1312 = vmatmul.bf16.gmra.mxu0 %v1115
      %v1313 = vpop.f32.mrf.mxu0
      %v1314 = vadd.f32 0.0, %v1313
      %v1315 = vpop.f32.mrf.mxu0
      %v1316 = vadd.f32 0.0, %v1315
      %1317 = vmatmul.bf16.gmra.mxu0 %v1118
      %v1318 = vpop.f32.mrf.mxu0
      %v1319 = vadd.f32 0.0, %v1318
      %v1320 = vpop.f32.mrf.mxu0
      %v1321 = vadd.f32 0.0, %v1320
      %1322 = vdwg.mxu0
      %1323 = vmatpush.bf16.msra.mxu0 0
      %1324 = vmatpush.bf16.msra.mxu0 0
      %1325 = vmatpush.bf16.msra.mxu0 0
      %1326 = vmatpush.bf16.msra.mxu0 0
      %1327 = vmatpush.bf16.msra.mxu0 0
      %1328 = vmatpush.bf16.msra.mxu0 0
      %1329 = vmatpush.bf16.msra.mxu0 %v1062
      %1330 = vmatpush.bf16.msra.mxu0 %v1046
      %1331 = vmatmul.bf16.gmra.mxu0 %v1109
      %v1332 = vpop.f32.mrf.mxu0
      %v1333 = vadd.f32 0.0, %v1332
      %v1334 = vpop.f32.mrf.mxu0
      %v1335 = vadd.f32 0.0, %v1334
      %1336 = vmatmul.bf16.gmra.mxu0 %v1112
      %v1337 = vpop.f32.mrf.mxu0
      %v1338 = vadd.f32 0.0, %v1337
      %v1339 = vpop.f32.mrf.mxu0
      %v1340 = vadd.f32 0.0, %v1339
      %1341 = vmatmul.bf16.gmra.mxu0 %v1115
      %v1342 = vpop.f32.mrf.mxu0
      %v1343 = vadd.f32 0.0, %v1342
      %v1344 = vpop.f32.mrf.mxu0
      %v1345 = vadd.f32 0.0, %v1344
      %1346 = vmatmul.bf16.gmra.mxu0 %v1118
      %v1347 = vpop.f32.mrf.mxu0
      %v1348 = vadd.f32 0.0, %v1347
      %v1349 = vpop.f32.mrf.mxu0
      %v1350 = vadd.f32 0.0, %v1349
      %1351 = vdwg.mxu0
      %1352 = vmatpush.bf16.msra.mxu0 0
      %1353 = vmatpush.bf16.msra.mxu0 0
      %1354 = vmatpush.bf16.msra.mxu0 0
      %1355 = vmatpush.bf16.msra.mxu0 0
      %1356 = vmatpush.bf16.msra.mxu0 0
      %1357 = vmatpush.bf16.msra.mxu0 0
      %1358 = vmatpush.bf16.msra.mxu0 %v1063
      %1359 = vmatpush.bf16.msra.mxu0 %v1047
      %1360 = vmatmul.bf16.gmra.mxu0 %v1109
      %v1361 = vpop.f32.mrf.mxu0
      %v1362 = vadd.f32 0.0, %v1361
      %v1363 = vpop.f32.mrf.mxu0
      %v1364 = vadd.f32 0.0, %v1363
      %1365 = vmatmul.bf16.gmra.mxu0 %v1112
      %v1366 = vpop.f32.mrf.mxu0
      %v1367 = vadd.f32 0.0, %v1366
      %v1368 = vpop.f32.mrf.mxu0
      %v1369 = vadd.f32 0.0, %v1368
      %1370 = vmatmul.bf16.gmra.mxu0 %v1115
      %v1371 = vpop.f32.mrf.mxu0
      %v1372 = vadd.f32 0.0, %v1371
      %v1373 = vpop.f32.mrf.mxu0
      %v1374 = vadd.f32 0.0, %v1373
      %1375 = vmatmul.bf16.gmra.mxu0 %v1118
      %v1376 = vpop.f32.mrf.mxu0
      %v1377 = vadd.f32 0.0, %v1376
      %v1378 = vpop.f32.mrf.mxu0
      %v1379 = vadd.f32 0.0, %v1378
      %1380 = vdwg.mxu0
      %1381 = vmatpush.bf16.msra.mxu0 0
      %1382 = vmatpush.bf16.msra.mxu0 0
      %1383 = vmatpush.bf16.msra.mxu0 0
      %1384 = vmatpush.bf16.msra.mxu0 0
      %1385 = vmatpush.bf16.msra.mxu0 0
      %1386 = vmatpush.bf16.msra.mxu0 0
      %1387 = vmatpush.bf16.msra.mxu0 %v1064
      %1388 = vmatpush.bf16.msra.mxu0 %v1048
      %1389 = vmatmul.bf16.gmra.mxu0 %v1109
      %v1390 = vpop.f32.mrf.mxu0
      %v1391 = vadd.f32 0.0, %v1390
      %v1392 = vpop.f32.mrf.mxu0
      %v1393 = vadd.f32 0.0, %v1392
      %1394 = vmatmul.bf16.gmra.mxu0 %v1112
      %v1395 = vpop.f32.mrf.mxu0
      %v1396 = vadd.f32 0.0, %v1395
      %v1397 = vpop.f32.mrf.mxu0
      %v1398 = vadd.f32 0.0, %v1397
      %1399 = vmatmul.bf16.gmra.mxu0 %v1115
      %v1400 = vpop.f32.mrf.mxu0
      %v1401 = vadd.f32 0.0, %v1400
      %v1402 = vpop.f32.mrf.mxu0
      %v1403 = vadd.f32 0.0, %v1402
      %1404 = vmatmul.bf16.gmra.mxu0 %v1118
      %v1405 = vpop.f32.mrf.mxu0
      %v1406 = vadd.f32 0.0, %v1405
      %v1407 = vpop.f32.mrf.mxu0
      %v1408 = vadd.f32 0.0, %v1407
      %1409 = vdwg.mxu0
      %1410 = vmatpush.bf16.msra.mxu0 0
      %1411 = vmatpush.bf16.msra.mxu0 0
      %1412 = vmatpush.bf16.msra.mxu0 0
      %1413 = vmatpush.bf16.msra.mxu0 0
      %1414 = vmatpush.bf16.msra.mxu0 0
      %1415 = vmatpush.bf16.msra.mxu0 0
      %1416 = vmatpush.bf16.msra.mxu0 %v1065
      %1417 = vmatpush.bf16.msra.mxu0 %v1049
      %1418 = vmatmul.bf16.gmra.mxu0 %v1109
      %v1419 = vpop.f32.mrf.mxu0
      %v1420 = vadd.f32 0.0, %v1419
      %v1421 = vpop.f32.mrf.mxu0
      %v1422 = vadd.f32 0.0, %v1421
      %1423 = vmatmul.bf16.gmra.mxu0 %v1112
      %v1424 = vpop.f32.mrf.mxu0
      %v1425 = vadd.f32 0.0, %v1424
      %v1426 = vpop.f32.mrf.mxu0
      %v1427 = vadd.f32 0.0, %v1426
      %1428 = vmatmul.bf16.gmra.mxu0 %v1115
      %v1429 = vpop.f32.mrf.mxu0
      %v1430 = vadd.f32 0.0, %v1429
      %v1431 = vpop.f32.mrf.mxu0
      %v1432 = vadd.f32 0.0, %v1431
      %1433 = vmatmul.bf16.gmra.mxu0 %v1118
      %v1434 = vpop.f32.mrf.mxu0
      %v1435 = vadd.f32 0.0, %v1434
      %v1436 = vpop.f32.mrf.mxu0
      %v1437 = vadd.f32 0.0, %v1436
      %1438 = vdwg.mxu0
      %1439 = vmatpush.bf16.msra.mxu0 0
      %1440 = vmatpush.bf16.msra.mxu0 0
      %1441 = vmatpush.bf16.msra.mxu0 0
      %1442 = vmatpush.bf16.msra.mxu0 0
      %1443 = vmatpush.bf16.msra.mxu0 0
      %1444 = vmatpush.bf16.msra.mxu0 0
      %1445 = vmatpush.bf16.msra.mxu0 %v1066
      %1446 = vmatpush.bf16.msra.mxu0 %v1050
      %1447 = vmatmul.bf16.gmra.mxu0 %v1109
      %v1448 = vpop.f32.mrf.mxu0
      %v1449 = vadd.f32 0.0, %v1448
      %v1450 = vpop.f32.mrf.mxu0
      %v1451 = vadd.f32 0.0, %v1450
      %1452 = vmatmul.bf16.gmra.mxu0 %v1112
      %v1453 = vpop.f32.mrf.mxu0
      %v1454 = vadd.f32 0.0, %v1453
      %v1455 = vpop.f32.mrf.mxu0
      %v1456 = vadd.f32 0.0, %v1455
      %1457 = vmatmul.bf16.gmra.mxu0 %v1115
      %v1458 = vpop.f32.mrf.mxu0
      %v1459 = vadd.f32 0.0, %v1458
      %v1460 = vpop.f32.mrf.mxu0
      %v1461 = vadd.f32 0.0, %v1460
      %1462 = vmatmul.bf16.gmra.mxu0 %v1118
      %v1463 = vpop.f32.mrf.mxu0
      %v1464 = vadd.f32 0.0, %v1463
      %v1465 = vpop.f32.mrf.mxu0
      %v1466 = vadd.f32 0.0, %v1465
      %1467 = vdwg.mxu0
      %1468 = vmatpush.bf16.msra.mxu0 0
      %1469 = vmatpush.bf16.msra.mxu0 0
      %1470 = vmatpush.bf16.msra.mxu0 0
      %1471 = vmatpush.bf16.msra.mxu0 0
      %1472 = vmatpush.bf16.msra.mxu0 0
      %1473 = vmatpush.bf16.msra.mxu0 0
      %1474 = vmatpush.bf16.msra.mxu0 %v1067
      %1475 = vmatpush.bf16.msra.mxu0 %v1051
      %1476 = vmatmul.bf16.gmra.mxu0 %v1109
      %v1477 = vpop.f32.mrf.mxu0
      %v1478 = vadd.f32 0.0, %v1477
      %v1479 = vpop.f32.mrf.mxu0
      %v1480 = vadd.f32 0.0, %v1479
      %1481 = vmatmul.bf16.gmra.mxu0 %v1112
      %v1482 = vpop.f32.mrf.mxu0
      %v1483 = vadd.f32 0.0, %v1482
      %v1484 = vpop.f32.mrf.mxu0
      %v1485 = vadd.f32 0.0, %v1484
      %1486 = vmatmul.bf16.gmra.mxu0 %v1115
      %v1487 = vpop.f32.mrf.mxu0
      %v1488 = vadd.f32 0.0, %v1487
      %v1489 = vpop.f32.mrf.mxu0
      %v1490 = vadd.f32 0.0, %v1489
      %1491 = vmatmul.bf16.gmra.mxu0 %v1118
      %v1492 = vpop.f32.mrf.mxu0
      %v1493 = vadd.f32 0.0, %v1492
      %v1494 = vpop.f32.mrf.mxu0
      %v1495 = vadd.f32 0.0, %v1494
      %1496 = vdwg.mxu0
      %1497 = vmatpush.bf16.msra.mxu0 0
      %1498 = vmatpush.bf16.msra.mxu0 0
      %1499 = vmatpush.bf16.msra.mxu0 0
      %1500 = vmatpush.bf16.msra.mxu0 0
      %1501 = vmatpush.bf16.msra.mxu0 0
      %1502 = vmatpush.bf16.msra.mxu0 0
      %1503 = vmatpush.bf16.msra.mxu0 %v1068
      %1504 = vmatpush.bf16.msra.mxu0 %v1052
      %1505 = vmatmul.bf16.gmra.mxu0 %v1109
      %v1506 = vpop.f32.mrf.mxu0
      %v1507 = vadd.f32 0.0, %v1506
      %v1508 = vpop.f32.mrf.mxu0
      %v1509 = vadd.f32 0.0, %v1508
      %1510 = vmatmul.bf16.gmra.mxu0 %v1112
      %v1511 = vpop.f32.mrf.mxu0
      %v1512 = vadd.f32 0.0, %v1511
      %v1513 = vpop.f32.mrf.mxu0
      %v1514 = vadd.f32 0.0, %v1513
      %1515 = vmatmul.bf16.gmra.mxu0 %v1115
      %v1516 = vpop.f32.mrf.mxu0
      %v1517 = vadd.f32 0.0, %v1516
      %v1518 = vpop.f32.mrf.mxu0
      %v1519 = vadd.f32 0.0, %v1518
      %1520 = vmatmul.bf16.gmra.mxu0 %v1118
      %v1521 = vpop.f32.mrf.mxu0
      %v1522 = vadd.f32 0.0, %v1521
      %v1523 = vpop.f32.mrf.mxu0
      %v1524 = vadd.f32 0.0, %v1523
      %1525 = vdwg.mxu0
      %1526 = vmatpush.bf16.msra.mxu0 0
      %1527 = vmatpush.bf16.msra.mxu0 0
      %1528 = vmatpush.bf16.msra.mxu0 0
      %1529 = vmatpush.bf16.msra.mxu0 0
      %1530 = vmatpush.bf16.msra.mxu0 0
      %1531 = vmatpush.bf16.msra.mxu0 0
      %1532 = vmatpush.bf16.msra.mxu0 %v1069
      %1533 = vmatpush.bf16.msra.mxu0 %v1053
      %1534 = vmatmul.bf16.gmra.mxu0 %v1109
      %v1535 = vpop.f32.mrf.mxu0
      %v1536 = vadd.f32 0.0, %v1535
      %v1537 = vpop.f32.mrf.mxu0
      %v1538 = vadd.f32 0.0, %v1537
      %1539 = vmatmul.bf16.gmra.mxu0 %v1112
      %v1540 = vpop.f32.mrf.mxu0
      %v1541 = vadd.f32 0.0, %v1540
      %v1542 = vpop.f32.mrf.mxu0
      %v1543 = vadd.f32 0.0, %v1542
      %1544 = vmatmul.bf16.gmra.mxu0 %v1115
      %v1545 = vpop.f32.mrf.mxu0
      %v1546 = vadd.f32 0.0, %v1545
      %v1547 = vpop.f32.mrf.mxu0
      %v1548 = vadd.f32 0.0, %v1547
      %1549 = vmatmul.bf16.gmra.mxu0 %v1118
      %v1550 = vpop.f32.mrf.mxu0
      %v1551 = vadd.f32 0.0, %v1550
      %v1552 = vpop.f32.mrf.mxu0
      %v1553 = vadd.f32 0.0, %v1552
      %1554 = vdwg.mxu0
      %1555 = vmatpush.bf16.msra.mxu0 0
      %1556 = vmatpush.bf16.msra.mxu0 0
      %1557 = vmatpush.bf16.msra.mxu0 0
      %1558 = vmatpush.bf16.msra.mxu0 0
      %1559 = vmatpush.bf16.msra.mxu0 0
      %1560 = vmatpush.bf16.msra.mxu0 0
      %1561 = vmatpush.bf16.msra.mxu0 %v1070
      %1562 = vmatpush.bf16.msra.mxu0 %v1054
      %1563 = vmatmul.bf16.gmra.mxu0 %v1109
      %v1564 = vpop.f32.mrf.mxu0
      %v1565 = vadd.f32 0.0, %v1564
      %v1566 = vpop.f32.mrf.mxu0
      %v1567 = vadd.f32 0.0, %v1566
      %1568 = vmatmul.bf16.gmra.mxu0 %v1112
      %v1569 = vpop.f32.mrf.mxu0
      %v1570 = vadd.f32 0.0, %v1569
      %v1571 = vpop.f32.mrf.mxu0
      %v1572 = vadd.f32 0.0, %v1571
      %1573 = vmatmul.bf16.gmra.mxu0 %v1115
      %v1574 = vpop.f32.mrf.mxu0
      %v1575 = vadd.f32 0.0, %v1574
      %v1576 = vpop.f32.mrf.mxu0
      %v1577 = vadd.f32 0.0, %v1576
      %1578 = vmatmul.bf16.gmra.mxu0 %v1118
      %v1579 = vpop.f32.mrf.mxu0
      %v1580 = vadd.f32 0.0, %v1579
      %v1581 = vpop.f32.mrf.mxu0
      %v1582 = vadd.f32 0.0, %v1581
      %1583 = vdwg.mxu0
      %v1584 = vpack.c.bf16 %v1159, %v1130
      %v1585 = vpack.c.bf16 %v1217, %v1188
      %v1586 = vpack.c.bf16 %v1275, %v1246
      %v1587 = vpack.c.bf16 %v1333, %v1304
      %v1588 = vpack.c.bf16 %v1391, %v1362
      %v1589 = vpack.c.bf16 %v1449, %v1420
      %v1590 = vpack.c.bf16 %v1507, %v1478
      %v1591 = vpack.c.bf16 %v1565, %v1536
      %v1592 = vpack.c.bf16 %v1161, %v1132
      %v1593 = vpack.c.bf16 %v1219, %v1190
      %v1594 = vpack.c.bf16 %v1277, %v1248
      %v1595 = vpack.c.bf16 %v1335, %v1306
      %v1596 = vpack.c.bf16 %v1393, %v1364
      %v1597 = vpack.c.bf16 %v1451, %v1422
      %v1598 = vpack.c.bf16 %v1509, %v1480
      %v1599 = vpack.c.bf16 %v1567, %v1538
      %v1600 = vpack.c.bf16 %v1164, %v1135
      %v1601 = vpack.c.bf16 %v1222, %v1193
      %v1602 = vpack.c.bf16 %v1280, %v1251
      %v1603 = vpack.c.bf16 %v1338, %v1309
      %v1604 = vpack.c.bf16 %v1396, %v1367
      %v1605 = vpack.c.bf16 %v1454, %v1425
      %v1606 = vpack.c.bf16 %v1512, %v1483
      %v1607 = vpack.c.bf16 %v1570, %v1541
      %v1608 = vpack.c.bf16 %v1166, %v1137
      %v1609 = vpack.c.bf16 %v1224, %v1195
      %v1610 = vpack.c.bf16 %v1282, %v1253
      %v1611 = vpack.c.bf16 %v1340, %v1311
      %v1612 = vpack.c.bf16 %v1398, %v1369
      %v1613 = vpack.c.bf16 %v1456, %v1427
      %v1614 = vpack.c.bf16 %v1514, %v1485
      %v1615 = vpack.c.bf16 %v1572, %v1543
      %v1616 = vpack.c.bf16 %v1169, %v1140
      %v1617 = vpack.c.bf16 %v1227, %v1198
      %v1618 = vpack.c.bf16 %v1285, %v1256
      %v1619 = vpack.c.bf16 %v1343, %v1314
      %v1620 = vpack.c.bf16 %v1401, %v1372
      %v1621 = vpack.c.bf16 %v1459, %v1430
      %v1622 = vpack.c.bf16 %v1517, %v1488
      %v1623 = vpack.c.bf16 %v1575, %v1546
      %v1624 = vpack.c.bf16 %v1171, %v1142
      %v1625 = vpack.c.bf16 %v1229, %v1200
      %v1626 = vpack.c.bf16 %v1287, %v1258
      %v1627 = vpack.c.bf16 %v1345, %v1316
      %v1628 = vpack.c.bf16 %v1403, %v1374
      %v1629 = vpack.c.bf16 %v1461, %v1432
      %v1630 = vpack.c.bf16 %v1519, %v1490
      %v1631 = vpack.c.bf16 %v1577, %v1548
      %v1632 = vpack.c.bf16 %v1174, %v1145
      %v1633 = vpack.c.bf16 %v1232, %v1203
      %v1634 = vpack.c.bf16 %v1290, %v1261
      %v1635 = vpack.c.bf16 %v1348, %v1319
      %v1636 = vpack.c.bf16 %v1406, %v1377
      %v1637 = vpack.c.bf16 %v1464, %v1435
      %v1638 = vpack.c.bf16 %v1522, %v1493
      %v1639 = vpack.c.bf16 %v1580, %v1551
      %v1640 = vpack.c.bf16 %v1176, %v1147
      %v1641 = vpack.c.bf16 %v1234, %v1205
      %v1642 = vpack.c.bf16 %v1292, %v1263
      %v1643 = vpack.c.bf16 %v1350, %v1321
      %v1644 = vpack.c.bf16 %v1408, %v1379
      %v1645 = vpack.c.bf16 %v1466, %v1437
      %v1646 = vpack.c.bf16 %v1524, %v1495
      %v1647 = vpack.c.bf16 %v1582, %v1553
      %1649 = vset.pattern.permute.xlu0 0
      %1650 = vperm.xlu0 %1649, %v1079
      %v1651 = vpop.permute.xlu0 %1650
      %v1654 = vunpack.c.l.s4 839922192
      %v1655 = vunpack.c.0.s8 %v1654
      %v1656 = vperm.slane %v1651, %v1655
      %1658 = vset.pattern.permute.xlu0 0
      %1659 = vperm.xlu0 %1658, %v1080
      %v1660 = vpop.permute.xlu0 %1659
      %v1663 = vunpack.c.l.s4 839922192
      %v1664 = vunpack.c.0.s8 %v1663
      %v1665 = vperm.slane %v1660, %v1664
      %1667 = vset.pattern.permute.xlu0 0
      %1668 = vperm.xlu0 %1667, %v1081
      %v1669 = vpop.permute.xlu0 %1668
      %v1672 = vunpack.c.l.s4 839922192
      %v1673 = vunpack.c.0.s8 %v1672
      %v1674 = vperm.slane %v1669, %v1673
      %1676 = vset.pattern.permute.xlu0 0
      %1677 = vperm.xlu0 %1676, %v1082
      %v1678 = vpop.permute.xlu0 %1677
      %v1681 = vunpack.c.l.s4 839922192
      %v1682 = vunpack.c.0.s8 %v1681
      %v1683 = vperm.slane %v1678, %v1682
      %1685 = vset.pattern.permute.xlu0 0
      %1686 = vperm.xlu0 %1685, %v1083
      %v1687 = vpop.permute.xlu0 %1686
      %v1690 = vunpack.c.l.s4 839922192
      %v1691 = vunpack.c.0.s8 %v1690
      %v1692 = vperm.slane %v1687, %v1691
      %1694 = vset.pattern.permute.xlu0 0
      %1695 = vperm.xlu0 %1694, %v1084
      %v1696 = vpop.permute.xlu0 %1695
      %v1699 = vunpack.c.l.s4 839922192
      %v1700 = vunpack.c.0.s8 %v1699
      %v1701 = vperm.slane %v1696, %v1700
      %1703 = vset.pattern.permute.xlu0 0
      %1704 = vperm.xlu0 %1703, %v1085
      %v1705 = vpop.permute.xlu0 %1704
      %v1708 = vunpack.c.l.s4 839922192
      %v1709 = vunpack.c.0.s8 %v1708
      %v1710 = vperm.slane %v1705, %v1709
      %1712 = vset.pattern.permute.xlu0 0
      %1713 = vperm.xlu0 %1712, %v1086
      %v1714 = vpop.permute.xlu0 %1713
      %v1717 = vunpack.c.l.s4 839922192
      %v1718 = vunpack.c.0.s8 %v1717
      %v1719 = vperm.slane %v1714, %v1718
      %v1720 = vunpack.c.l.bf16 %v1584
      %v1721 = vunpack.c.h.bf16 %v1584
      %v1722 = vunpack.c.l.bf16 %v1585
      %v1723 = vunpack.c.h.bf16 %v1585
      %v1724 = vunpack.c.l.bf16 %v1586
      %v1725 = vunpack.c.h.bf16 %v1586
      %v1726 = vunpack.c.l.bf16 %v1587
      %v1727 = vunpack.c.h.bf16 %v1587
      %v1728 = vunpack.c.l.bf16 %v1588
      %v1729 = vunpack.c.h.bf16 %v1588
      %v1730 = vunpack.c.l.bf16 %v1589
      %v1731 = vunpack.c.h.bf16 %v1589
      %v1732 = vunpack.c.l.bf16 %v1590
      %v1733 = vunpack.c.h.bf16 %v1590
      %v1734 = vunpack.c.l.bf16 %v1591
      %v1735 = vunpack.c.h.bf16 %v1591
      %v1736 = vunpack.c.l.bf16 %v1592
      %v1737 = vunpack.c.h.bf16 %v1592
      %v1738 = vunpack.c.l.bf16 %v1593
      %v1739 = vunpack.c.h.bf16 %v1593
      %v1740 = vunpack.c.l.bf16 %v1594
      %v1741 = vunpack.c.h.bf16 %v1594
      %v1742 = vunpack.c.l.bf16 %v1595
      %v1743 = vunpack.c.h.bf16 %v1595
      %v1744 = vunpack.c.l.bf16 %v1596
      %v1745 = vunpack.c.h.bf16 %v1596
      %v1746 = vunpack.c.l.bf16 %v1597
      %v1747 = vunpack.c.h.bf16 %v1597
      %v1748 = vunpack.c.l.bf16 %v1598
      %v1749 = vunpack.c.h.bf16 %v1598
      %v1750 = vunpack.c.l.bf16 %v1599
      %v1751 = vunpack.c.h.bf16 %v1599
      %v1752 = vunpack.c.l.bf16 %v1600
      %v1753 = vunpack.c.h.bf16 %v1600
      %v1754 = vunpack.c.l.bf16 %v1601
      %v1755 = vunpack.c.h.bf16 %v1601
      %v1756 = vunpack.c.l.bf16 %v1602
      %v1757 = vunpack.c.h.bf16 %v1602
      %v1758 = vunpack.c.l.bf16 %v1603
      %v1759 = vunpack.c.h.bf16 %v1603
      %v1760 = vunpack.c.l.bf16 %v1604
      %v1761 = vunpack.c.h.bf16 %v1604
      %v1762 = vunpack.c.l.bf16 %v1605
      %v1763 = vunpack.c.h.bf16 %v1605
      %v1764 = vunpack.c.l.bf16 %v1606
      %v1765 = vunpack.c.h.bf16 %v1606
      %v1766 = vunpack.c.l.bf16 %v1607
      %v1767 = vunpack.c.h.bf16 %v1607
      %v1768 = vunpack.c.l.bf16 %v1608
      %v1769 = vunpack.c.h.bf16 %v1608
      %v1770 = vunpack.c.l.bf16 %v1609
      %v1771 = vunpack.c.h.bf16 %v1609
      %v1772 = vunpack.c.l.bf16 %v1610
      %v1773 = vunpack.c.h.bf16 %v1610
      %v1774 = vunpack.c.l.bf16 %v1611
      %v1775 = vunpack.c.h.bf16 %v1611
      %v1776 = vunpack.c.l.bf16 %v1612
      %v1777 = vunpack.c.h.bf16 %v1612
      %v1778 = vunpack.c.l.bf16 %v1613
      %v1779 = vunpack.c.h.bf16 %v1613
      %v1780 = vunpack.c.l.bf16 %v1614
      %v1781 = vunpack.c.h.bf16 %v1614
      %v1782 = vunpack.c.l.bf16 %v1615
      %v1783 = vunpack.c.h.bf16 %v1615
      %v1784 = vunpack.c.l.bf16 %v1616
      %v1785 = vunpack.c.h.bf16 %v1616
      %v1786 = vunpack.c.l.bf16 %v1617
      %v1787 = vunpack.c.h.bf16 %v1617
      %v1788 = vunpack.c.l.bf16 %v1618
      %v1789 = vunpack.c.h.bf16 %v1618
      %v1790 = vunpack.c.l.bf16 %v1619
      %v1791 = vunpack.c.h.bf16 %v1619
      %v1792 = vunpack.c.l.bf16 %v1620
      %v1793 = vunpack.c.h.bf16 %v1620
      %v1794 = vunpack.c.l.bf16 %v1621
      %v1795 = vunpack.c.h.bf16 %v1621
      %v1796 = vunpack.c.l.bf16 %v1622
      %v1797 = vunpack.c.h.bf16 %v1622
      %v1798 = vunpack.c.l.bf16 %v1623
      %v1799 = vunpack.c.h.bf16 %v1623
      %v1800 = vunpack.c.l.bf16 %v1624
      %v1801 = vunpack.c.h.bf16 %v1624
      %v1802 = vunpack.c.l.bf16 %v1625
      %v1803 = vunpack.c.h.bf16 %v1625
      %v1804 = vunpack.c.l.bf16 %v1626
      %v1805 = vunpack.c.h.bf16 %v1626
      %v1806 = vunpack.c.l.bf16 %v1627
      %v1807 = vunpack.c.h.bf16 %v1627
      %v1808 = vunpack.c.l.bf16 %v1628
      %v1809 = vunpack.c.h.bf16 %v1628
      %v1810 = vunpack.c.l.bf16 %v1629
      %v1811 = vunpack.c.h.bf16 %v1629
      %v1812 = vunpack.c.l.bf16 %v1630
      %v1813 = vunpack.c.h.bf16 %v1630
      %v1814 = vunpack.c.l.bf16 %v1631
      %v1815 = vunpack.c.h.bf16 %v1631
      %v1816 = vunpack.c.l.bf16 %v1632
      %v1817 = vunpack.c.h.bf16 %v1632
      %v1818 = vunpack.c.l.bf16 %v1633
      %v1819 = vunpack.c.h.bf16 %v1633
      %v1820 = vunpack.c.l.bf16 %v1634
      %v1821 = vunpack.c.h.bf16 %v1634
      %v1822 = vunpack.c.l.bf16 %v1635
      %v1823 = vunpack.c.h.bf16 %v1635
      %v1824 = vunpack.c.l.bf16 %v1636
      %v1825 = vunpack.c.h.bf16 %v1636
      %v1826 = vunpack.c.l.bf16 %v1637
      %v1827 = vunpack.c.h.bf16 %v1637
      %v1828 = vunpack.c.l.bf16 %v1638
      %v1829 = vunpack.c.h.bf16 %v1638
      %v1830 = vunpack.c.l.bf16 %v1639
      %v1831 = vunpack.c.h.bf16 %v1639
      %v1832 = vunpack.c.l.bf16 %v1640
      %v1833 = vunpack.c.h.bf16 %v1640
      %v1834 = vunpack.c.l.bf16 %v1641
      %v1835 = vunpack.c.h.bf16 %v1641
      %v1836 = vunpack.c.l.bf16 %v1642
      %v1837 = vunpack.c.h.bf16 %v1642
      %v1838 = vunpack.c.l.bf16 %v1643
      %v1839 = vunpack.c.h.bf16 %v1643
      %v1840 = vunpack.c.l.bf16 %v1644
      %v1841 = vunpack.c.h.bf16 %v1644
      %v1842 = vunpack.c.l.bf16 %v1645
      %v1843 = vunpack.c.h.bf16 %v1645
      %v1844 = vunpack.c.l.bf16 %v1646
      %v1845 = vunpack.c.h.bf16 %v1646
      %v1846 = vunpack.c.l.bf16 %v1647
      %v1847 = vunpack.c.h.bf16 %v1647
      %v1848 = vunpack.c.l.bf16 %v1656
      %v1849 = vunpack.c.l.bf16 %v1665
      %v1850 = vunpack.c.l.bf16 %v1674
      %v1851 = vunpack.c.l.bf16 %v1683
      %v1852 = vunpack.c.l.bf16 %v1692
      %v1853 = vunpack.c.l.bf16 %v1701
      %v1854 = vunpack.c.l.bf16 %v1710
      %v1855 = vunpack.c.l.bf16 %v1719
      %v1856 = vadd.f32 %v1720, %v1848
      %v1857 = vadd.f32 %v1721, %v1848
      %v1858 = vadd.f32 %v1722, %v1848
      %v1859 = vadd.f32 %v1723, %v1848
      %v1860 = vadd.f32 %v1724, %v1848
      %v1861 = vadd.f32 %v1725, %v1848
      %v1862 = vadd.f32 %v1726, %v1848
      %v1863 = vadd.f32 %v1727, %v1848
      %v1864 = vadd.f32 %v1728, %v1848
      %v1865 = vadd.f32 %v1729, %v1848
      %v1866 = vadd.f32 %v1730, %v1848
      %v1867 = vadd.f32 %v1731, %v1848
      %v1868 = vadd.f32 %v1732, %v1848
      %v1869 = vadd.f32 %v1733, %v1848
      %v1870 = vadd.f32 %v1734, %v1848
      %v1871 = vadd.f32 %v1735, %v1848
      %v1872 = vadd.f32 %v1736, %v1849
      %v1873 = vadd.f32 %v1737, %v1849
      %v1874 = vadd.f32 %v1738, %v1849
      %v1875 = vadd.f32 %v1739, %v1849
      %v1876 = vadd.f32 %v1740, %v1849
      %v1877 = vadd.f32 %v1741, %v1849
      %v1878 = vadd.f32 %v1742, %v1849
      %v1879 = vadd.f32 %v1743, %v1849
      %v1880 = vadd.f32 %v1744, %v1849
      %v1881 = vadd.f32 %v1745, %v1849
      %v1882 = vadd.f32 %v1746, %v1849
      %v1883 = vadd.f32 %v1747, %v1849
      %v1884 = vadd.f32 %v1748, %v1849
      %v1885 = vadd.f32 %v1749, %v1849
      %v1886 = vadd.f32 %v1750, %v1849
      %v1887 = vadd.f32 %v1751, %v1849
      %v1888 = vadd.f32 %v1752, %v1850
      %v1889 = vadd.f32 %v1753, %v1850
      %v1890 = vadd.f32 %v1754, %v1850
      %v1891 = vadd.f32 %v1755, %v1850
      %v1892 = vadd.f32 %v1756, %v1850
      %v1893 = vadd.f32 %v1757, %v1850
      %v1894 = vadd.f32 %v1758, %v1850
      %v1895 = vadd.f32 %v1759, %v1850
      %v1896 = vadd.f32 %v1760, %v1850
      %v1897 = vadd.f32 %v1761, %v1850
      %v1898 = vadd.f32 %v1762, %v1850
      %v1899 = vadd.f32 %v1763, %v1850
      %v1900 = vadd.f32 %v1764, %v1850
      %v1901 = vadd.f32 %v1765, %v1850
      %v1902 = vadd.f32 %v1766, %v1850
      %v1903 = vadd.f32 %v1767, %v1850
      %v1904 = vadd.f32 %v1768, %v1851
      %v1905 = vadd.f32 %v1769, %v1851
      %v1906 = vadd.f32 %v1770, %v1851
      %v1907 = vadd.f32 %v1771, %v1851
      %v1908 = vadd.f32 %v1772, %v1851
      %v1909 = vadd.f32 %v1773, %v1851
      %v1910 = vadd.f32 %v1774, %v1851
      %v1911 = vadd.f32 %v1775, %v1851
      %v1912 = vadd.f32 %v1776, %v1851
      %v1913 = vadd.f32 %v1777, %v1851
      %v1914 = vadd.f32 %v1778, %v1851
      %v1915 = vadd.f32 %v1779, %v1851
      %v1916 = vadd.f32 %v1780, %v1851
      %v1917 = vadd.f32 %v1781, %v1851
      %v1918 = vadd.f32 %v1782, %v1851
      %v1919 = vadd.f32 %v1783, %v1851
      %v1920 = vadd.f32 %v1784, %v1852
      %v1921 = vadd.f32 %v1785, %v1852
      %v1922 = vadd.f32 %v1786, %v1852
      %v1923 = vadd.f32 %v1787, %v1852
      %v1924 = vadd.f32 %v1788, %v1852
      %v1925 = vadd.f32 %v1789, %v1852
      %v1926 = vadd.f32 %v1790, %v1852
      %v1927 = vadd.f32 %v1791, %v1852
      %v1928 = vadd.f32 %v1792, %v1852
      %v1929 = vadd.f32 %v1793, %v1852
      %v1930 = vadd.f32 %v1794, %v1852
      %v1931 = vadd.f32 %v1795, %v1852
      %v1932 = vadd.f32 %v1796, %v1852
      %v1933 = vadd.f32 %v1797, %v1852
      %v1934 = vadd.f32 %v1798, %v1852
      %v1935 = vadd.f32 %v1799, %v1852
      %v1936 = vadd.f32 %v1800, %v1853
      %v1937 = vadd.f32 %v1801, %v1853
      %v1938 = vadd.f32 %v1802, %v1853
      %v1939 = vadd.f32 %v1803, %v1853
      %v1940 = vadd.f32 %v1804, %v1853
      %v1941 = vadd.f32 %v1805, %v1853
      %v1942 = vadd.f32 %v1806, %v1853
      %v1943 = vadd.f32 %v1807, %v1853
      %v1944 = vadd.f32 %v1808, %v1853
      %v1945 = vadd.f32 %v1809, %v1853
      %v1946 = vadd.f32 %v1810, %v1853
      %v1947 = vadd.f32 %v1811, %v1853
      %v1948 = vadd.f32 %v1812, %v1853
      %v1949 = vadd.f32 %v1813, %v1853
      %v1950 = vadd.f32 %v1814, %v1853
      %v1951 = vadd.f32 %v1815, %v1853
      %v1952 = vadd.f32 %v1816, %v1854
      %v1953 = vadd.f32 %v1817, %v1854
      %v1954 = vadd.f32 %v1818, %v1854
      %v1955 = vadd.f32 %v1819, %v1854
      %v1956 = vadd.f32 %v1820, %v1854
      %v1957 = vadd.f32 %v1821, %v1854
      %v1958 = vadd.f32 %v1822, %v1854
      %v1959 = vadd.f32 %v1823, %v1854
      %v1960 = vadd.f32 %v1824, %v1854
      %v1961 = vadd.f32 %v1825, %v1854
      %v1962 = vadd.f32 %v1826, %v1854
      %v1963 = vadd.f32 %v1827, %v1854
      %v1964 = vadd.f32 %v1828, %v1854
      %v1965 = vadd.f32 %v1829, %v1854
      %v1966 = vadd.f32 %v1830, %v1854
      %v1967 = vadd.f32 %v1831, %v1854
      %v1968 = vadd.f32 %v1832, %v1855
      %v1969 = vadd.f32 %v1833, %v1855
      %v1970 = vadd.f32 %v1834, %v1855
      %v1971 = vadd.f32 %v1835, %v1855
      %v1972 = vadd.f32 %v1836, %v1855
      %v1973 = vadd.f32 %v1837, %v1855
      %v1974 = vadd.f32 %v1838, %v1855
      %v1975 = vadd.f32 %v1839, %v1855
      %v1976 = vadd.f32 %v1840, %v1855
      %v1977 = vadd.f32 %v1841, %v1855
      %v1978 = vadd.f32 %v1842, %v1855
      %v1979 = vadd.f32 %v1843, %v1855
      %v1980 = vadd.f32 %v1844, %v1855
      %v1981 = vadd.f32 %v1845, %v1855
      %v1982 = vadd.f32 %v1846, %v1855
      %v1983 = vadd.f32 %v1847, %v1855
      %v1984 = vpack.c.bf16 %v1857, %v1856
      %v1985 = vpack.c.bf16 %v1859, %v1858
      %v1986 = vpack.c.bf16 %v1861, %v1860
      %v1987 = vpack.c.bf16 %v1863, %v1862
      %v1988 = vpack.c.bf16 %v1865, %v1864
      %v1989 = vpack.c.bf16 %v1867, %v1866
      %v1990 = vpack.c.bf16 %v1869, %v1868
      %v1991 = vpack.c.bf16 %v1871, %v1870
      %v1992 = vpack.c.bf16 %v1873, %v1872
      %v1993 = vpack.c.bf16 %v1875, %v1874
      %v1994 = vpack.c.bf16 %v1877, %v1876
      %v1995 = vpack.c.bf16 %v1879, %v1878
      %v1996 = vpack.c.bf16 %v1881, %v1880
      %v1997 = vpack.c.bf16 %v1883, %v1882
      %v1998 = vpack.c.bf16 %v1885, %v1884
      %v1999 = vpack.c.bf16 %v1887, %v1886
      %v2000 = vpack.c.bf16 %v1889, %v1888
      %v2001 = vpack.c.bf16 %v1891, %v1890
      %v2002 = vpack.c.bf16 %v1893, %v1892
      %v2003 = vpack.c.bf16 %v1895, %v1894
      %v2004 = vpack.c.bf16 %v1897, %v1896
      %v2005 = vpack.c.bf16 %v1899, %v1898
      %v2006 = vpack.c.bf16 %v1901, %v1900
      %v2007 = vpack.c.bf16 %v1903, %v1902
      %v2008 = vpack.c.bf16 %v1905, %v1904
      %v2009 = vpack.c.bf16 %v1907, %v1906
      %v2010 = vpack.c.bf16 %v1909, %v1908
      %v2011 = vpack.c.bf16 %v1911, %v1910
      %v2012 = vpack.c.bf16 %v1913, %v1912
      %v2013 = vpack.c.bf16 %v1915, %v1914
      %v2014 = vpack.c.bf16 %v1917, %v1916
      %v2015 = vpack.c.bf16 %v1919, %v1918
      %v2016 = vpack.c.bf16 %v1921, %v1920
      %v2017 = vpack.c.bf16 %v1923, %v1922
      %v2018 = vpack.c.bf16 %v1925, %v1924
      %v2019 = vpack.c.bf16 %v1927, %v1926
      %v2020 = vpack.c.bf16 %v1929, %v1928
      %v2021 = vpack.c.bf16 %v1931, %v1930
      %v2022 = vpack.c.bf16 %v1933, %v1932
      %v2023 = vpack.c.bf16 %v1935, %v1934
      %v2024 = vpack.c.bf16 %v1937, %v1936
      %v2025 = vpack.c.bf16 %v1939, %v1938
      %v2026 = vpack.c.bf16 %v1941, %v1940
      %v2027 = vpack.c.bf16 %v1943, %v1942
      %v2028 = vpack.c.bf16 %v1945, %v1944
      %v2029 = vpack.c.bf16 %v1947, %v1946
      %v2030 = vpack.c.bf16 %v1949, %v1948
      %v2031 = vpack.c.bf16 %v1951, %v1950
      %v2032 = vpack.c.bf16 %v1953, %v1952
      %v2033 = vpack.c.bf16 %v1955, %v1954
      %v2034 = vpack.c.bf16 %v1957, %v1956
      %v2035 = vpack.c.bf16 %v1959, %v1958
      %v2036 = vpack.c.bf16 %v1961, %v1960
      %v2037 = vpack.c.bf16 %v1963, %v1962
      %v2038 = vpack.c.bf16 %v1965, %v1964
      %v2039 = vpack.c.bf16 %v1967, %v1966
      %v2040 = vpack.c.bf16 %v1969, %v1968
      %v2041 = vpack.c.bf16 %v1971, %v1970
      %v2042 = vpack.c.bf16 %v1973, %v1972
      %v2043 = vpack.c.bf16 %v1975, %v1974
      %v2044 = vpack.c.bf16 %v1977, %v1976
      %v2045 = vpack.c.bf16 %v1979, %v1978
      %v2046 = vpack.c.bf16 %v1981, %v1980
      %v2047 = vpack.c.bf16 %v1983, %v1982
      %v2048 = vunpack.c.l.bf16 %v1984
      %v2049 = vunpack.c.h.bf16 %v1984
      %v2050 = vunpack.c.l.bf16 %v1985
      %v2051 = vunpack.c.h.bf16 %v1985
      %v2052 = vunpack.c.l.bf16 %v1986
      %v2053 = vunpack.c.h.bf16 %v1986
      %v2054 = vunpack.c.l.bf16 %v1987
      %v2055 = vunpack.c.h.bf16 %v1987
      %v2056 = vunpack.c.l.bf16 %v1988
      %v2057 = vunpack.c.h.bf16 %v1988
      %v2058 = vunpack.c.l.bf16 %v1989
      %v2059 = vunpack.c.h.bf16 %v1989
      %v2060 = vunpack.c.l.bf16 %v1990
      %v2061 = vunpack.c.h.bf16 %v1990
      %v2062 = vunpack.c.l.bf16 %v1991
      %v2063 = vunpack.c.h.bf16 %v1991
      %v2064 = vunpack.c.l.bf16 %v1992
      %v2065 = vunpack.c.h.bf16 %v1992
      %v2066 = vunpack.c.l.bf16 %v1993
      %v2067 = vunpack.c.h.bf16 %v1993
      %v2068 = vunpack.c.l.bf16 %v1994
      %v2069 = vunpack.c.h.bf16 %v1994
      %v2070 = vunpack.c.l.bf16 %v1995
      %v2071 = vunpack.c.h.bf16 %v1995
      %v2072 = vunpack.c.l.bf16 %v1996
      %v2073 = vunpack.c.h.bf16 %v1996
      %v2074 = vunpack.c.l.bf16 %v1997
      %v2075 = vunpack.c.h.bf16 %v1997
      %v2076 = vunpack.c.l.bf16 %v1998
      %v2077 = vunpack.c.h.bf16 %v1998
      %v2078 = vunpack.c.l.bf16 %v1999
      %v2079 = vunpack.c.h.bf16 %v1999
      %v2080 = vunpack.c.l.bf16 %v2000
      %v2081 = vunpack.c.h.bf16 %v2000
      %v2082 = vunpack.c.l.bf16 %v2001
      %v2083 = vunpack.c.h.bf16 %v2001
      %v2084 = vunpack.c.l.bf16 %v2002
      %v2085 = vunpack.c.h.bf16 %v2002
      %v2086 = vunpack.c.l.bf16 %v2003
      %v2087 = vunpack.c.h.bf16 %v2003
      %v2088 = vunpack.c.l.bf16 %v2004
      %v2089 = vunpack.c.h.bf16 %v2004
      %v2090 = vunpack.c.l.bf16 %v2005
      %v2091 = vunpack.c.h.bf16 %v2005
      %v2092 = vunpack.c.l.bf16 %v2006
      %v2093 = vunpack.c.h.bf16 %v2006
      %v2094 = vunpack.c.l.bf16 %v2007
      %v2095 = vunpack.c.h.bf16 %v2007
      %v2096 = vunpack.c.l.bf16 %v2008
      %v2097 = vunpack.c.h.bf16 %v2008
      %v2098 = vunpack.c.l.bf16 %v2009
      %v2099 = vunpack.c.h.bf16 %v2009
      %v2100 = vunpack.c.l.bf16 %v2010
      %v2101 = vunpack.c.h.bf16 %v2010
      %v2102 = vunpack.c.l.bf16 %v2011
      %v2103 = vunpack.c.h.bf16 %v2011
      %v2104 = vunpack.c.l.bf16 %v2012
      %v2105 = vunpack.c.h.bf16 %v2012
      %v2106 = vunpack.c.l.bf16 %v2013
      %v2107 = vunpack.c.h.bf16 %v2013
      %v2108 = vunpack.c.l.bf16 %v2014
      %v2109 = vunpack.c.h.bf16 %v2014
      %v2110 = vunpack.c.l.bf16 %v2015
      %v2111 = vunpack.c.h.bf16 %v2015
      %v2112 = vunpack.c.l.bf16 %v2016
      %v2113 = vunpack.c.h.bf16 %v2016
      %v2114 = vunpack.c.l.bf16 %v2017
      %v2115 = vunpack.c.h.bf16 %v2017
      %v2116 = vunpack.c.l.bf16 %v2018
      %v2117 = vunpack.c.h.bf16 %v2018
      %v2118 = vunpack.c.l.bf16 %v2019
      %v2119 = vunpack.c.h.bf16 %v2019
      %v2120 = vunpack.c.l.bf16 %v2020
      %v2121 = vunpack.c.h.bf16 %v2020
      %v2122 = vunpack.c.l.bf16 %v2021
      %v2123 = vunpack.c.h.bf16 %v2021
      %v2124 = vunpack.c.l.bf16 %v2022
      %v2125 = vunpack.c.h.bf16 %v2022
      %v2126 = vunpack.c.l.bf16 %v2023
      %v2127 = vunpack.c.h.bf16 %v2023
      %v2128 = vunpack.c.l.bf16 %v2024
      %v2129 = vunpack.c.h.bf16 %v2024
      %v2130 = vunpack.c.l.bf16 %v2025
      %v2131 = vunpack.c.h.bf16 %v2025
      %v2132 = vunpack.c.l.bf16 %v2026
      %v2133 = vunpack.c.h.bf16 %v2026
      %v2134 = vunpack.c.l.bf16 %v2027
      %v2135 = vunpack.c.h.bf16 %v2027
      %v2136 = vunpack.c.l.bf16 %v2028
      %v2137 = vunpack.c.h.bf16 %v2028
      %v2138 = vunpack.c.l.bf16 %v2029
      %v2139 = vunpack.c.h.bf16 %v2029
      %v2140 = vunpack.c.l.bf16 %v2030
      %v2141 = vunpack.c.h.bf16 %v2030
      %v2142 = vunpack.c.l.bf16 %v2031
      %v2143 = vunpack.c.h.bf16 %v2031
      %v2144 = vunpack.c.l.bf16 %v2032
      %v2145 = vunpack.c.h.bf16 %v2032
      %v2146 = vunpack.c.l.bf16 %v2033
      %v2147 = vunpack.c.h.bf16 %v2033
      %v2148 = vunpack.c.l.bf16 %v2034
      %v2149 = vunpack.c.h.bf16 %v2034
      %v2150 = vunpack.c.l.bf16 %v2035
      %v2151 = vunpack.c.h.bf16 %v2035
      %v2152 = vunpack.c.l.bf16 %v2036
      %v2153 = vunpack.c.h.bf16 %v2036
      %v2154 = vunpack.c.l.bf16 %v2037
      %v2155 = vunpack.c.h.bf16 %v2037
      %v2156 = vunpack.c.l.bf16 %v2038
      %v2157 = vunpack.c.h.bf16 %v2038
      %v2158 = vunpack.c.l.bf16 %v2039
      %v2159 = vunpack.c.h.bf16 %v2039
      %v2160 = vunpack.c.l.bf16 %v2040
      %v2161 = vunpack.c.h.bf16 %v2040
      %v2162 = vunpack.c.l.bf16 %v2041
      %v2163 = vunpack.c.h.bf16 %v2041
      %v2164 = vunpack.c.l.bf16 %v2042
      %v2165 = vunpack.c.h.bf16 %v2042
      %v2166 = vunpack.c.l.bf16 %v2043
      %v2167 = vunpack.c.h.bf16 %v2043
      %v2168 = vunpack.c.l.bf16 %v2044
      %v2169 = vunpack.c.h.bf16 %v2044
      %v2170 = vunpack.c.l.bf16 %v2045
      %v2171 = vunpack.c.h.bf16 %v2045
      %v2172 = vunpack.c.l.bf16 %v2046
      %v2173 = vunpack.c.h.bf16 %v2046
      %v2174 = vunpack.c.l.bf16 %v2047
      %v2175 = vunpack.c.h.bf16 %v2047
      %v2176 = vmax.f32 %v2048, 0.0
      %v2177 = vmax.f32 %v2049, 0.0
      %v2178 = vmax.f32 %v2050, 0.0
      %v2179 = vmax.f32 %v2051, 0.0
      %v2180 = vmax.f32 %v2052, 0.0
      %v2181 = vmax.f32 %v2053, 0.0
      %v2182 = vmax.f32 %v2054, 0.0
      %v2183 = vmax.f32 %v2055, 0.0
      %v2184 = vmax.f32 %v2056, 0.0
      %v2185 = vmax.f32 %v2057, 0.0
      %v2186 = vmax.f32 %v2058, 0.0
      %v2187 = vmax.f32 %v2059, 0.0
      %v2188 = vmax.f32 %v2060, 0.0
      %v2189 = vmax.f32 %v2061, 0.0
      %v2190 = vmax.f32 %v2062, 0.0
      %v2191 = vmax.f32 %v2063, 0.0
      %v2192 = vmax.f32 %v2064, 0.0
      %v2193 = vmax.f32 %v2065, 0.0
      %v2194 = vmax.f32 %v2066, 0.0
      %v2195 = vmax.f32 %v2067, 0.0
      %v2196 = vmax.f32 %v2068, 0.0
      %v2197 = vmax.f32 %v2069, 0.0
      %v2198 = vmax.f32 %v2070, 0.0
      %v2199 = vmax.f32 %v2071, 0.0
      %v2200 = vmax.f32 %v2072, 0.0
      %v2201 = vmax.f32 %v2073, 0.0
      %v2202 = vmax.f32 %v2074, 0.0
      %v2203 = vmax.f32 %v2075, 0.0
      %v2204 = vmax.f32 %v2076, 0.0
      %v2205 = vmax.f32 %v2077, 0.0
      %v2206 = vmax.f32 %v2078, 0.0
      %v2207 = vmax.f32 %v2079, 0.0
      %v2208 = vmax.f32 %v2080, 0.0
      %v2209 = vmax.f32 %v2081, 0.0
      %v2210 = vmax.f32 %v2082, 0.0
      %v2211 = vmax.f32 %v2083, 0.0
      %v2212 = vmax.f32 %v2084, 0.0
      %v2213 = vmax.f32 %v2085, 0.0
      %v2214 = vmax.f32 %v2086, 0.0
      %v2215 = vmax.f32 %v2087, 0.0
      %v2216 = vmax.f32 %v2088, 0.0
      %v2217 = vmax.f32 %v2089, 0.0
      %v2218 = vmax.f32 %v2090, 0.0
      %v2219 = vmax.f32 %v2091, 0.0
      %v2220 = vmax.f32 %v2092, 0.0
      %v2221 = vmax.f32 %v2093, 0.0
      %v2222 = vmax.f32 %v2094, 0.0
      %v2223 = vmax.f32 %v2095, 0.0
      %v2224 = vmax.f32 %v2096, 0.0
      %v2225 = vmax.f32 %v2097, 0.0
      %v2226 = vmax.f32 %v2098, 0.0
      %v2227 = vmax.f32 %v2099, 0.0
      %v2228 = vmax.f32 %v2100, 0.0
      %v2229 = vmax.f32 %v2101, 0.0
      %v2230 = vmax.f32 %v2102, 0.0
      %v2231 = vmax.f32 %v2103, 0.0
      %v2232 = vmax.f32 %v2104, 0.0
      %v2233 = vmax.f32 %v2105, 0.0
      %v2234 = vmax.f32 %v2106, 0.0
      %v2235 = vmax.f32 %v2107, 0.0
      %v2236 = vmax.f32 %v2108, 0.0
      %v2237 = vmax.f32 %v2109, 0.0
      %v2238 = vmax.f32 %v2110, 0.0
      %v2239 = vmax.f32 %v2111, 0.0
      %v2240 = vmax.f32 %v2112, 0.0
      %v2241 = vmax.f32 %v2113, 0.0
      %v2242 = vmax.f32 %v2114, 0.0
      %v2243 = vmax.f32 %v2115, 0.0
      %v2244 = vmax.f32 %v2116, 0.0
      %v2245 = vmax.f32 %v2117, 0.0
      %v2246 = vmax.f32 %v2118, 0.0
      %v2247 = vmax.f32 %v2119, 0.0
      %v2248 = vmax.f32 %v2120, 0.0
      %v2249 = vmax.f32 %v2121, 0.0
      %v2250 = vmax.f32 %v2122, 0.0
      %v2251 = vmax.f32 %v2123, 0.0
      %v2252 = vmax.f32 %v2124, 0.0
      %v2253 = vmax.f32 %v2125, 0.0
      %v2254 = vmax.f32 %v2126, 0.0
      %v2255 = vmax.f32 %v2127, 0.0
      %v2256 = vmax.f32 %v2128, 0.0
      %v2257 = vmax.f32 %v2129, 0.0
      %v2258 = vmax.f32 %v2130, 0.0
      %v2259 = vmax.f32 %v2131, 0.0
      %v2260 = vmax.f32 %v2132, 0.0
      %v2261 = vmax.f32 %v2133, 0.0
      %v2262 = vmax.f32 %v2134, 0.0
      %v2263 = vmax.f32 %v2135, 0.0
      %v2264 = vmax.f32 %v2136, 0.0
      %v2265 = vmax.f32 %v2137, 0.0
      %v2266 = vmax.f32 %v2138, 0.0
      %v2267 = vmax.f32 %v2139, 0.0
      %v2268 = vmax.f32 %v2140, 0.0
      %v2269 = vmax.f32 %v2141, 0.0
      %v2270 = vmax.f32 %v2142, 0.0
      %v2271 = vmax.f32 %v2143, 0.0
      %v2272 = vmax.f32 %v2144, 0.0
      %v2273 = vmax.f32 %v2145, 0.0
      %v2274 = vmax.f32 %v2146, 0.0
      %v2275 = vmax.f32 %v2147, 0.0
      %v2276 = vmax.f32 %v2148, 0.0
      %v2277 = vmax.f32 %v2149, 0.0
      %v2278 = vmax.f32 %v2150, 0.0
      %v2279 = vmax.f32 %v2151, 0.0
      %v2280 = vmax.f32 %v2152, 0.0
      %v2281 = vmax.f32 %v2153, 0.0
      %v2282 = vmax.f32 %v2154, 0.0
      %v2283 = vmax.f32 %v2155, 0.0
      %v2284 = vmax.f32 %v2156, 0.0
      %v2285 = vmax.f32 %v2157, 0.0
      %v2286 = vmax.f32 %v2158, 0.0
      %v2287 = vmax.f32 %v2159, 0.0
      %v2288 = vmax.f32 %v2160, 0.0
      %v2289 = vmax.f32 %v2161, 0.0
      %v2290 = vmax.f32 %v2162, 0.0
      %v2291 = vmax.f32 %v2163, 0.0
      %v2292 = vmax.f32 %v2164, 0.0
      %v2293 = vmax.f32 %v2165, 0.0
      %v2294 = vmax.f32 %v2166, 0.0
      %v2295 = vmax.f32 %v2167, 0.0
      %v2296 = vmax.f32 %v2168, 0.0
      %v2297 = vmax.f32 %v2169, 0.0
      %v2298 = vmax.f32 %v2170, 0.0
      %v2299 = vmax.f32 %v2171, 0.0
      %v2300 = vmax.f32 %v2172, 0.0
      %v2301 = vmax.f32 %v2173, 0.0
      %v2302 = vmax.f32 %v2174, 0.0
      %v2303 = vmax.f32 %v2175, 0.0
      %v2304 = vpack.c.bf16 %v2177, %v2176
      %v2305 = vpack.c.bf16 %v2179, %v2178
      %v2306 = vpack.c.bf16 %v2181, %v2180
      %v2307 = vpack.c.bf16 %v2183, %v2182
      %v2308 = vpack.c.bf16 %v2185, %v2184
      %v2309 = vpack.c.bf16 %v2187, %v2186
      %v2310 = vpack.c.bf16 %v2189, %v2188
      %v2311 = vpack.c.bf16 %v2191, %v2190
      %v2312 = vpack.c.bf16 %v2193, %v2192
      %v2313 = vpack.c.bf16 %v2195, %v2194
      %v2314 = vpack.c.bf16 %v2197, %v2196
      %v2315 = vpack.c.bf16 %v2199, %v2198
      %v2316 = vpack.c.bf16 %v2201, %v2200
      %v2317 = vpack.c.bf16 %v2203, %v2202
      %v2318 = vpack.c.bf16 %v2205, %v2204
      %v2319 = vpack.c.bf16 %v2207, %v2206
      %v2320 = vpack.c.bf16 %v2209, %v2208
      %v2321 = vpack.c.bf16 %v2211, %v2210
      %v2322 = vpack.c.bf16 %v2213, %v2212
      %v2323 = vpack.c.bf16 %v2215, %v2214
      %v2324 = vpack.c.bf16 %v2217, %v2216
      %v2325 = vpack.c.bf16 %v2219, %v2218
      %v2326 = vpack.c.bf16 %v2221, %v2220
      %v2327 = vpack.c.bf16 %v2223, %v2222
      %v2328 = vpack.c.bf16 %v2225, %v2224
      %v2329 = vpack.c.bf16 %v2227, %v2226
      %v2330 = vpack.c.bf16 %v2229, %v2228
      %v2331 = vpack.c.bf16 %v2231, %v2230
      %v2332 = vpack.c.bf16 %v2233, %v2232
      %v2333 = vpack.c.bf16 %v2235, %v2234
      %v2334 = vpack.c.bf16 %v2237, %v2236
      %v2335 = vpack.c.bf16 %v2239, %v2238
      %v2336 = vpack.c.bf16 %v2241, %v2240
      %v2337 = vpack.c.bf16 %v2243, %v2242
      %v2338 = vpack.c.bf16 %v2245, %v2244
      %v2339 = vpack.c.bf16 %v2247, %v2246
      %v2340 = vpack.c.bf16 %v2249, %v2248
      %v2341 = vpack.c.bf16 %v2251, %v2250
      %v2342 = vpack.c.bf16 %v2253, %v2252
      %v2343 = vpack.c.bf16 %v2255, %v2254
      %v2344 = vpack.c.bf16 %v2257, %v2256
      %v2345 = vpack.c.bf16 %v2259, %v2258
      %v2346 = vpack.c.bf16 %v2261, %v2260
      %v2347 = vpack.c.bf16 %v2263, %v2262
      %v2348 = vpack.c.bf16 %v2265, %v2264
      %v2349 = vpack.c.bf16 %v2267, %v2266
      %v2350 = vpack.c.bf16 %v2269, %v2268
      %v2351 = vpack.c.bf16 %v2271, %v2270
      %v2352 = vpack.c.bf16 %v2273, %v2272
      %v2353 = vpack.c.bf16 %v2275, %v2274
      %v2354 = vpack.c.bf16 %v2277, %v2276
      %v2355 = vpack.c.bf16 %v2279, %v2278
      %v2356 = vpack.c.bf16 %v2281, %v2280
      %v2357 = vpack.c.bf16 %v2283, %v2282
      %v2358 = vpack.c.bf16 %v2285, %v2284
      %v2359 = vpack.c.bf16 %v2287, %v2286
      %v2360 = vpack.c.bf16 %v2289, %v2288
      %v2361 = vpack.c.bf16 %v2291, %v2290
      %v2362 = vpack.c.bf16 %v2293, %v2292
      %v2363 = vpack.c.bf16 %v2295, %v2294
      %v2364 = vpack.c.bf16 %v2297, %v2296
      %v2365 = vpack.c.bf16 %v2299, %v2298
      %v2366 = vpack.c.bf16 %v2301, %v2300
      %v2367 = vpack.c.bf16 %v2303, %v2302
      %v2368 = vunpack.c.l.bf16 %v2304
      %v2369 = vunpack.c.l.bf16 %v2312
      %v2370 = vunpack.c.l.bf16 %v2320
      %v2371 = vunpack.c.l.bf16 %v2328
      %v2372 = vunpack.c.l.bf16 %v2336
      %v2373 = vunpack.c.l.bf16 %v2344
      %v2374 = vunpack.c.l.bf16 %v2352
      %v2375 = vunpack.c.l.bf16 %v2360
      %v2384 = vrot.slane %v2304, 4
      %v2385 = vrot.slane %v2312, 4
      %v2386 = vrot.slane %v2320, 4
      %v2387 = vrot.slane %v2328, 4
      %v2388 = vrot.slane %v2336, 4
      %v2389 = vrot.slane %v2344, 4
      %v2390 = vrot.slane %v2352, 4
      %v2391 = vrot.slane %v2360, 4
      %v2400 = vunpack.c.l.bf16 %v2384
      %v2401 = vunpack.c.l.bf16 %v2385
      %v2402 = vunpack.c.l.bf16 %v2386
      %v2403 = vunpack.c.l.bf16 %v2387
      %v2404 = vunpack.c.l.bf16 %v2388
      %v2405 = vunpack.c.l.bf16 %v2389
      %v2406 = vunpack.c.l.bf16 %v2390
      %v2407 = vunpack.c.l.bf16 %v2391
      %v2408 = vmax.f32 %v2368, %v2400
      %v2409 = vmax.f32 %v2369, %v2401
      %v2410 = vmax.f32 %v2370, %v2402
      %v2411 = vmax.f32 %v2371, %v2403
      %v2412 = vmax.f32 %v2372, %v2404
      %v2413 = vmax.f32 %v2373, %v2405
      %v2414 = vmax.f32 %v2374, %v2406
      %v2415 = vmax.f32 %v2375, %v2407
      %v2416 = vpack.c.bf16 %v2408, %v2408
      %v2417 = vpack.c.bf16 %v2409, %v2409
      %v2418 = vpack.c.bf16 %v2410, %v2410
      %v2419 = vpack.c.bf16 %v2411, %v2411
      %v2420 = vpack.c.bf16 %v2412, %v2412
      %v2421 = vpack.c.bf16 %v2413, %v2413
      %v2422 = vpack.c.bf16 %v2414, %v2414
      %v2423 = vpack.c.bf16 %v2415, %v2415
      %v2424 = vunpack.c.l.bf16 %v2416
      %v2425 = vunpack.c.l.bf16 %v2417
      %v2426 = vunpack.c.l.bf16 %v2418
      %v2427 = vunpack.c.l.bf16 %v2419
      %v2428 = vunpack.c.l.bf16 %v2420
      %v2429 = vunpack.c.l.bf16 %v2421
      %v2430 = vunpack.c.l.bf16 %v2422
      %v2431 = vunpack.c.l.bf16 %v2423
      %v2432 = vunpack.c.l.bf16 %v2305
      %v2433 = vunpack.c.l.bf16 %v2313
      %v2434 = vunpack.c.l.bf16 %v2321
      %v2435 = vunpack.c.l.bf16 %v2329
      %v2436 = vunpack.c.l.bf16 %v2337
      %v2437 = vunpack.c.l.bf16 %v2345
      %v2438 = vunpack.c.l.bf16 %v2353
      %v2439 = vunpack.c.l.bf16 %v2361
      %v2440 = vmax.f32 %v2424, %v2432
      %v2441 = vmax.f32 %v2425, %v2433
      %v2442 = vmax.f32 %v2426, %v2434
      %v2443 = vmax.f32 %v2427, %v2435
      %v2444 = vmax.f32 %v2428, %v2436
      %v2445 = vmax.f32 %v2429, %v2437
      %v2446 = vmax.f32 %v2430, %v2438
      %v2447 = vmax.f32 %v2431, %v2439
      %v2448 = vpack.c.bf16 %v2440, %v2440
      %v2449 = vpack.c.bf16 %v2441, %v2441
      %v2450 = vpack.c.bf16 %v2442, %v2442
      %v2451 = vpack.c.bf16 %v2443, %v2443
      %v2452 = vpack.c.bf16 %v2444, %v2444
      %v2453 = vpack.c.bf16 %v2445, %v2445
      %v2454 = vpack.c.bf16 %v2446, %v2446
      %v2455 = vpack.c.bf16 %v2447, %v2447
      %v2456 = vunpack.c.l.bf16 %v2448
      %v2457 = vunpack.c.l.bf16 %v2449
      %v2458 = vunpack.c.l.bf16 %v2450
      %v2459 = vunpack.c.l.bf16 %v2451
      %v2460 = vunpack.c.l.bf16 %v2452
      %v2461 = vunpack.c.l.bf16 %v2453
      %v2462 = vunpack.c.l.bf16 %v2454
      %v2463 = vunpack.c.l.bf16 %v2455
      %v2472 = vrot.slane %v2305, 4
      %v2473 = vrot.slane %v2313, 4
      %v2474 = vrot.slane %v2321, 4
      %v2475 = vrot.slane %v2329, 4
      %v2476 = vrot.slane %v2337, 4
      %v2477 = vrot.slane %v2345, 4
      %v2478 = vrot.slane %v2353, 4
      %v2479 = vrot.slane %v2361, 4
      %v2488 = vunpack.c.l.bf16 %v2472
      %v2489 = vunpack.c.l.bf16 %v2473
      %v2490 = vunpack.c.l.bf16 %v2474
      %v2491 = vunpack.c.l.bf16 %v2475
      %v2492 = vunpack.c.l.bf16 %v2476
      %v2493 = vunpack.c.l.bf16 %v2477
      %v2494 = vunpack.c.l.bf16 %v2478
      %v2495 = vunpack.c.l.bf16 %v2479
      %v2496 = vmax.f32 %v2456, %v2488
      %v2497 = vmax.f32 %v2457, %v2489
      %v2498 = vmax.f32 %v2458, %v2490
      %v2499 = vmax.f32 %v2459, %v2491
      %v2500 = vmax.f32 %v2460, %v2492
      %v2501 = vmax.f32 %v2461, %v2493
      %v2502 = vmax.f32 %v2462, %v2494
      %v2503 = vmax.f32 %v2463, %v2495
      %v2504 = vpack.c.bf16 %v2496, %v2496
      %v2505 = vpack.c.bf16 %v2497, %v2497
      %v2506 = vpack.c.bf16 %v2498, %v2498
      %v2507 = vpack.c.bf16 %v2499, %v2499
      %v2508 = vpack.c.bf16 %v2500, %v2500
      %v2509 = vpack.c.bf16 %v2501, %v2501
      %v2510 = vpack.c.bf16 %v2502, %v2502
      %v2511 = vpack.c.bf16 %v2503, %v2503
      %v2512 = vunpack.c.l.bf16 %v2504
      %v2513 = vunpack.c.l.bf16 %v2505
      %v2514 = vunpack.c.l.bf16 %v2506
      %v2515 = vunpack.c.l.bf16 %v2507
      %v2516 = vunpack.c.l.bf16 %v2508
      %v2517 = vunpack.c.l.bf16 %v2509
      %v2518 = vunpack.c.l.bf16 %v2510
      %v2519 = vunpack.c.l.bf16 %v2511
      %v2520 = vunpack.c.l.bf16 %v2306
      %v2521 = vunpack.c.l.bf16 %v2314
      %v2522 = vunpack.c.l.bf16 %v2322
      %v2523 = vunpack.c.l.bf16 %v2330
      %v2524 = vunpack.c.l.bf16 %v2338
      %v2525 = vunpack.c.l.bf16 %v2346
      %v2526 = vunpack.c.l.bf16 %v2354
      %v2527 = vunpack.c.l.bf16 %v2362
      %v2528 = vmax.f32 %v2512, %v2520
      %v2529 = vmax.f32 %v2513, %v2521
      %v2530 = vmax.f32 %v2514, %v2522
      %v2531 = vmax.f32 %v2515, %v2523
      %v2532 = vmax.f32 %v2516, %v2524
      %v2533 = vmax.f32 %v2517, %v2525
      %v2534 = vmax.f32 %v2518, %v2526
      %v2535 = vmax.f32 %v2519, %v2527
      %v2536 = vpack.c.bf16 %v2528, %v2528
      %v2537 = vpack.c.bf16 %v2529, %v2529
      %v2538 = vpack.c.bf16 %v2530, %v2530
      %v2539 = vpack.c.bf16 %v2531, %v2531
      %v2540 = vpack.c.bf16 %v2532, %v2532
      %v2541 = vpack.c.bf16 %v2533, %v2533
      %v2542 = vpack.c.bf16 %v2534, %v2534
      %v2543 = vpack.c.bf16 %v2535, %v2535
      %v2544 = vunpack.c.l.bf16 %v2536
      %v2545 = vunpack.c.l.bf16 %v2537
      %v2546 = vunpack.c.l.bf16 %v2538
      %v2547 = vunpack.c.l.bf16 %v2539
      %v2548 = vunpack.c.l.bf16 %v2540
      %v2549 = vunpack.c.l.bf16 %v2541
      %v2550 = vunpack.c.l.bf16 %v2542
      %v2551 = vunpack.c.l.bf16 %v2543
      %v2560 = vrot.slane %v2306, 4
      %v2561 = vrot.slane %v2314, 4
      %v2562 = vrot.slane %v2322, 4
      %v2563 = vrot.slane %v2330, 4
      %v2564 = vrot.slane %v2338, 4
      %v2565 = vrot.slane %v2346, 4
      %v2566 = vrot.slane %v2354, 4
      %v2567 = vrot.slane %v2362, 4
      %v2576 = vunpack.c.l.bf16 %v2560
      %v2577 = vunpack.c.l.bf16 %v2561
      %v2578 = vunpack.c.l.bf16 %v2562
      %v2579 = vunpack.c.l.bf16 %v2563
      %v2580 = vunpack.c.l.bf16 %v2564
      %v2581 = vunpack.c.l.bf16 %v2565
      %v2582 = vunpack.c.l.bf16 %v2566
      %v2583 = vunpack.c.l.bf16 %v2567
      %v2584 = vmax.f32 %v2544, %v2576
      %v2585 = vmax.f32 %v2545, %v2577
      %v2586 = vmax.f32 %v2546, %v2578
      %v2587 = vmax.f32 %v2547, %v2579
      %v2588 = vmax.f32 %v2548, %v2580
      %v2589 = vmax.f32 %v2549, %v2581
      %v2590 = vmax.f32 %v2550, %v2582
      %v2591 = vmax.f32 %v2551, %v2583
      %v2592 = vpack.c.bf16 %v2584, %v2584
      %v2593 = vpack.c.bf16 %v2585, %v2585
      %v2594 = vpack.c.bf16 %v2586, %v2586
      %v2595 = vpack.c.bf16 %v2587, %v2587
      %v2596 = vpack.c.bf16 %v2588, %v2588
      %v2597 = vpack.c.bf16 %v2589, %v2589
      %v2598 = vpack.c.bf16 %v2590, %v2590
      %v2599 = vpack.c.bf16 %v2591, %v2591
      %v2600 = vunpack.c.l.bf16 %v2592
      %v2601 = vunpack.c.l.bf16 %v2593
      %v2602 = vunpack.c.l.bf16 %v2594
      %v2603 = vunpack.c.l.bf16 %v2595
      %v2604 = vunpack.c.l.bf16 %v2596
      %v2605 = vunpack.c.l.bf16 %v2597
      %v2606 = vunpack.c.l.bf16 %v2598
      %v2607 = vunpack.c.l.bf16 %v2599
      %v2608 = vunpack.c.l.bf16 %v2307
      %v2609 = vunpack.c.l.bf16 %v2315
      %v2610 = vunpack.c.l.bf16 %v2323
      %v2611 = vunpack.c.l.bf16 %v2331
      %v2612 = vunpack.c.l.bf16 %v2339
      %v2613 = vunpack.c.l.bf16 %v2347
      %v2614 = vunpack.c.l.bf16 %v2355
      %v2615 = vunpack.c.l.bf16 %v2363
      %v2616 = vmax.f32 %v2600, %v2608
      %v2617 = vmax.f32 %v2601, %v2609
      %v2618 = vmax.f32 %v2602, %v2610
      %v2619 = vmax.f32 %v2603, %v2611
      %v2620 = vmax.f32 %v2604, %v2612
      %v2621 = vmax.f32 %v2605, %v2613
      %v2622 = vmax.f32 %v2606, %v2614
      %v2623 = vmax.f32 %v2607, %v2615
      %v2624 = vpack.c.bf16 %v2616, %v2616
      %v2625 = vpack.c.bf16 %v2617, %v2617
      %v2626 = vpack.c.bf16 %v2618, %v2618
      %v2627 = vpack.c.bf16 %v2619, %v2619
      %v2628 = vpack.c.bf16 %v2620, %v2620
      %v2629 = vpack.c.bf16 %v2621, %v2621
      %v2630 = vpack.c.bf16 %v2622, %v2622
      %v2631 = vpack.c.bf16 %v2623, %v2623
      %v2632 = vunpack.c.l.bf16 %v2624
      %v2633 = vunpack.c.l.bf16 %v2625
      %v2634 = vunpack.c.l.bf16 %v2626
      %v2635 = vunpack.c.l.bf16 %v2627
      %v2636 = vunpack.c.l.bf16 %v2628
      %v2637 = vunpack.c.l.bf16 %v2629
      %v2638 = vunpack.c.l.bf16 %v2630
      %v2639 = vunpack.c.l.bf16 %v2631
      %v2648 = vrot.slane %v2307, 4
      %v2649 = vrot.slane %v2315, 4
      %v2650 = vrot.slane %v2323, 4
      %v2651 = vrot.slane %v2331, 4
      %v2652 = vrot.slane %v2339, 4
      %v2653 = vrot.slane %v2347, 4
      %v2654 = vrot.slane %v2355, 4
      %v2655 = vrot.slane %v2363, 4
      %v2664 = vunpack.c.l.bf16 %v2648
      %v2665 = vunpack.c.l.bf16 %v2649
      %v2666 = vunpack.c.l.bf16 %v2650
      %v2667 = vunpack.c.l.bf16 %v2651
      %v2668 = vunpack.c.l.bf16 %v2652
      %v2669 = vunpack.c.l.bf16 %v2653
      %v2670 = vunpack.c.l.bf16 %v2654
      %v2671 = vunpack.c.l.bf16 %v2655
      %v2672 = vmax.f32 %v2632, %v2664
      %v2673 = vmax.f32 %v2633, %v2665
      %v2674 = vmax.f32 %v2634, %v2666
      %v2675 = vmax.f32 %v2635, %v2667
      %v2676 = vmax.f32 %v2636, %v2668
      %v2677 = vmax.f32 %v2637, %v2669
      %v2678 = vmax.f32 %v2638, %v2670
      %v2679 = vmax.f32 %v2639, %v2671
      %v2680 = vpack.c.bf16 %v2672, %v2672
      %v2681 = vpack.c.bf16 %v2673, %v2673
      %v2682 = vpack.c.bf16 %v2674, %v2674
      %v2683 = vpack.c.bf16 %v2675, %v2675
      %v2684 = vpack.c.bf16 %v2676, %v2676
      %v2685 = vpack.c.bf16 %v2677, %v2677
      %v2686 = vpack.c.bf16 %v2678, %v2678
      %v2687 = vpack.c.bf16 %v2679, %v2679
      %v2688 = vunpack.c.l.bf16 %v2680
      %v2689 = vunpack.c.l.bf16 %v2681
      %v2690 = vunpack.c.l.bf16 %v2682
      %v2691 = vunpack.c.l.bf16 %v2683
      %v2692 = vunpack.c.l.bf16 %v2684
      %v2693 = vunpack.c.l.bf16 %v2685
      %v2694 = vunpack.c.l.bf16 %v2686
      %v2695 = vunpack.c.l.bf16 %v2687
      %v2696 = vunpack.c.l.bf16 %v2308
      %v2697 = vunpack.c.l.bf16 %v2316
      %v2698 = vunpack.c.l.bf16 %v2324
      %v2699 = vunpack.c.l.bf16 %v2332
      %v2700 = vunpack.c.l.bf16 %v2340
      %v2701 = vunpack.c.l.bf16 %v2348
      %v2702 = vunpack.c.l.bf16 %v2356
      %v2703 = vunpack.c.l.bf16 %v2364
      %v2704 = vmax.f32 %v2688, %v2696
      %v2705 = vmax.f32 %v2689, %v2697
      %v2706 = vmax.f32 %v2690, %v2698
      %v2707 = vmax.f32 %v2691, %v2699
      %v2708 = vmax.f32 %v2692, %v2700
      %v2709 = vmax.f32 %v2693, %v2701
      %v2710 = vmax.f32 %v2694, %v2702
      %v2711 = vmax.f32 %v2695, %v2703
      %v2712 = vpack.c.bf16 %v2704, %v2704
      %v2713 = vpack.c.bf16 %v2705, %v2705
      %v2714 = vpack.c.bf16 %v2706, %v2706
      %v2715 = vpack.c.bf16 %v2707, %v2707
      %v2716 = vpack.c.bf16 %v2708, %v2708
      %v2717 = vpack.c.bf16 %v2709, %v2709
      %v2718 = vpack.c.bf16 %v2710, %v2710
      %v2719 = vpack.c.bf16 %v2711, %v2711
      %v2720 = vunpack.c.l.bf16 %v2712
      %v2721 = vunpack.c.l.bf16 %v2713
      %v2722 = vunpack.c.l.bf16 %v2714
      %v2723 = vunpack.c.l.bf16 %v2715
      %v2724 = vunpack.c.l.bf16 %v2716
      %v2725 = vunpack.c.l.bf16 %v2717
      %v2726 = vunpack.c.l.bf16 %v2718
      %v2727 = vunpack.c.l.bf16 %v2719
      %v2736 = vrot.slane %v2308, 4
      %v2737 = vrot.slane %v2316, 4
      %v2738 = vrot.slane %v2324, 4
      %v2739 = vrot.slane %v2332, 4
      %v2740 = vrot.slane %v2340, 4
      %v2741 = vrot.slane %v2348, 4
      %v2742 = vrot.slane %v2356, 4
      %v2743 = vrot.slane %v2364, 4
      %v2752 = vunpack.c.l.bf16 %v2736
      %v2753 = vunpack.c.l.bf16 %v2737
      %v2754 = vunpack.c.l.bf16 %v2738
      %v2755 = vunpack.c.l.bf16 %v2739
      %v2756 = vunpack.c.l.bf16 %v2740
      %v2757 = vunpack.c.l.bf16 %v2741
      %v2758 = vunpack.c.l.bf16 %v2742
      %v2759 = vunpack.c.l.bf16 %v2743
      %v2760 = vmax.f32 %v2720, %v2752
      %v2761 = vmax.f32 %v2721, %v2753
      %v2762 = vmax.f32 %v2722, %v2754
      %v2763 = vmax.f32 %v2723, %v2755
      %v2764 = vmax.f32 %v2724, %v2756
      %v2765 = vmax.f32 %v2725, %v2757
      %v2766 = vmax.f32 %v2726, %v2758
      %v2767 = vmax.f32 %v2727, %v2759
      %v2768 = vpack.c.bf16 %v2760, %v2760
      %v2769 = vpack.c.bf16 %v2761, %v2761
      %v2770 = vpack.c.bf16 %v2762, %v2762
      %v2771 = vpack.c.bf16 %v2763, %v2763
      %v2772 = vpack.c.bf16 %v2764, %v2764
      %v2773 = vpack.c.bf16 %v2765, %v2765
      %v2774 = vpack.c.bf16 %v2766, %v2766
      %v2775 = vpack.c.bf16 %v2767, %v2767
      %v2776 = vunpack.c.l.bf16 %v2768
      %v2777 = vunpack.c.l.bf16 %v2769
      %v2778 = vunpack.c.l.bf16 %v2770
      %v2779 = vunpack.c.l.bf16 %v2771
      %v2780 = vunpack.c.l.bf16 %v2772
      %v2781 = vunpack.c.l.bf16 %v2773
      %v2782 = vunpack.c.l.bf16 %v2774
      %v2783 = vunpack.c.l.bf16 %v2775
      %v2784 = vunpack.c.l.bf16 %v2309
      %v2785 = vunpack.c.l.bf16 %v2317
      %v2786 = vunpack.c.l.bf16 %v2325
      %v2787 = vunpack.c.l.bf16 %v2333
      %v2788 = vunpack.c.l.bf16 %v2341
      %v2789 = vunpack.c.l.bf16 %v2349
      %v2790 = vunpack.c.l.bf16 %v2357
      %v2791 = vunpack.c.l.bf16 %v2365
      %v2792 = vmax.f32 %v2776, %v2784
      %v2793 = vmax.f32 %v2777, %v2785
      %v2794 = vmax.f32 %v2778, %v2786
      %v2795 = vmax.f32 %v2779, %v2787
      %v2796 = vmax.f32 %v2780, %v2788
      %v2797 = vmax.f32 %v2781, %v2789
      %v2798 = vmax.f32 %v2782, %v2790
      %v2799 = vmax.f32 %v2783, %v2791
      %v2800 = vpack.c.bf16 %v2792, %v2792
      %v2801 = vpack.c.bf16 %v2793, %v2793
      %v2802 = vpack.c.bf16 %v2794, %v2794
      %v2803 = vpack.c.bf16 %v2795, %v2795
      %v2804 = vpack.c.bf16 %v2796, %v2796
      %v2805 = vpack.c.bf16 %v2797, %v2797
      %v2806 = vpack.c.bf16 %v2798, %v2798
      %v2807 = vpack.c.bf16 %v2799, %v2799
      %v2808 = vunpack.c.l.bf16 %v2800
      %v2809 = vunpack.c.l.bf16 %v2801
      %v2810 = vunpack.c.l.bf16 %v2802
      %v2811 = vunpack.c.l.bf16 %v2803
      %v2812 = vunpack.c.l.bf16 %v2804
      %v2813 = vunpack.c.l.bf16 %v2805
      %v2814 = vunpack.c.l.bf16 %v2806
      %v2815 = vunpack.c.l.bf16 %v2807
      %v2824 = vrot.slane %v2309, 4
      %v2825 = vrot.slane %v2317, 4
      %v2826 = vrot.slane %v2325, 4
      %v2827 = vrot.slane %v2333, 4
      %v2828 = vrot.slane %v2341, 4
      %v2829 = vrot.slane %v2349, 4
      %v2830 = vrot.slane %v2357, 4
      %v2831 = vrot.slane %v2365, 4
      %v2840 = vunpack.c.l.bf16 %v2824
      %v2841 = vunpack.c.l.bf16 %v2825
      %v2842 = vunpack.c.l.bf16 %v2826
      %v2843 = vunpack.c.l.bf16 %v2827
      %v2844 = vunpack.c.l.bf16 %v2828
      %v2845 = vunpack.c.l.bf16 %v2829
      %v2846 = vunpack.c.l.bf16 %v2830
      %v2847 = vunpack.c.l.bf16 %v2831
      %v2848 = vmax.f32 %v2808, %v2840
      %v2849 = vmax.f32 %v2809, %v2841
      %v2850 = vmax.f32 %v2810, %v2842
      %v2851 = vmax.f32 %v2811, %v2843
      %v2852 = vmax.f32 %v2812, %v2844
      %v2853 = vmax.f32 %v2813, %v2845
      %v2854 = vmax.f32 %v2814, %v2846
      %v2855 = vmax.f32 %v2815, %v2847
      %v2856 = vpack.c.bf16 %v2848, %v2848
      %v2857 = vpack.c.bf16 %v2849, %v2849
      %v2858 = vpack.c.bf16 %v2850, %v2850
      %v2859 = vpack.c.bf16 %v2851, %v2851
      %v2860 = vpack.c.bf16 %v2852, %v2852
      %v2861 = vpack.c.bf16 %v2853, %v2853
      %v2862 = vpack.c.bf16 %v2854, %v2854
      %v2863 = vpack.c.bf16 %v2855, %v2855
      %v2864 = vunpack.c.l.bf16 %v2856
      %v2865 = vunpack.c.l.bf16 %v2857
      %v2866 = vunpack.c.l.bf16 %v2858
      %v2867 = vunpack.c.l.bf16 %v2859
      %v2868 = vunpack.c.l.bf16 %v2860
      %v2869 = vunpack.c.l.bf16 %v2861
      %v2870 = vunpack.c.l.bf16 %v2862
      %v2871 = vunpack.c.l.bf16 %v2863
      %v2872 = vunpack.c.l.bf16 %v2310
      %v2873 = vunpack.c.l.bf16 %v2318
      %v2874 = vunpack.c.l.bf16 %v2326
      %v2875 = vunpack.c.l.bf16 %v2334
      %v2876 = vunpack.c.l.bf16 %v2342
      %v2877 = vunpack.c.l.bf16 %v2350
      %v2878 = vunpack.c.l.bf16 %v2358
      %v2879 = vunpack.c.l.bf16 %v2366
      %v2880 = vmax.f32 %v2864, %v2872
      %v2881 = vmax.f32 %v2865, %v2873
      %v2882 = vmax.f32 %v2866, %v2874
      %v2883 = vmax.f32 %v2867, %v2875
      %v2884 = vmax.f32 %v2868, %v2876
      %v2885 = vmax.f32 %v2869, %v2877
      %v2886 = vmax.f32 %v2870, %v2878
      %v2887 = vmax.f32 %v2871, %v2879
      %v2888 = vpack.c.bf16 %v2880, %v2880
      %v2889 = vpack.c.bf16 %v2881, %v2881
      %v2890 = vpack.c.bf16 %v2882, %v2882
      %v2891 = vpack.c.bf16 %v2883, %v2883
      %v2892 = vpack.c.bf16 %v2884, %v2884
      %v2893 = vpack.c.bf16 %v2885, %v2885
      %v2894 = vpack.c.bf16 %v2886, %v2886
      %v2895 = vpack.c.bf16 %v2887, %v2887
      %v2896 = vunpack.c.l.bf16 %v2888
      %v2897 = vunpack.c.l.bf16 %v2889
      %v2898 = vunpack.c.l.bf16 %v2890
      %v2899 = vunpack.c.l.bf16 %v2891
      %v2900 = vunpack.c.l.bf16 %v2892
      %v2901 = vunpack.c.l.bf16 %v2893
      %v2902 = vunpack.c.l.bf16 %v2894
      %v2903 = vunpack.c.l.bf16 %v2895
      %v2912 = vrot.slane %v2310, 4
      %v2913 = vrot.slane %v2318, 4
      %v2914 = vrot.slane %v2326, 4
      %v2915 = vrot.slane %v2334, 4
      %v2916 = vrot.slane %v2342, 4
      %v2917 = vrot.slane %v2350, 4
      %v2918 = vrot.slane %v2358, 4
      %v2919 = vrot.slane %v2366, 4
      %v2928 = vunpack.c.l.bf16 %v2912
      %v2929 = vunpack.c.l.bf16 %v2913
      %v2930 = vunpack.c.l.bf16 %v2914
      %v2931 = vunpack.c.l.bf16 %v2915
      %v2932 = vunpack.c.l.bf16 %v2916
      %v2933 = vunpack.c.l.bf16 %v2917
      %v2934 = vunpack.c.l.bf16 %v2918
      %v2935 = vunpack.c.l.bf16 %v2919
      %v2936 = vmax.f32 %v2896, %v2928
      %v2937 = vmax.f32 %v2897, %v2929
      %v2938 = vmax.f32 %v2898, %v2930
      %v2939 = vmax.f32 %v2899, %v2931
      %v2940 = vmax.f32 %v2900, %v2932
      %v2941 = vmax.f32 %v2901, %v2933
      %v2942 = vmax.f32 %v2902, %v2934
      %v2943 = vmax.f32 %v2903, %v2935
      %v2944 = vpack.c.bf16 %v2936, %v2936
      %v2945 = vpack.c.bf16 %v2937, %v2937
      %v2946 = vpack.c.bf16 %v2938, %v2938
      %v2947 = vpack.c.bf16 %v2939, %v2939
      %v2948 = vpack.c.bf16 %v2940, %v2940
      %v2949 = vpack.c.bf16 %v2941, %v2941
      %v2950 = vpack.c.bf16 %v2942, %v2942
      %v2951 = vpack.c.bf16 %v2943, %v2943
      %v2952 = vunpack.c.l.bf16 %v2944
      %v2953 = vunpack.c.l.bf16 %v2945
      %v2954 = vunpack.c.l.bf16 %v2946
      %v2955 = vunpack.c.l.bf16 %v2947
      %v2956 = vunpack.c.l.bf16 %v2948
      %v2957 = vunpack.c.l.bf16 %v2949
      %v2958 = vunpack.c.l.bf16 %v2950
      %v2959 = vunpack.c.l.bf16 %v2951
      %v2960 = vunpack.c.l.bf16 %v2311
      %v2961 = vunpack.c.l.bf16 %v2319
      %v2962 = vunpack.c.l.bf16 %v2327
      %v2963 = vunpack.c.l.bf16 %v2335
      %v2964 = vunpack.c.l.bf16 %v2343
      %v2965 = vunpack.c.l.bf16 %v2351
      %v2966 = vunpack.c.l.bf16 %v2359
      %v2967 = vunpack.c.l.bf16 %v2367
      %v2968 = vmax.f32 %v2952, %v2960
      %v2969 = vmax.f32 %v2953, %v2961
      %v2970 = vmax.f32 %v2954, %v2962
      %v2971 = vmax.f32 %v2955, %v2963
      %v2972 = vmax.f32 %v2956, %v2964
      %v2973 = vmax.f32 %v2957, %v2965
      %v2974 = vmax.f32 %v2958, %v2966
      %v2975 = vmax.f32 %v2959, %v2967
      %v2976 = vpack.c.bf16 %v2968, %v2968
      %v2977 = vpack.c.bf16 %v2969, %v2969
      %v2978 = vpack.c.bf16 %v2970, %v2970
      %v2979 = vpack.c.bf16 %v2971, %v2971
      %v2980 = vpack.c.bf16 %v2972, %v2972
      %v2981 = vpack.c.bf16 %v2973, %v2973
      %v2982 = vpack.c.bf16 %v2974, %v2974
      %v2983 = vpack.c.bf16 %v2975, %v2975
      %v2984 = vunpack.c.l.bf16 %v2976
      %v2985 = vunpack.c.l.bf16 %v2977
      %v2986 = vunpack.c.l.bf16 %v2978
      %v2987 = vunpack.c.l.bf16 %v2979
      %v2988 = vunpack.c.l.bf16 %v2980
      %v2989 = vunpack.c.l.bf16 %v2981
      %v2990 = vunpack.c.l.bf16 %v2982
      %v2991 = vunpack.c.l.bf16 %v2983
      %v3000 = vrot.slane %v2311, 4
      %v3001 = vrot.slane %v2319, 4
      %v3002 = vrot.slane %v2327, 4
      %v3003 = vrot.slane %v2335, 4
      %v3004 = vrot.slane %v2343, 4
      %v3005 = vrot.slane %v2351, 4
      %v3006 = vrot.slane %v2359, 4
      %v3007 = vrot.slane %v2367, 4
      %v3016 = vunpack.c.l.bf16 %v3000
      %v3017 = vunpack.c.l.bf16 %v3001
      %v3018 = vunpack.c.l.bf16 %v3002
      %v3019 = vunpack.c.l.bf16 %v3003
      %v3020 = vunpack.c.l.bf16 %v3004
      %v3021 = vunpack.c.l.bf16 %v3005
      %v3022 = vunpack.c.l.bf16 %v3006
      %v3023 = vunpack.c.l.bf16 %v3007
      %v3024 = vmax.f32 %v2984, %v3016
      %v3025 = vmax.f32 %v2985, %v3017
      %v3026 = vmax.f32 %v2986, %v3018
      %v3027 = vmax.f32 %v2987, %v3019
      %v3028 = vmax.f32 %v2988, %v3020
      %v3029 = vmax.f32 %v2989, %v3021
      %v3030 = vmax.f32 %v2990, %v3022
      %v3031 = vmax.f32 %v2991, %v3023
      %v3032 = vpack.c.bf16 %v3024, %v3024
      %v3033 = vpack.c.bf16 %v3025, %v3025
      %v3034 = vpack.c.bf16 %v3026, %v3026
      %v3035 = vpack.c.bf16 %v3027, %v3027
      %v3036 = vpack.c.bf16 %v3028, %v3028
      %v3037 = vpack.c.bf16 %v3029, %v3029
      %v3038 = vpack.c.bf16 %v3030, %v3030
      %v3039 = vpack.c.bf16 %v3031, %v3031
      %p3040 = scmp.eq.s32.totalorder %s21, 0
      // Predicated region
      $region41: #{pointnet_sa_msg_forward.7} parent=39 // pred_check
        %p3041 = pneg %p3040
      $region42: #{pointnet_sa_msg_forward.7} parent=39 // pred_check_branch
        %3043 = sbr.rel (%p3041) target = $region44
      $region43: #{pointnet_sa_msg_forward.7} parent=39 // pred_region
        %v3044 = vunpack.c.l.bf16 %v3032
        %v3045 = vunpack.c.l.bf16 %v3033
        %v3046 = vunpack.c.l.bf16 %v3034
        %v3047 = vunpack.c.l.bf16 %v3035
        %v3048 = vunpack.c.l.bf16 %v3036
        %v3049 = vunpack.c.l.bf16 %v3037
        %v3050 = vunpack.c.l.bf16 %v3038
        %v3051 = vunpack.c.l.bf16 %v3039
        %3052 = vst [vmem:[%s252] sm:$0xff] %v3044
        %3053 = vst [vmem:[%s252 + $0x8] sm:$0xff] %v3045
        %3054 = vst [vmem:[%s252 + $0x10] sm:$0xff] %v3046
        %3055 = vst [vmem:[%s252 + $0x18] sm:$0xff] %v3047
        %3056 = vst [vmem:[%s252 + $0x20] sm:$0xff] %v3048
        %3057 = vst [vmem:[%s252 + $0x28] sm:$0xff] %v3049
        %3058 = vst [vmem:[%s252 + $0x30] sm:$0xff] %v3050
        %3059 = vst [vmem:[%s252 + $0x38] sm:$0xff] %v3051
      $region44: #{pointnet_sa_msg_forward.7} parent=39 // pred_fallthru
        _
      %p3060 = scmp.gt.s32.totalorder %s21, 0
      // Predicated region
      $region45: #{pointnet_sa_msg_forward.7} parent=39 // pred_check
        %p3061 = pneg %p3060
      $region46: #{pointnet_sa_msg_forward.7} parent=39 // pred_check_branch
        %3063 = sbr.rel (%p3061) target = $region48
      $region47: #{pointnet_sa_msg_forward.7} parent=39 // pred_region
        %v3064 = vld [vmem:[%s252] sm:$0xff]
        %v3065 = vld [vmem:[%s252 + $0x8] sm:$0xff]
        %v3066 = vld [vmem:[%s252 + $0x10] sm:$0xff]
        %v3067 = vld [vmem:[%s252 + $0x18] sm:$0xff]
        %v3068 = vld [vmem:[%s252 + $0x20] sm:$0xff]
        %v3069 = vld [vmem:[%s252 + $0x28] sm:$0xff]
        %v3070 = vld [vmem:[%s252 + $0x30] sm:$0xff]
        %v3071 = vld [vmem:[%s252 + $0x38] sm:$0xff]
        %v3072 = vunpack.c.l.bf16 %v3032
        %v3073 = vunpack.c.l.bf16 %v3033
        %v3074 = vunpack.c.l.bf16 %v3034
        %v3075 = vunpack.c.l.bf16 %v3035
        %v3076 = vunpack.c.l.bf16 %v3036
        %v3077 = vunpack.c.l.bf16 %v3037
        %v3078 = vunpack.c.l.bf16 %v3038
        %v3079 = vunpack.c.l.bf16 %v3039
        %v3080 = vmax.f32 %v3064, %v3072
        %v3081 = vmax.f32 %v3065, %v3073
        %v3082 = vmax.f32 %v3066, %v3074
        %v3083 = vmax.f32 %v3067, %v3075
        %v3084 = vmax.f32 %v3068, %v3076
        %v3085 = vmax.f32 %v3069, %v3077
        %v3086 = vmax.f32 %v3070, %v3078
        %v3087 = vmax.f32 %v3071, %v3079
        %3088 = vst [vmem:[%s252] sm:$0xff] %v3080
        %3089 = vst [vmem:[%s252 + $0x8] sm:$0xff] %v3081
        %3090 = vst [vmem:[%s252 + $0x10] sm:$0xff] %v3082
        %3091 = vst [vmem:[%s252 + $0x18] sm:$0xff] %v3083
        %3092 = vst [vmem:[%s252 + $0x20] sm:$0xff] %v3084
        %3093 = vst [vmem:[%s252 + $0x28] sm:$0xff] %v3085
        %3094 = vst [vmem:[%s252 + $0x30] sm:$0xff] %v3086
        %3095 = vst [vmem:[%s252 + $0x38] sm:$0xff] %v3087
      $region48: #{pointnet_sa_msg_forward.7} parent=39 // pred_fallthru
        _
      %p3096 = scmp.lt.s32.totalorder %s20, 1
      %s3097 = scalar_select %p3096, %s20, 1
      %s3098 = smul.addr %s3097, 8
      %s3099 = smul.addr %s3098, 8
      %s3100 = scalar_lea.vmem %s5, %s3099
      // Predicated region
      $region49: #{pointnet_sa_msg_forward.7} parent=39 // pred_check
        %p3101 = pneg %p158
      $region50: #{pointnet_sa_msg_forward.7} parent=39 // pred_check_branch
        %3103 = sbr.rel (%p3101) target = $region52
      $region51: #{pointnet_sa_msg_forward.7} parent=39 // pred_region
        _
      $region52: #{pointnet_sa_msg_forward.7} parent=39 // pred_fallthru
        _
    $region40: #{pointnet_sa_msg_forward.7} parent=5 // pred_fallthru
      _
    %p3104 = scmp.le.s32.totalorder 2, %s11
    // Predicated region
    $region53: #{pointnet_sa_msg_forward.7} parent=5 // pred_check
      %p3105 = pneg %p3104
    $region54: #{pointnet_sa_msg_forward.7} parent=5 // pred_check_branch
      %3107 = sbr.rel (%p3105) target = $region56
    $region55: #{pointnet_sa_msg_forward.7} parent=5 // pred_region
      %s3108 = ssub.s32 %s11, 2
      // Predicated region
      $region57: #{pointnet_sa_msg_forward.7} parent=55 // pred_check
        %p3109 = pneg %p164
      $region58: #{pointnet_sa_msg_forward.7} parent=55 // pred_check_branch
        %3111 = sbr.rel (%p3109) target = $region60
      $region59: #{pointnet_sa_msg_forward.7} parent=55 // pred_region
        %p3112 = scmp.lt.s32.totalorder %s22, 1
        %s3113 = scalar_select %p3112, %s22, 1
        %s3114 = smul.addr %s3113, 8
        %s3115 = smul.addr %s3114, 8
        %s3116 = scalar_lea.vmem %s5, %s3115
      $region60: #{pointnet_sa_msg_forward.7} parent=55 // pred_fallthru
        _
    $region56: #{pointnet_sa_msg_forward.7} parent=5 // pred_fallthru
      _
  $region6: #{pointnet_sa_msg_forward.7} parent=0 // loop_footer
    %s15 = sadd.s32 1, %s11
  $region7: #{pointnet_sa_msg_forward.7} parent=0 // loop_footer_branch
    %10 = sbr.rel target = $region3
  $region8: #{pointnet_sa_msg_forward.7} parent=0 // loop_exit
    _

</llo_original>
